<compile_context>
chip_gen: v7x
topology: tpu7x:2x2x1
jax: 0.10.0
libtpu: 0.0.40
codegen_flags: <defaults>
</compile_context>

<pallas_src>
import math

import jax
import jax.numpy as jnp
from jax.experimental import pallas as pl
from jax.experimental.pallas import tpu as pltpu

# Logical (PyTorch) dims.
IN_DIM = 100
HID_DIM = 1200
OUT_DIM = 64
# Padded (TPU lane friendly) dims.  IN_DIM is deliberately NOT padded (fc1 is
# ~9% of FLOPs; padding K only adds DMA/work).
HID_PAD = 1280          # 1200 -> 10 * 128
OUT_PAD = 128           # 64 -> 128 (lane-dense unmasked stores)
MAX_TILE_B = 1024       # rows per grid step (upper bound)


def _round_up(x, m):
    return ((x + m - 1) // m) * m


def _leaky_relu(x, slope=0.2):
    return jnp.where(x > 0, x, slope * x)


def gen_two_kernel(x_ref, w1_ref, b1_ref, w2_ref, b2_ref, w3_ref, b3_ref, o_ref):
    # fc1 + LeakyReLU(0.2): bf16 operands, f32 MXU accumulate.  K=100 is
    # zero-padded internally by the matmul lowering (exact).
    x = x_ref[...].astype(jnp.bfloat16)                       # (tile_b, 100)
    h = jnp.dot(x, w1_ref[...], preferred_element_type=jnp.float32)
    h = _leaky_relu(h + b1_ref[...]).astype(jnp.bfloat16)     # f32 VPU, one cast
    # fc2 + LeakyReLU(0.2)
    h = jnp.dot(h, w2_ref[...], preferred_element_type=jnp.float32)
    h = _leaky_relu(h + b2_ref[...]).astype(jnp.bfloat16)
    # fc3 + tanh (output kept f32, lane-dense 128 wide; cols 64..127 are zero)
    h = jnp.dot(h, w3_ref[...], preferred_element_type=jnp.float32)
    o_ref[...] = jnp.tanh(h + b3_ref[...])


def init_gen_two_params(key):
    """Unpadded f32 params matching nn.Linear default init U(-k, k), k=1/sqrt(fan_in).

    Weights stored as (in_features, out_features) so the forward computes x @ W.
    Biases stored as (1, out_features).
    """
    dims = [(IN_DIM, HID_DIM), (HID_DIM, HID_DIM), (HID_DIM, OUT_DIM)]
    params = []
    keys = jax.random.split(key, 2 * len(dims))
    for i, (fan_in, fan_out) in enumerate(dims):
        k = 1.0 / math.sqrt(fan_in)
        w = jax.random.uniform(keys[2 * i], (fan_in, fan_out),
                               minval=-k, maxval=k, dtype=jnp.float32)
        b = jax.random.uniform(keys[2 * i + 1], (1, fan_out),
                               minval=-k, maxval=k, dtype=jnp.float32)
        params.append((w, b))
    return params


def prepare_params(params):
    """Zero-pad hidden dims to 1280, fc3 output to 128; cast weights to bf16.

    Zero padding keeps the math identical: padded lanes contribute zero
    everywhere, and the padded output columns are sliced off in the wrapper.
    """
    (w1, b1), (w2, b2), (w3, b3) = params
    w1p = jnp.pad(w1, ((0, 0), (0, HID_PAD - HID_DIM))).astype(jnp.bfloat16)   # (100, 1280)
    b1p = jnp.pad(b1, ((0, 0), (0, HID_PAD - HID_DIM)))                        # f32 (1, 1280)
    w2p = jnp.pad(w2, ((0, HID_PAD - HID_DIM),
                       (0, HID_PAD - HID_DIM))).astype(jnp.bfloat16)           # (1280, 1280)
    b2p = jnp.pad(b2, ((0, 0), (0, HID_PAD - HID_DIM)))                        # f32 (1, 1280)
    w3p = jnp.pad(w3, ((0, HID_PAD - HID_DIM),
                       (0, OUT_PAD - OUT_DIM))).astype(jnp.bfloat16)           # (1280, 128)
    b3p = jnp.pad(b3, ((0, 0), (0, OUT_PAD - OUT_DIM)))                        # f32 (1, 128)
    return (w1p, b1p), (w2p, b2p), (w3p, b3p)


def _choose_tiling(B):
    """Balanced batch split: >=2 grid steps when B > 8 (engages both v7x TCs),
    tile_b capped at MAX_TILE_B, rows rounded to the 8-sublane granule."""
    b8 = _round_up(max(B, 1), 8)
    min_tiles = 2 if b8 > 8 else 1
    num_tiles = max(min_tiles, pl.cdiv(b8, MAX_TILE_B))
    tile_b = _round_up(pl.cdiv(b8, num_tiles), 8)
    return tile_b, tile_b * num_tiles, num_tiles


def _vmem_limit_bytes(tile_b, weights_and_biases):
    """Estimate resident VMEM and add 25% headroom (clamped to [32, 56] MiB)."""
    const_bytes = sum(int(a.size) * a.dtype.itemsize for a in weights_and_biases)  # Buffered(1)
    io_tiles = 2 * tile_b * (IN_DIM * 4 + OUT_PAD * 4)        # double-buffered x / out tiles
    inter = 2 * tile_b * HID_PAD * (4 + 2)                    # live f32 + bf16 hidden activations
    est = const_bytes + io_tiles + inter
    return int(min(56 * 2**20, max(32 * 2**20, (est * 5) // 4)))


def gen_two_forward(x, padded_params):
    (w1, b1), (w2, b2), (w3, b3) = padded_params
    B = x.shape[0]
    x = x.astype(jnp.float32)

    tile_b, b_pad, num_tiles = _choose_tiling(B)
    if b_pad != B:
        x = jnp.pad(x, ((0, b_pad - B), (0, 0)))
    grid = (num_tiles,)

    # Batch-tiled x / out; constant, single-buffered weight/bias blocks stay
    # VMEM-resident and are DMA'd exactly once.
    x_spec = pl.BlockSpec((tile_b, IN_DIM), lambda i: (i, 0))
    o_spec = pl.BlockSpec((tile_b, OUT_PAD), lambda i: (i, 0))

    def const(shape):
        return pl.BlockSpec(shape, lambda i: (0, 0), pipeline_mode=pl.Buffered(1))

    flops = 2 * b_pad * (IN_DIM * HID_PAD + HID_PAD * HID_PAD + HID_PAD * OUT_PAD)
    bytes_accessed = (
        2 * (w1.size + w2.size + w3.size)          # bf16 weights (fetched once)
        + 4 * (b1.size + b2.size + b3.size)        # f32 biases
        + 4 * x.size                               # f32 activations in
        + 4 * b_pad * OUT_PAD                      # f32 output
    )

    out = pl.pallas_call(
        gen_two_kernel,
        out_shape=jax.ShapeDtypeStruct((b_pad, OUT_PAD), jnp.float32),
        grid=grid,
        in_specs=[
            x_spec,
            const((IN_DIM, HID_PAD)),   # w1  (100, 1280) bf16
            const((1, HID_PAD)),        # b1
            const((HID_PAD, HID_PAD)),  # w2  (1280, 1280) bf16
            const((1, HID_PAD)),        # b2
            const((HID_PAD, OUT_PAD)),  # w3  (1280, 128) bf16
            const((1, OUT_PAD)),        # b3
        ],
        out_specs=o_spec,
        compiler_params=pltpu.CompilerParams(
            dimension_semantics=("parallel",),       # batch axis -> both TCs on v7x
            vmem_limit_bytes=_vmem_limit_bytes(tile_b, (w1, b1, w2, b2, w3, b3)),
        ),
        cost_estimate=pl.CostEstimate(
            flops=flops,
            transcendentals=b_pad * OUT_PAD,
            bytes_accessed=bytes_accessed,
        ),
    )(x, w1, b1, w2, b2, w3, b3)

    # Drop batch padding AND the padded output columns, then match PyTorch's
    # x.view(-1, 1, 8, 8).
    return out[:B, :OUT_DIM].reshape(-1, 1, 8, 8)


def gen_two_reference(x, params):
    """Pure-JAX f32 reference for correctness check."""
    (w1, b1), (w2, b2), (w3, b3) = params
    h = _leaky_relu(x @ w1 + b1)
    h = _leaky_relu(h @ w2 + b2)
    h = jnp.tanh(h @ w3 + b3)
    return h.reshape(-1, 1, 8, 8)


if __name__ == "__main__":
    key = jax.random.PRNGKey(0)
    pkey, xkey1, xkey2 = jax.random.split(key, 3)

    params = init_gen_two_params(pkey)
    padded_params = prepare_params(params)

    # Small batch: single grid step.
    batch = 8
    x = jax.random.normal(xkey1, (batch, IN_DIM), dtype=jnp.float32)
    out = jax.block_until_ready(gen_two_forward(x, padded_params))
    ref = gen_two_reference(x, params)
    assert out.shape == (batch, 1, 8, 8), out.shape
    # bf16 weights/activations vs f32 reference -> relaxed tolerance.
    assert jnp.allclose(out, ref, atol=2e-2, rtol=0), "mismatch vs reference (batch=8)"

    # Batch that exercises the 2-tile parallel split and batch-padding path.
    batch2 = 20
    x2 = jax.random.normal(xkey2, (batch2, IN_DIM), dtype=jnp.float32)
    out2 = jax.block_until_ready(gen_two_forward(x2, padded_params))
    ref2 = gen_two_reference(x2, params)
    assert out2.shape == (batch2, 1, 8, 8), out2.shape
    assert jnp.allclose(out2, ref2, atol=2e-2, rtol=0), "mismatch vs reference (batch=20)"

    print("KERNEL_OK")
</pallas_src>

<mosaic_0001>
module attributes {stable_mosaic.version = 11 : i64} {
  func.func @gen_two_kernel(%arg0: i32, %arg1: memref<8x100xf32, #tpu.memory_space<vmem>>, %arg2: memref<100x1280xbf16, #tpu.memory_space<vmem>>, %arg3: memref<1x1280xf32, #tpu.memory_space<vmem>>, %arg4: memref<1280x1280xbf16, #tpu.memory_space<vmem>>, %arg5: memref<1x1280xf32, #tpu.memory_space<vmem>>, %arg6: memref<1280x128xbf16, #tpu.memory_space<vmem>>, %arg7: memref<1x128xf32, #tpu.memory_space<vmem>>, %arg8: memref<8x128xf32, #tpu.memory_space<vmem>>) attributes {dimension_semantics = [#tpu.dimension_semantics<parallel>], iteration_bounds = array<i64: 1>, scalar_prefetch = 0 : i64, scratch_operands = 0 : i64, tpu.core_type = #tpu.core_type<tc>, window_params = [{transform_indices = @transform_0, window_bounds = array<i64: 8, 100>}, {pipeline_mode = #tpu.pipeline_mode<synchronous>, transform_indices = @transform_1, window_bounds = array<i64: 100, 1280>}, {pipeline_mode = #tpu.pipeline_mode<synchronous>, transform_indices = @transform_2, window_bounds = array<i64: 1, 1280>}, {pipeline_mode = #tpu.pipeline_mode<synchronous>, transform_indices = @transform_3, window_bounds = array<i64: 1280, 1280>}, {pipeline_mode = #tpu.pipeline_mode<synchronous>, transform_indices = @transform_4, window_bounds = array<i64: 1, 1280>}, {pipeline_mode = #tpu.pipeline_mode<synchronous>, transform_indices = @transform_5, window_bounds = array<i64: 1280, 128>}, {pipeline_mode = #tpu.pipeline_mode<synchronous>, transform_indices = @transform_6, window_bounds = array<i64: 1, 128>}, {transform_indices = @transform_7, window_bounds = array<i64: 8, 128>}]} {
    %c0 = arith.constant 0 : index
    %c0_0 = arith.constant 0 : index
    %0 = vector.load %arg1[%c0, %c0_0] : memref<8x100xf32, #tpu.memory_space<vmem>>, vector<8x100xf32>
    %1 = arith.truncf %0 : vector<8x100xf32> to vector<8x100xbf16>
    %c0_1 = arith.constant 0 : index
    %c0_2 = arith.constant 0 : index
    %2 = vector.load %arg2[%c0_1, %c0_2] : memref<100x1280xbf16, #tpu.memory_space<vmem>>, vector<100x1280xbf16>
    %cst = arith.constant dense<0.000000e+00> : vector<8x1280xf32>
    %3 = tpu.matmul %1, %2, %cst {dimension_numbers = #tpu.dot_dimension_numbers<[1], [0], [0], [1], [0, 0, 1, 1], [], []>} : vector<8x100xbf16>, vector<100x1280xbf16>, vector<8x1280xf32> -> vector<8x1280xf32>
    %c0_3 = arith.constant 0 : index
    %c0_4 = arith.constant 0 : index
    %4 = vector.load %arg3[%c0_3, %c0_4] : memref<1x1280xf32, #tpu.memory_space<vmem>>, vector<1x1280xf32>
    %5 = vector.broadcast %4 : vector<1x1280xf32> to vector<8x1280xf32>
    %6 = arith.addf %3, %5 : vector<8x1280xf32>
    %cst_5 = arith.constant 0.000000e+00 : f32
    %7 = vector.broadcast %cst_5 : f32 to vector<8x1280xf32>
    %8 = arith.cmpf ogt, %6, %7 : vector<8x1280xf32>
    %cst_6 = arith.constant 2.000000e-01 : f32
    %9 = vector.broadcast %cst_6 : f32 to vector<8x1280xf32>
    %10 = arith.mulf %9, %6 : vector<8x1280xf32>
    %11 = arith.select %8, %6, %10 : vector<8x1280xi1>, vector<8x1280xf32>
    %12 = arith.truncf %11 : vector<8x1280xf32> to vector<8x1280xbf16>
    %c0_7 = arith.constant 0 : index
    %c0_8 = arith.constant 0 : index
    %13 = vector.load %arg4[%c0_7, %c0_8] : memref<1280x1280xbf16, #tpu.memory_space<vmem>>, vector<1280x1280xbf16>
    %cst_9 = arith.constant dense<0.000000e+00> : vector<8x1280xf32>
    %14 = tpu.matmul %12, %13, %cst_9 {dimension_numbers = #tpu.dot_dimension_numbers<[1], [0], [0], [1], [0, 0, 1, 1], [], []>} : vector<8x1280xbf16>, vector<1280x1280xbf16>, vector<8x1280xf32> -> vector<8x1280xf32>
    %c0_10 = arith.constant 0 : index
    %c0_11 = arith.constant 0 : index
    %15 = vector.load %arg5[%c0_10, %c0_11] : memref<1x1280xf32, #tpu.memory_space<vmem>>, vector<1x1280xf32>
    %16 = vector.broadcast %15 : vector<1x1280xf32> to vector<8x1280xf32>
    %17 = arith.addf %14, %16 : vector<8x1280xf32>
    %cst_12 = arith.constant 0.000000e+00 : f32
    %18 = vector.broadcast %cst_12 : f32 to vector<8x1280xf32>
    %19 = arith.cmpf ogt, %17, %18 : vector<8x1280xf32>
    %cst_13 = arith.constant 2.000000e-01 : f32
    %20 = vector.broadcast %cst_13 : f32 to vector<8x1280xf32>
    %21 = arith.mulf %20, %17 : vector<8x1280xf32>
    %22 = arith.select %19, %17, %21 : vector<8x1280xi1>, vector<8x1280xf32>
    %23 = arith.truncf %22 : vector<8x1280xf32> to vector<8x1280xbf16>
    %c0_14 = arith.constant 0 : index
    %c0_15 = arith.constant 0 : index
    %24 = vector.load %arg6[%c0_14, %c0_15] : memref<1280x128xbf16, #tpu.memory_space<vmem>>, vector<1280x128xbf16>
    %cst_16 = arith.constant dense<0.000000e+00> : vector<8x128xf32>
    %25 = tpu.matmul %23, %24, %cst_16 {dimension_numbers = #tpu.dot_dimension_numbers<[1], [0], [0], [1], [0, 0, 1, 1], [], []>} : vector<8x1280xbf16>, vector<1280x128xbf16>, vector<8x128xf32> -> vector<8x128xf32>
    %c0_17 = arith.constant 0 : index
    %c0_18 = arith.constant 0 : index
    %26 = vector.load %arg7[%c0_17, %c0_18] : memref<1x128xf32, #tpu.memory_space<vmem>>, vector<1x128xf32>
    %27 = vector.broadcast %26 : vector<1x128xf32> to vector<8x128xf32>
    %28 = arith.addf %25, %27 : vector<8x128xf32>
    %29 = math.tanh %28 : vector<8x128xf32>
    %c0_19 = arith.constant 0 : index
    %c0_20 = arith.constant 0 : index
    %30 = vector.load %arg8[%c0_19, %c0_20] : memref<8x128xf32, #tpu.memory_space<vmem>>, vector<8x128xf32>
    tpu.vector_store %arg8[%c0_19, %c0_20], %29 {strides = array<i32>} : memref<8x128xf32, #tpu.memory_space<vmem>>, vector<8x128xf32>,
    return
  }
  func.func @transform_0(%arg0: i32) -> (i32, i32) {
    %c0_i32 = arith.constant 0 : i32
    %c0_i32_0 = arith.constant 0 : i32
    return %arg0, %c0_i32 : i32, i32
  }
  func.func @transform_1(%arg0: i32) -> (i32, i32) {
    %c0_i32 = arith.constant 0 : i32
    %c0_i32_0 = arith.constant 0 : i32
    %c0_i32_1 = arith.constant 0 : i32
    return %c0_i32, %c0_i32_0 : i32, i32
  }
  func.func @transform_2(%arg0: i32) -> (i32, i32) {
    %c0_i32 = arith.constant 0 : i32
    %c0_i32_0 = arith.constant 0 : i32
    %c0_i32_1 = arith.constant 0 : i32
    return %c0_i32, %c0_i32_0 : i32, i32
  }
  func.func @transform_3(%arg0: i32) -> (i32, i32) {
    %c0_i32 = arith.constant 0 : i32
    %c0_i32_0 = arith.constant 0 : i32
    %c0_i32_1 = arith.constant 0 : i32
    return %c0_i32, %c0_i32_0 : i32, i32
  }
  func.func @transform_4(%arg0: i32) -> (i32, i32) {
    %c0_i32 = arith.constant 0 : i32
    %c0_i32_0 = arith.constant 0 : i32
    %c0_i32_1 = arith.constant 0 : i32
    return %c0_i32, %c0_i32_0 : i32, i32
  }
  func.func @transform_5(%arg0: i32) -> (i32, i32) {
    %c0_i32 = arith.constant 0 : i32
    %c0_i32_0 = arith.constant 0 : i32
    %c0_i32_1 = arith.constant 0 : i32
    return %c0_i32, %c0_i32_0 : i32, i32
  }
  func.func @transform_6(%arg0: i32) -> (i32, i32) {
    %c0_i32 = arith.constant 0 : i32
    %c0_i32_0 = arith.constant 0 : i32
    %c0_i32_1 = arith.constant 0 : i32
    return %c0_i32, %c0_i32_0 : i32, i32
  }
  func.func @transform_7(%arg0: i32) -> (i32, i32) {
    %c0_i32 = arith.constant 0 : i32
    %c0_i32_0 = arith.constant 0 : i32
    return %arg0, %c0_i32 : i32, i32
  }
}

</mosaic_0001>

<llo_original>
// kernel: tpu_custom_call.1
$region0: #{tpu_custom_call.1}
  #allocation0 [shape = 'u32[]', space=smem, size = 0x4, offset = 0x4, fixed_abs, tag = 'smem constant byte address 0x4 - core index']
  #allocation1 [shape = 'u32[144,128]{1,0:T(1,128)}', space=vmem, size = 0x12000, scoped, tag = 'internal scratch']
  %s0 = inlined_call_operand.hbm [shape: f32[8,100], index: 0, kind: input, shape index: {}]
  %s1 = inlined_call_operand.hbm [shape: bf16[100,1280], index: 1, kind: input, shape index: {}]
  %s2 = inlined_call_operand.hbm [shape: f32[1,1280], index: 2, kind: input, shape index: {}]
  %s3 = inlined_call_operand.hbm [shape: bf16[1280,1280], index: 3, kind: input, shape index: {}]
  %s4 = inlined_call_operand.hbm [shape: f32[1,1280], index: 4, kind: input, shape index: {}]
  %s5 = inlined_call_operand.hbm [shape: bf16[1280,128], index: 5, kind: input, shape index: {}]
  %s6 = inlined_call_operand.hbm [shape: f32[1,128], index: 6, kind: input, shape index: {}]
  %s7 = inlined_call_operand.hbm [shape: f32[8,128], index: 7, kind: output, shape index: {}]
  %s8 = sld [smem:[#allocation0]]
  $region66: #{tpu_custom_call.1} parent=0
    _
  %s10 = ssub.s32 1, %s8
  %s11 = scalar_select 0, %s10, %s8
  $region1: #{tpu_custom_call.1} parent=0
    #allocation2 [shape = 'u8[4096]{0}', space=vmem, size = 0x1000, scoped, tag = 'input window, operand 0, single buffered']
    #allocation3 [shape = 's32[1]{0}', space=sflag, size = 0x4, scoped, tag = 'scoped memory for tpu_custom_call.1']
    #allocation4 [shape = 's32[1]{0}', space=sflag, size = 0x4, scoped, tag = 'scoped memory for tpu_custom_call.1']
    #allocation5 [shape = 'u8[266240]{0}', space=vmem, size = 0x41000, scoped, tag = 'input window, operand 1, single buffered']
    #allocation6 [shape = 's32[1]{0}', space=sflag, size = 0x4, scoped, tag = 'scoped memory for tpu_custom_call.1']
    #allocation7 [shape = 'u8[5120]{0}', space=vmem, size = 0x1400, scoped, tag = 'input window, operand 2, single buffered']
    #allocation8 [shape = 'u8[3276800]{0}', space=vmem, size = 0x320000, scoped, tag = 'input window, operand 3, single buffered']
    #allocation9 [shape = 's32[1]{0}', space=sflag, size = 0x4, scoped, tag = 'scoped memory for tpu_custom_call.1']
    #allocation10 [shape = 'u8[5120]{0}', space=vmem, size = 0x1400, scoped, tag = 'input window, operand 4, single buffered']
    #allocation11 [shape = 'u8[327680]{0}', space=vmem, size = 0x50000, scoped, tag = 'input window, operand 5, single buffered']
    #allocation12 [shape = 's32[1]{0}', space=sflag, size = 0x4, scoped, tag = 'scoped memory for tpu_custom_call.1']
    #allocation13 [shape = 'u8[512]{0}', space=vmem, size = 0x400, scoped, tag = 'input window, operand 6, single buffered']
    #allocation14 [shape = 'u8[4096]{0}', space=vmem, size = 0x1000, scoped, tag = 'output window, operand 0, single buffered']
    %12 = vsyncpa [#allocation3], 0
    %13 = vsyncpa [#allocation6], 0
    %14 = vsyncpa [#allocation9], 0
    %15 = vsyncpa [#allocation12], 0
    %16 = vsyncpa [#allocation4], 0
    // Predicated region
    $region2: #{tpu_custom_call.1} parent=1 // pred_check
      _
    $region3: #{tpu_custom_call.1} parent=1 // pred_check_branch
      %18 = sbr.rel (0) target = $region5
    $region4: #{tpu_custom_call.1} parent=1 // pred_region
      %s20 = ssub.s32 128, 128
      %21 = vsyncadd [#allocation3], %s20
      %s23 = sshll.u32 [#allocation2], 4
      %s24 = int_to_ptr.vmem [resolvable:$true] %s23
      %26 = dma.hbm_to_vmem [thread:$0]  %s0, 128, %s24, [#allocation3]
    $region5: #{tpu_custom_call.1} parent=1 // pred_fallthru
      _
    // Predicated region
    $region6: #{tpu_custom_call.1} parent=1 // pred_check
      _
    $region7: #{tpu_custom_call.1} parent=1 // pred_check_branch
      %28 = sbr.rel (0) target = $region9
    $region8: #{tpu_custom_call.1} parent=1 // pred_region
      %s30 = ssub.s32 8320, 8320
      %31 = vsyncadd [#allocation6], %s30
      %s32 = sshll.u32 [#allocation5], 4
      %s33 = int_to_ptr.vmem [resolvable:$true] %s32
      %38 = dma.hbm_to_vmem [thread:$0]  %s1, 8320, %s33, [#allocation6], 640, 640, 40
    $region9: #{tpu_custom_call.1} parent=1 // pred_fallthru
      _
    // Predicated region
    $region10: #{tpu_custom_call.1} parent=1 // pred_check
      _
    $region11: #{tpu_custom_call.1} parent=1 // pred_check_branch
      %40 = sbr.rel (0) target = $region13
    $region12: #{tpu_custom_call.1} parent=1 // pred_region
      %s42 = ssub.s32 160, 160
      %43 = vsyncadd [#allocation6], %s42
      %s45 = sshll.u32 [#allocation7], 4
      %s46 = int_to_ptr.vmem [resolvable:$true] %s45
      %48 = dma.hbm_to_vmem [thread:$0]  %s2, 160, %s46, [#allocation6]
    $region13: #{tpu_custom_call.1} parent=1 // pred_fallthru
      _
    // Predicated region
    $region14: #{tpu_custom_call.1} parent=1 // pred_check
      _
    $region15: #{tpu_custom_call.1} parent=1 // pred_check_branch
      %50 = sbr.rel (0) target = $region17
    $region16: #{tpu_custom_call.1} parent=1 // pred_region
      %s52 = ssub.s32 102400, 102400
      %53 = vsyncadd [#allocation9], %s52
      %s54 = sshll.u32 [#allocation8], 4
      %s55 = int_to_ptr.vmem [resolvable:$true] %s54
      %60 = dma.hbm_to_vmem [thread:$0]  %s3, 102400, %s55, [#allocation9], 640, 640, 40
    $region17: #{tpu_custom_call.1} parent=1 // pred_fallthru
      _
    // Predicated region
    $region18: #{tpu_custom_call.1} parent=1 // pred_check
      _
    $region19: #{tpu_custom_call.1} parent=1 // pred_check_branch
      %62 = sbr.rel (0) target = $region21
    $region20: #{tpu_custom_call.1} parent=1 // pred_region
      %s64 = ssub.s32 160, 160
      %65 = vsyncadd [#allocation9], %s64
      %s67 = sshll.u32 [#allocation10], 4
      %s68 = int_to_ptr.vmem [resolvable:$true] %s67
      %70 = dma.hbm_to_vmem [thread:$0]  %s4, 160, %s68, [#allocation9]
    $region21: #{tpu_custom_call.1} parent=1 // pred_fallthru
      _
    // Predicated region
    $region22: #{tpu_custom_call.1} parent=1 // pred_check
      _
    $region23: #{tpu_custom_call.1} parent=1 // pred_check_branch
      %72 = sbr.rel (0) target = $region25
    $region24: #{tpu_custom_call.1} parent=1 // pred_region
      %s74 = ssub.s32 10240, 10240
      %75 = vsyncadd [#allocation12], %s74
      %s76 = sshll.u32 [#allocation11], 4
      %s77 = int_to_ptr.vmem [resolvable:$true] %s76
      %82 = dma.hbm_to_vmem [thread:$0]  %s5, 10240, %s77, [#allocation12], 64, 64, 4
    $region25: #{tpu_custom_call.1} parent=1 // pred_fallthru
      _
    // Predicated region
    $region26: #{tpu_custom_call.1} parent=1 // pred_check
      _
    $region27: #{tpu_custom_call.1} parent=1 // pred_check_branch
      %84 = sbr.rel (0) target = $region29
    $region28: #{tpu_custom_call.1} parent=1 // pred_region
      %s86 = ssub.s32 16, 16
      %87 = vsyncadd [#allocation12], %s86
      %s89 = sshll.u32 [#allocation13], 4
      %s90 = int_to_ptr.vmem [resolvable:$true] %s89
      %92 = dma.hbm_to_vmem [thread:$0]  %s6, 16, %s90, [#allocation12]
    $region29: #{tpu_custom_call.1} parent=1 // pred_fallthru
      _
    // Predicated region
    $region30: #{tpu_custom_call.1} parent=1 // pred_check
      _
    $region31: #{tpu_custom_call.1} parent=1 // pred_check_branch
      %94 = sbr.rel (0) target = $region33
    $region32: #{tpu_custom_call.1} parent=1 // pred_region
      %95 = dma.done [#allocation3], 128
    $region33: #{tpu_custom_call.1} parent=1 // pred_fallthru
      _
    // Predicated region
    $region34: #{tpu_custom_call.1} parent=1 // pred_check
      _
    $region35: #{tpu_custom_call.1} parent=1 // pred_check_branch
      %97 = sbr.rel (0) target = $region37
    $region36: #{tpu_custom_call.1} parent=1 // pred_region
      %98 = dma.done [#allocation6], 8320
    $region37: #{tpu_custom_call.1} parent=1 // pred_fallthru
      _
    // Predicated region
    $region38: #{tpu_custom_call.1} parent=1 // pred_check
      _
    $region39: #{tpu_custom_call.1} parent=1 // pred_check_branch
      %100 = sbr.rel (0) target = $region41
    $region40: #{tpu_custom_call.1} parent=1 // pred_region
      %101 = dma.done [#allocation6], 160
    $region41: #{tpu_custom_call.1} parent=1 // pred_fallthru
      _
    // Predicated region
    $region42: #{tpu_custom_call.1} parent=1 // pred_check
      _
    $region43: #{tpu_custom_call.1} parent=1 // pred_check_branch
      %103 = sbr.rel (0) target = $region45
    $region44: #{tpu_custom_call.1} parent=1 // pred_region
      %104 = dma.done [#allocation9], 102400
    $region45: #{tpu_custom_call.1} parent=1 // pred_fallthru
      _
    // Predicated region
    $region46: #{tpu_custom_call.1} parent=1 // pred_check
      _
    $region47: #{tpu_custom_call.1} parent=1 // pred_check_branch
      %106 = sbr.rel (0) target = $region49
    $region48: #{tpu_custom_call.1} parent=1 // pred_region
      %107 = dma.done [#allocation9], 160
    $region49: #{tpu_custom_call.1} parent=1 // pred_fallthru
      _
    // Predicated region
    $region50: #{tpu_custom_call.1} parent=1 // pred_check
      _
    $region51: #{tpu_custom_call.1} parent=1 // pred_check_branch
      %109 = sbr.rel (0) target = $region53
    $region52: #{tpu_custom_call.1} parent=1 // pred_region
      %110 = dma.done [#allocation12], 10240
    $region53: #{tpu_custom_call.1} parent=1 // pred_fallthru
      _
    // Predicated region
    $region54: #{tpu_custom_call.1} parent=1 // pred_check
      _
    $region55: #{tpu_custom_call.1} parent=1 // pred_check_branch
      %112 = sbr.rel (0) target = $region57
    $region56: #{tpu_custom_call.1} parent=1 // pred_region
      %113 = dma.done [#allocation12], 16
    $region57: #{tpu_custom_call.1} parent=1 // pred_fallthru
      _
    %v115 = vld [vmem:[#allocation2] sm:$0xff]
    %v116 = vpack.c.bf16 %v115, %v115
    %v117 = vld [vmem:[#allocation5] sm:$0xff]
    %v118 = vld [vmem:[#allocation5 + $0x8] sm:$0xff]
    %v119 = vld [vmem:[#allocation5 + $0x10] sm:$0xff]
    %v120 = vld [vmem:[#allocation5 + $0x18] sm:$0xff]
    %v121 = vld [vmem:[#allocation5 + $0x20] sm:$0xff]
    %v122 = vld [vmem:[#allocation5 + $0x28] sm:$0xff]
    %v123 = vld [vmem:[#allocation5 + $0x30] sm:$0xff]
    %v124 = vld [vmem:[#allocation5 + $0x38] sm:$0xff]
    %v125 = vld [vmem:[#allocation5 + $0x40] sm:$0xff]
    %v126 = vld [vmem:[#allocation5 + $0x48] sm:$0xff]
    %v127 = vld [vmem:[#allocation5 + $0x50] sm:$0xff]
    %v128 = vld [vmem:[#allocation5 + $0x58] sm:$0xff]
    %v129 = vld [vmem:[#allocation5 + $0x60] sm:$0xff]
    %v130 = vld [vmem:[#allocation5 + $0x68] sm:$0xff]
    %v131 = vld [vmem:[#allocation5 + $0x70] sm:$0xff]
    %v132 = vld [vmem:[#allocation5 + $0x78] sm:$0xff]
    %v133 = vld [vmem:[#allocation5 + $0x80] sm:$0xff]
    %v134 = vld [vmem:[#allocation5 + $0x88] sm:$0xff]
    %v135 = vld [vmem:[#allocation5 + $0x90] sm:$0xff]
    %v136 = vld [vmem:[#allocation5 + $0x98] sm:$0xff]
    %v137 = vld [vmem:[#allocation5 + $0xa0] sm:$0xff]
    %v138 = vld [vmem:[#allocation5 + $0xa8] sm:$0xff]
    %v139 = vld [vmem:[#allocation5 + $0xb0] sm:$0xff]
    %v140 = vld [vmem:[#allocation5 + $0xb8] sm:$0xff]
    %v141 = vld [vmem:[#allocation5 + $0xc0] sm:$0xff]
    %v142 = vld [vmem:[#allocation5 + $0xc8] sm:$0xff]
    %v143 = vld [vmem:[#allocation5 + $0xd0] sm:$0xff]
    %v144 = vld [vmem:[#allocation5 + $0xd8] sm:$0xff]
    %v145 = vld [vmem:[#allocation5 + $0xe0] sm:$0xff]
    %v146 = vld [vmem:[#allocation5 + $0xe8] sm:$0xff]
    %v147 = vld [vmem:[#allocation5 + $0xf0] sm:$0xff]
    %v148 = vld [vmem:[#allocation5 + $0xf8] sm:$0xff]
    %v149 = vld [vmem:[#allocation5 + $0x100] sm:$0xff]
    %v150 = vld [vmem:[#allocation5 + $0x108] sm:$0xff]
    %v151 = vld [vmem:[#allocation5 + $0x110] sm:$0xff]
    %v152 = vld [vmem:[#allocation5 + $0x118] sm:$0xff]
    %v153 = vld [vmem:[#allocation5 + $0x120] sm:$0xff]
    %v154 = vld [vmem:[#allocation5 + $0x128] sm:$0xff]
    %v155 = vld [vmem:[#allocation5 + $0x130] sm:$0xff]
    %v156 = vld [vmem:[#allocation5 + $0x138] sm:$0xff]
    %v157 = vld [vmem:[#allocation5 + $0x140] sm:$0xff]
    %v158 = vld [vmem:[#allocation5 + $0x148] sm:$0xff]
    %v159 = vld [vmem:[#allocation5 + $0x150] sm:$0xff]
    %v160 = vld [vmem:[#allocation5 + $0x158] sm:$0xff]
    %v161 = vld [vmem:[#allocation5 + $0x160] sm:$0xff]
    %v162 = vld [vmem:[#allocation5 + $0x168] sm:$0xff]
    %v163 = vld [vmem:[#allocation5 + $0x170] sm:$0xff]
    %v164 = vld [vmem:[#allocation5 + $0x178] sm:$0xff]
    %v165 = vld [vmem:[#allocation5 + $0x180] sm:$0xff]
    %v166 = vld [vmem:[#allocation5 + $0x188] sm:$0xff]
    %v167 = vld [vmem:[#allocation5 + $0x190] sm:$0xff]
    %v168 = vld [vmem:[#allocation5 + $0x198] sm:$0xff]
    %v169 = vld [vmem:[#allocation5 + $0x1a0] sm:$0xff]
    %v170 = vld [vmem:[#allocation5 + $0x1a8] sm:$0xff]
    %v171 = vld [vmem:[#allocation5 + $0x1b0] sm:$0xff]
    %v172 = vld [vmem:[#allocation5 + $0x1b8] sm:$0xff]
    %v173 = vld [vmem:[#allocation5 + $0x1c0] sm:$0xff]
    %v174 = vld [vmem:[#allocation5 + $0x1c8] sm:$0xff]
    %v175 = vld [vmem:[#allocation5 + $0x1d0] sm:$0xff]
    %v176 = vld [vmem:[#allocation5 + $0x1d8] sm:$0xff]
    %v177 = vld [vmem:[#allocation5 + $0x1e0] sm:$0x33]
    %v178 = vld [vmem:[#allocation5 + $0x1e8] sm:$0x33]
    %v179 = vld [vmem:[#allocation5 + $0x1f0] sm:$0x33]
    %v180 = vld [vmem:[#allocation5 + $0x1f8] sm:$0x33]
    %v181 = vld [vmem:[#allocation5 + $0x200] sm:$0x33]
    %v182 = vld [vmem:[#allocation7] sm:$0xff]
    %v183 = vld [vmem:[#allocation7 + $0x8] sm:$0x3]
    %v186 = vlaneseq
    %v187 = vshrl.u32 %v186, 7
    %v188 = vsub.s32 0, %v187
    %v189 = vrot.slane %v182, %v188
    %v190 = vlaneseq
    %v191 = vshrl.u32 %v190, 7
    %v192 = vsub.s32 1, %v191
    %v193 = vrot.slane %v182, %v192
    %v194 = vlaneseq
    %v195 = vshrl.u32 %v194, 7
    %v196 = vsub.s32 2, %v195
    %v197 = vrot.slane %v182, %v196
    %v198 = vlaneseq
    %v199 = vshrl.u32 %v198, 7
    %v200 = vsub.s32 3, %v199
    %v201 = vrot.slane %v182, %v200
    %v202 = vlaneseq
    %v203 = vshrl.u32 %v202, 7
    %v204 = vsub.s32 4, %v203
    %v205 = vrot.slane %v182, %v204
    %v206 = vlaneseq
    %v207 = vshrl.u32 %v206, 7
    %v208 = vsub.s32 5, %v207
    %v209 = vrot.slane %v182, %v208
    %v210 = vlaneseq
    %v211 = vshrl.u32 %v210, 7
    %v212 = vsub.s32 6, %v211
    %v213 = vrot.slane %v182, %v212
    %v214 = vlaneseq
    %v215 = vshrl.u32 %v214, 7
    %v216 = vsub.s32 7, %v215
    %v217 = vrot.slane %v182, %v216
    %v218 = vlaneseq
    %v219 = vshrl.u32 %v218, 7
    %v220 = vsub.s32 0, %v219
    %v221 = vrot.slane %v183, %v220
    %v222 = vlaneseq
    %v223 = vshrl.u32 %v222, 7
    %v224 = vsub.s32 1, %v223
    %v225 = vrot.slane %v183, %v224
    %v301 = vunpack.c.l.b16 %v117
    %v302 = vunpack.c.h.b16 %v117
    %v303 = vunpack.c.l.b16 %v118
    %v304 = vunpack.c.h.b16 %v118
    %v305 = vunpack.c.l.b16 %v119
    %v306 = vunpack.c.h.b16 %v119
    %v307 = vunpack.c.l.b16 %v120
    %v308 = vunpack.c.h.b16 %v120
    %v309 = vunpack.c.l.b16 %v121
    %v310 = vunpack.c.h.b16 %v121
    %v311 = vunpack.c.l.b16 %v122
    %v312 = vunpack.c.h.b16 %v122
    %v313 = vunpack.c.l.b16 %v123
    %v314 = vunpack.c.h.b16 %v123
    %v315 = vunpack.c.l.b16 %v124
    %v316 = vunpack.c.h.b16 %v124
    %v317 = vunpack.c.l.b16 %v125
    %v318 = vunpack.c.h.b16 %v125
    %v319 = vunpack.c.l.b16 %v126
    %v320 = vunpack.c.h.b16 %v126
    %v321 = vunpack.c.l.b16 %v127
    %v322 = vunpack.c.h.b16 %v127
    %v323 = vunpack.c.l.b16 %v128
    %v324 = vunpack.c.h.b16 %v128
    %v325 = vunpack.c.l.b16 %v129
    %v326 = vunpack.c.h.b16 %v129
    %v327 = vunpack.c.l.b16 %v130
    %v328 = vunpack.c.h.b16 %v130
    %v329 = vunpack.c.l.b16 %v131
    %v330 = vunpack.c.h.b16 %v131
    %v331 = vunpack.c.l.b16 %v132
    %v332 = vunpack.c.h.b16 %v132
    %v333 = vunpack.c.l.b16 %v133
    %v334 = vunpack.c.h.b16 %v133
    %v335 = vunpack.c.l.b16 %v134
    %v336 = vunpack.c.h.b16 %v134
    %v337 = vunpack.c.l.b16 %v135
    %v338 = vunpack.c.h.b16 %v135
    %v339 = vunpack.c.l.b16 %v136
    %v340 = vunpack.c.h.b16 %v136
    %v341 = vunpack.c.l.b16 %v137
    %v342 = vunpack.c.h.b16 %v137
    %v343 = vunpack.c.l.b16 %v138
    %v344 = vunpack.c.h.b16 %v138
    %v345 = vunpack.c.l.b16 %v139
    %v346 = vunpack.c.h.b16 %v139
    %v347 = vunpack.c.l.b16 %v140
    %v348 = vunpack.c.h.b16 %v140
    %v349 = vunpack.c.l.b16 %v141
    %v350 = vunpack.c.h.b16 %v141
    %v351 = vunpack.c.l.b16 %v142
    %v352 = vunpack.c.h.b16 %v142
    %v353 = vunpack.c.l.b16 %v143
    %v354 = vunpack.c.h.b16 %v143
    %v355 = vunpack.c.l.b16 %v144
    %v356 = vunpack.c.h.b16 %v144
    %v357 = vunpack.c.l.b16 %v145
    %v358 = vunpack.c.h.b16 %v145
    %v359 = vunpack.c.l.b16 %v146
    %v360 = vunpack.c.h.b16 %v146
    %v361 = vunpack.c.l.b16 %v147
    %v362 = vunpack.c.h.b16 %v147
    %v363 = vunpack.c.l.b16 %v148
    %v364 = vunpack.c.h.b16 %v148
    %v365 = vunpack.c.l.b16 %v149
    %v366 = vunpack.c.h.b16 %v149
    %v367 = vunpack.c.l.b16 %v150
    %v368 = vunpack.c.h.b16 %v150
    %v369 = vunpack.c.l.b16 %v151
    %v370 = vunpack.c.h.b16 %v151
    %v371 = vunpack.c.l.b16 %v152
    %v372 = vunpack.c.h.b16 %v152
    %v373 = vunpack.c.l.b16 %v153
    %v374 = vunpack.c.h.b16 %v153
    %v375 = vunpack.c.l.b16 %v154
    %v376 = vunpack.c.h.b16 %v154
    %v377 = vunpack.c.l.b16 %v155
    %v378 = vunpack.c.h.b16 %v155
    %v379 = vunpack.c.l.b16 %v156
    %v380 = vunpack.c.h.b16 %v156
    %v381 = vunpack.c.l.b16 %v157
    %v382 = vunpack.c.h.b16 %v157
    %v383 = vunpack.c.l.b16 %v158
    %v384 = vunpack.c.h.b16 %v158
    %v385 = vunpack.c.l.b16 %v159
    %v386 = vunpack.c.h.b16 %v159
    %v387 = vunpack.c.l.b16 %v160
    %v388 = vunpack.c.h.b16 %v160
    %v389 = vunpack.c.l.b16 %v161
    %v390 = vunpack.c.h.b16 %v161
    %v391 = vunpack.c.l.b16 %v162
    %v392 = vunpack.c.h.b16 %v162
    %v393 = vunpack.c.l.b16 %v163
    %v394 = vunpack.c.h.b16 %v163
    %v395 = vunpack.c.l.b16 %v164
    %v396 = vunpack.c.h.b16 %v164
    %v397 = vunpack.c.l.b16 %v165
    %v398 = vunpack.c.h.b16 %v165
    %v399 = vunpack.c.l.b16 %v166
    %v400 = vunpack.c.h.b16 %v166
    %v401 = vunpack.c.l.b16 %v167
    %v402 = vunpack.c.h.b16 %v167
    %v403 = vunpack.c.l.b16 %v168
    %v404 = vunpack.c.h.b16 %v168
    %v405 = vunpack.c.l.b16 %v169
    %v406 = vunpack.c.h.b16 %v169
    %v407 = vunpack.c.l.b16 %v170
    %v408 = vunpack.c.h.b16 %v170
    %v409 = vunpack.c.l.b16 %v171
    %v410 = vunpack.c.h.b16 %v171
    %v411 = vunpack.c.l.b16 %v172
    %v412 = vunpack.c.h.b16 %v172
    %v413 = vunpack.c.l.b16 %v173
    %v414 = vunpack.c.h.b16 %v173
    %v415 = vunpack.c.l.b16 %v174
    %v416 = vunpack.c.h.b16 %v174
    %v417 = vunpack.c.l.b16 %v175
    %v418 = vunpack.c.h.b16 %v175
    %v419 = vunpack.c.l.b16 %v176
    %v420 = vunpack.c.h.b16 %v176
    %v421 = vunpack.c.l.b16 %v177
    %v422 = vunpack.c.h.b16 %v177
    %v423 = vunpack.c.l.b16 %v178
    %v424 = vunpack.c.h.b16 %v178
    %v425 = vunpack.c.l.b16 %v179
    %v426 = vunpack.c.h.b16 %v179
    %v427 = vunpack.c.l.b16 %v180
    %v428 = vunpack.c.h.b16 %v180
    %v429 = vunpack.c.l.b16 %v181
    %v430 = vunpack.c.h.b16 %v181
    %v431 = vpack.c.b16 %v311, %v301
    %v432 = vpack.c.b16 %v312, %v302
    %v433 = vpack.c.b16 %v313, %v303
    %v434 = vpack.c.b16 %v314, %v304
    %v435 = vpack.c.b16 %v315, %v305
    %v436 = vpack.c.b16 %v316, %v306
    %v437 = vpack.c.b16 %v317, %v307
    %v438 = vpack.c.b16 %v318, %v308
    %v439 = vpack.c.b16 %v319, %v309
    %v440 = vpack.c.b16 %v320, %v310
    %v441 = vpack.c.b16 %v331, %v321
    %v442 = vpack.c.b16 %v332, %v322
    %v443 = vpack.c.b16 %v333, %v323
    %v444 = vpack.c.b16 %v334, %v324
    %v445 = vpack.c.b16 %v335, %v325
    %v446 = vpack.c.b16 %v336, %v326
    %v447 = vpack.c.b16 %v337, %v327
    %v448 = vpack.c.b16 %v338, %v328
    %v449 = vpack.c.b16 %v339, %v329
    %v450 = vpack.c.b16 %v340, %v330
    %v451 = vpack.c.b16 %v351, %v341
    %v452 = vpack.c.b16 %v352, %v342
    %v453 = vpack.c.b16 %v353, %v343
    %v454 = vpack.c.b16 %v354, %v344
    %v455 = vpack.c.b16 %v355, %v345
    %v456 = vpack.c.b16 %v356, %v346
    %v457 = vpack.c.b16 %v357, %v347
    %v458 = vpack.c.b16 %v358, %v348
    %v459 = vpack.c.b16 %v359, %v349
    %v460 = vpack.c.b16 %v360, %v350
    %v461 = vpack.c.b16 %v371, %v361
    %v462 = vpack.c.b16 %v372, %v362
    %v463 = vpack.c.b16 %v373, %v363
    %v464 = vpack.c.b16 %v374, %v364
    %v465 = vpack.c.b16 %v375, %v365
    %v466 = vpack.c.b16 %v376, %v366
    %v467 = vpack.c.b16 %v377, %v367
    %v468 = vpack.c.b16 %v378, %v368
    %v469 = vpack.c.b16 %v379, %v369
    %v470 = vpack.c.b16 %v380, %v370
    %v471 = vpack.c.b16 %v391, %v381
    %v472 = vpack.c.b16 %v392, %v382
    %v473 = vpack.c.b16 %v393, %v383
    %v474 = vpack.c.b16 %v394, %v384
    %v475 = vpack.c.b16 %v395, %v385
    %v476 = vpack.c.b16 %v396, %v386
    %v477 = vpack.c.b16 %v397, %v387
    %v478 = vpack.c.b16 %v398, %v388
    %v479 = vpack.c.b16 %v399, %v389
    %v480 = vpack.c.b16 %v400, %v390
    %v481 = vpack.c.b16 %v411, %v401
    %v482 = vpack.c.b16 %v412, %v402
    %v483 = vpack.c.b16 %v413, %v403
    %v484 = vpack.c.b16 %v414, %v404
    %v485 = vpack.c.b16 %v415, %v405
    %v486 = vpack.c.b16 %v416, %v406
    %v487 = vpack.c.b16 %v417, %v407
    %v488 = vpack.c.b16 %v418, %v408
    %v489 = vpack.c.b16 %v419, %v409
    %v490 = vpack.c.b16 %v420, %v410
    %v491 = vpack.c.b16 %v421, %v421
    %v492 = vpack.c.b16 %v422, %v422
    %v493 = vpack.c.b16 %v423, %v423
    %v494 = vpack.c.b16 %v424, %v424
    %v495 = vpack.c.b16 %v425, %v425
    %v496 = vpack.c.b16 %v426, %v426
    %v497 = vpack.c.b16 %v427, %v427
    %v498 = vpack.c.b16 %v428, %v428
    %v499 = vpack.c.b16 %v429, %v429
    %v500 = vpack.c.b16 %v430, %v430
    %vm561 = vcmask 818176
    %v563 = vsel %vm561, %v116, 0
    %vm565 = vcmask 1041408
    %v567 = vsel %vm565, %v491, 0
    %v570 = vsel %vm565, %v492, 0
    %v573 = vsel %vm565, %v493, 0
    %v576 = vsel %vm565, %v494, 0
    %v579 = vsel %vm565, %v495, 0
    %v582 = vsel %vm565, %v496, 0
    %v585 = vsel %vm565, %v497, 0
    %v588 = vsel %vm565, %v498, 0
    %v591 = vsel %vm565, %v499, 0
    %v594 = vsel %vm565, %v500, 0
    %596 = vmatprep.subr.bf16.mxu0 %v432
    %597 = vmatpush1.bf16.msra.mxu0 %v431
    %598 = vmatprep.subr.bf16.mxu0 %v442
    %599 = vmatpush1.bf16.msra.mxu0 %v441
    %600 = vmatprep.subr.bf16.mxu0 %v452
    %601 = vmatpush1.bf16.msra.mxu0 %v451
    %602 = vmatprep.subr.bf16.mxu0 %v462
    %603 = vmatpush1.bf16.msra.mxu0 %v461
    %604 = vmatprep.subr.bf16.mxu0 %v472
    %605 = vmatpush1.bf16.msra.mxu0 %v471
    %606 = vmatprep.subr.bf16.mxu0 %v482
    %607 = vmatpush1.bf16.msra.mxu0 %v481
    %608 = vmatprep.subr.bf16.mxu0 %v570
    %609 = vmatpush1.bf16.msra.mxu0 %v567
    %610 = vmatprep.subr.bf16.mxu0 0
    %611 = vmatpush1.bf16.msra.mxu0 0
    %612 = vmatprep.subr.bf16.mxu0 0
    %613 = vmatpush1.bf16.msra.mxu0 0
    %614 = vmatprep.subr.bf16.mxu0 0
    %615 = vmatpush1.bf16.msra.mxu0 0
    %616 = vmatprep.subr.bf16.mxu0 0
    %617 = vmatpush1.bf16.msra.mxu0 0
    %618 = vmatprep.subr.bf16.mxu0 0
    %619 = vmatpush1.bf16.msra.mxu0 0
    %620 = vmatprep.subr.bf16.mxu0 0
    %621 = vmatpush1.bf16.msra.mxu0 0
    %622 = vmatprep.subr.bf16.mxu0 0
    %623 = vmatpush1.bf16.msra.mxu0 0
    %624 = vmatprep.subr.bf16.mxu0 0
    %625 = vmatpush1.bf16.msra.mxu0 0
    %626 = vmatprep.subr.bf16.mxu0 0
    %627 = vmatpush1.bf16.msra.mxu0 0
    %628 = vmatprep.mubr.bf16.mxu0 0
    %629 = vmatmul.mubr.bf16.gmra.mrb[0].mxu0 %v563
    %v630 = vpop.f32.mrb[0].mxu0
    %v631 = vadd.f32 %v189, %v630
    %v632 = vpop.f32.mrb[0].mxu0
    %v633 = vadd.f32 %v193, %v632
    %v634 = vpop.f32.mrb[0].mxu0
    %v635 = vpop.f32.mrb[0].mxu0
    %636 = vdwg.mxu0
    %637 = vmatprep.subr.bf16.mxu0 %v434
    %638 = vmatpush1.bf16.msra.mxu0 %v433
    %639 = vmatprep.subr.bf16.mxu0 %v444
    %640 = vmatpush1.bf16.msra.mxu0 %v443
    %641 = vmatprep.subr.bf16.mxu0 %v454
    %642 = vmatpush1.bf16.msra.mxu0 %v453
    %643 = vmatprep.subr.bf16.mxu0 %v464
    %644 = vmatpush1.bf16.msra.mxu0 %v463
    %645 = vmatprep.subr.bf16.mxu0 %v474
    %646 = vmatpush1.bf16.msra.mxu0 %v473
    %647 = vmatprep.subr.bf16.mxu0 %v484
    %648 = vmatpush1.bf16.msra.mxu0 %v483
    %649 = vmatprep.subr.bf16.mxu0 %v576
    %650 = vmatpush1.bf16.msra.mxu0 %v573
    %651 = vmatprep.subr.bf16.mxu0 0
    %652 = vmatpush1.bf16.msra.mxu0 0
    %653 = vmatprep.subr.bf16.mxu0 0
    %654 = vmatpush1.bf16.msra.mxu0 0
    %655 = vmatprep.subr.bf16.mxu0 0
    %656 = vmatpush1.bf16.msra.mxu0 0
    %657 = vmatprep.subr.bf16.mxu0 0
    %658 = vmatpush1.bf16.msra.mxu0 0
    %659 = vmatprep.subr.bf16.mxu0 0
    %660 = vmatpush1.bf16.msra.mxu0 0
    %661 = vmatprep.subr.bf16.mxu0 0
    %662 = vmatpush1.bf16.msra.mxu0 0
    %663 = vmatprep.subr.bf16.mxu0 0
    %664 = vmatpush1.bf16.msra.mxu0 0
    %665 = vmatprep.subr.bf16.mxu0 0
    %666 = vmatpush1.bf16.msra.mxu0 0
    %667 = vmatprep.subr.bf16.mxu0 0
    %668 = vmatpush1.bf16.msra.mxu0 0
    %669 = vmatprep.mubr.bf16.mxu0 0
    %670 = vmatmul.mubr.bf16.gmra.mrb[0].mxu0 %v563
    %v671 = vpop.f32.mrb[0].mxu0
    %v672 = vadd.f32 %v197, %v671
    %v673 = vpop.f32.mrb[0].mxu0
    %v674 = vadd.f32 %v201, %v673
    %v675 = vpop.f32.mrb[0].mxu0
    %v676 = vpop.f32.mrb[0].mxu0
    %677 = vdwg.mxu0
    %678 = vmatprep.subr.bf16.mxu0 %v436
    %679 = vmatpush1.bf16.msra.mxu0 %v435
    %680 = vmatprep.subr.bf16.mxu0 %v446
    %681 = vmatpush1.bf16.msra.mxu0 %v445
    %682 = vmatprep.subr.bf16.mxu0 %v456
    %683 = vmatpush1.bf16.msra.mxu0 %v455
    %684 = vmatprep.subr.bf16.mxu0 %v466
    %685 = vmatpush1.bf16.msra.mxu0 %v465
    %686 = vmatprep.subr.bf16.mxu0 %v476
    %687 = vmatpush1.bf16.msra.mxu0 %v475
    %688 = vmatprep.subr.bf16.mxu0 %v486
    %689 = vmatpush1.bf16.msra.mxu0 %v485
    %690 = vmatprep.subr.bf16.mxu0 %v582
    %691 = vmatpush1.bf16.msra.mxu0 %v579
    %692 = vmatprep.subr.bf16.mxu0 0
    %693 = vmatpush1.bf16.msra.mxu0 0
    %694 = vmatprep.subr.bf16.mxu0 0
    %695 = vmatpush1.bf16.msra.mxu0 0
    %696 = vmatprep.subr.bf16.mxu0 0
    %697 = vmatpush1.bf16.msra.mxu0 0
    %698 = vmatprep.subr.bf16.mxu0 0
    %699 = vmatpush1.bf16.msra.mxu0 0
    %700 = vmatprep.subr.bf16.mxu0 0
    %701 = vmatpush1.bf16.msra.mxu0 0
    %702 = vmatprep.subr.bf16.mxu0 0
    %703 = vmatpush1.bf16.msra.mxu0 0
    %704 = vmatprep.subr.bf16.mxu0 0
    %705 = vmatpush1.bf16.msra.mxu0 0
    %706 = vmatprep.subr.bf16.mxu0 0
    %707 = vmatpush1.bf16.msra.mxu0 0
    %708 = vmatprep.subr.bf16.mxu0 0
    %709 = vmatpush1.bf16.msra.mxu0 0
    %710 = vmatprep.mubr.bf16.mxu0 0
    %711 = vmatmul.mubr.bf16.gmra.mrb[0].mxu0 %v563
    %v712 = vpop.f32.mrb[0].mxu0
    %v713 = vadd.f32 %v205, %v712
    %v714 = vpop.f32.mrb[0].mxu0
    %v715 = vadd.f32 %v209, %v714
    %v716 = vpop.f32.mrb[0].mxu0
    %v717 = vpop.f32.mrb[0].mxu0
    %718 = vdwg.mxu0
    %719 = vmatprep.subr.bf16.mxu0 %v438
    %720 = vmatpush1.bf16.msra.mxu0 %v437
    %721 = vmatprep.subr.bf16.mxu0 %v448
    %722 = vmatpush1.bf16.msra.mxu0 %v447
    %723 = vmatprep.subr.bf16.mxu0 %v458
    %724 = vmatpush1.bf16.msra.mxu0 %v457
    %725 = vmatprep.subr.bf16.mxu0 %v468
    %726 = vmatpush1.bf16.msra.mxu0 %v467
    %727 = vmatprep.subr.bf16.mxu0 %v478
    %728 = vmatpush1.bf16.msra.mxu0 %v477
    %729 = vmatprep.subr.bf16.mxu0 %v488
    %730 = vmatpush1.bf16.msra.mxu0 %v487
    %731 = vmatprep.subr.bf16.mxu0 %v588
    %732 = vmatpush1.bf16.msra.mxu0 %v585
    %733 = vmatprep.subr.bf16.mxu0 0
    %734 = vmatpush1.bf16.msra.mxu0 0
    %735 = vmatprep.subr.bf16.mxu0 0
    %736 = vmatpush1.bf16.msra.mxu0 0
    %737 = vmatprep.subr.bf16.mxu0 0
    %738 = vmatpush1.bf16.msra.mxu0 0
    %739 = vmatprep.subr.bf16.mxu0 0
    %740 = vmatpush1.bf16.msra.mxu0 0
    %741 = vmatprep.subr.bf16.mxu0 0
    %742 = vmatpush1.bf16.msra.mxu0 0
    %743 = vmatprep.subr.bf16.mxu0 0
    %744 = vmatpush1.bf16.msra.mxu0 0
    %745 = vmatprep.subr.bf16.mxu0 0
    %746 = vmatpush1.bf16.msra.mxu0 0
    %747 = vmatprep.subr.bf16.mxu0 0
    %748 = vmatpush1.bf16.msra.mxu0 0
    %749 = vmatprep.subr.bf16.mxu0 0
    %750 = vmatpush1.bf16.msra.mxu0 0
    %751 = vmatprep.mubr.bf16.mxu0 0
    %752 = vmatmul.mubr.bf16.gmra.mrb[0].mxu0 %v563
    %v753 = vpop.f32.mrb[0].mxu0
    %v754 = vadd.f32 %v213, %v753
    %v755 = vpop.f32.mrb[0].mxu0
    %v756 = vadd.f32 %v217, %v755
    %v757 = vpop.f32.mrb[0].mxu0
    %v758 = vpop.f32.mrb[0].mxu0
    %759 = vdwg.mxu0
    %760 = vmatprep.subr.bf16.mxu0 %v440
    %761 = vmatpush1.bf16.msra.mxu0 %v439
    %762 = vmatprep.subr.bf16.mxu0 %v450
    %763 = vmatpush1.bf16.msra.mxu0 %v449
    %764 = vmatprep.subr.bf16.mxu0 %v460
    %765 = vmatpush1.bf16.msra.mxu0 %v459
    %766 = vmatprep.subr.bf16.mxu0 %v470
    %767 = vmatpush1.bf16.msra.mxu0 %v469
    %768 = vmatprep.subr.bf16.mxu0 %v480
    %769 = vmatpush1.bf16.msra.mxu0 %v479
    %770 = vmatprep.subr.bf16.mxu0 %v490
    %771 = vmatpush1.bf16.msra.mxu0 %v489
    %772 = vmatprep.subr.bf16.mxu0 %v594
    %773 = vmatpush1.bf16.msra.mxu0 %v591
    %774 = vmatprep.subr.bf16.mxu0 0
    %775 = vmatpush1.bf16.msra.mxu0 0
    %776 = vmatprep.subr.bf16.mxu0 0
    %777 = vmatpush1.bf16.msra.mxu0 0
    %778 = vmatprep.subr.bf16.mxu0 0
    %779 = vmatpush1.bf16.msra.mxu0 0
    %780 = vmatprep.subr.bf16.mxu0 0
    %781 = vmatpush1.bf16.msra.mxu0 0
    %782 = vmatprep.subr.bf16.mxu0 0
    %783 = vmatpush1.bf16.msra.mxu0 0
    %784 = vmatprep.subr.bf16.mxu0 0
    %785 = vmatpush1.bf16.msra.mxu0 0
    %786 = vmatprep.subr.bf16.mxu0 0
    %787 = vmatpush1.bf16.msra.mxu0 0
    %788 = vmatprep.subr.bf16.mxu0 0
    %789 = vmatpush1.bf16.msra.mxu0 0
    %790 = vmatprep.subr.bf16.mxu0 0
    %791 = vmatpush1.bf16.msra.mxu0 0
    %792 = vmatprep.mubr.bf16.mxu0 0
    %793 = vmatmul.mubr.bf16.gmra.mrb[0].mxu0 %v563
    %v794 = vpop.f32.mrb[0].mxu0
    %v795 = vadd.f32 %v221, %v794
    %v796 = vpop.f32.mrb[0].mxu0
    %v797 = vadd.f32 %v225, %v796
    %v798 = vpop.f32.mrb[0].mxu0
    %v799 = vpop.f32.mrb[0].mxu0
    %800 = vdwg.mxu0
    %vm801 = vcmp.gt.f32.partialorder %v631, 0.0
    %vm802 = vcmp.gt.f32.partialorder %v633, 0.0
    %vm803 = vcmp.gt.f32.partialorder %v672, 0.0
    %vm804 = vcmp.gt.f32.partialorder %v674, 0.0
    %vm805 = vcmp.gt.f32.partialorder %v713, 0.0
    %vm806 = vcmp.gt.f32.partialorder %v715, 0.0
    %vm807 = vcmp.gt.f32.partialorder %v754, 0.0
    %vm808 = vcmp.gt.f32.partialorder %v756, 0.0
    %vm809 = vcmp.gt.f32.partialorder %v795, 0.0
    %vm810 = vcmp.gt.f32.partialorder %v797, 0.0
    %v811 = vmul.f32 %v631, 0.2
    %v812 = vmul.f32 %v633, 0.2
    %v813 = vmul.f32 %v672, 0.2
    %v814 = vmul.f32 %v674, 0.2
    %v815 = vmul.f32 %v713, 0.2
    %v816 = vmul.f32 %v715, 0.2
    %v817 = vmul.f32 %v754, 0.2
    %v818 = vmul.f32 %v756, 0.2
    %v819 = vmul.f32 %v795, 0.2
    %v820 = vmul.f32 %v797, 0.2
    %v821 = vsel %vm801, %v631, %v811
    %v822 = vsel %vm802, %v633, %v812
    %v823 = vsel %vm803, %v672, %v813
    %v824 = vsel %vm804, %v674, %v814
    %v825 = vsel %vm805, %v713, %v815
    %v826 = vsel %vm806, %v715, %v816
    %v827 = vsel %vm807, %v754, %v817
    %v828 = vsel %vm808, %v756, %v818
    %v829 = vsel %vm809, %v795, %v819
    %v830 = vsel %vm810, %v797, %v820
    %v831 = vpack.c.bf16 %v821, %v821
    %v832 = vpack.c.bf16 %v822, %v822
    %v833 = vpack.c.bf16 %v823, %v823
    %v834 = vpack.c.bf16 %v824, %v824
    %v835 = vpack.c.bf16 %v825, %v825
    %v836 = vpack.c.bf16 %v826, %v826
    %v837 = vpack.c.bf16 %v827, %v827
    %v838 = vpack.c.bf16 %v828, %v828
    %v839 = vpack.c.bf16 %v829, %v829
    %v840 = vpack.c.bf16 %v830, %v830
    %v841 = vld [vmem:[#allocation8] sm:$0xff]
    %v842 = vld [vmem:[#allocation8 + $0x8] sm:$0xff]
    %v843 = vld [vmem:[#allocation8 + $0x10] sm:$0xff]
    %v844 = vld [vmem:[#allocation8 + $0x18] sm:$0xff]
    %v845 = vld [vmem:[#allocation8 + $0x20] sm:$0xff]
    %v846 = vld [vmem:[#allocation8 + $0x28] sm:$0xff]
    %v847 = vld [vmem:[#allocation8 + $0x30] sm:$0xff]
    %v848 = vld [vmem:[#allocation8 + $0x38] sm:$0xff]
    %v849 = vld [vmem:[#allocation8 + $0x40] sm:$0xff]
    %v850 = vld [vmem:[#allocation8 + $0x48] sm:$0xff]
    %v851 = vld [vmem:[#allocation8 + $0x50] sm:$0xff]
    %v852 = vld [vmem:[#allocation8 + $0x58] sm:$0xff]
    %v853 = vld [vmem:[#allocation8 + $0x60] sm:$0xff]
    %v854 = vld [vmem:[#allocation8 + $0x68] sm:$0xff]
    %v855 = vld [vmem:[#allocation8 + $0x70] sm:$0xff]
    %v856 = vld [vmem:[#allocation8 + $0x78] sm:$0xff]
    %v857 = vld [vmem:[#allocation8 + $0x80] sm:$0xff]
    %v858 = vld [vmem:[#allocation8 + $0x88] sm:$0xff]
    %v859 = vld [vmem:[#allocation8 + $0x90] sm:$0xff]
    %v860 = vld [vmem:[#allocation8 + $0x98] sm:$0xff]
    %v861 = vld [vmem:[#allocation8 + $0xa0] sm:$0xff]
    %v862 = vld [vmem:[#allocation8 + $0xa8] sm:$0xff]
    %v863 = vld [vmem:[#allocation8 + $0xb0] sm:$0xff]
    %v864 = vld [vmem:[#allocation8 + $0xb8] sm:$0xff]
    %v865 = vld [vmem:[#allocation8 + $0xc0] sm:$0xff]
    %v866 = vld [vmem:[#allocation8 + $0xc8] sm:$0xff]
    %v867 = vld [vmem:[#allocation8 + $0xd0] sm:$0xff]
    %v868 = vld [vmem:[#allocation8 + $0xd8] sm:$0xff]
    %v869 = vld [vmem:[#allocation8 + $0xe0] sm:$0xff]
    %v870 = vld [vmem:[#allocation8 + $0xe8] sm:$0xff]
    %v871 = vld [vmem:[#allocation8 + $0xf0] sm:$0xff]
    %v872 = vld [vmem:[#allocation8 + $0xf8] sm:$0xff]
    %v873 = vld [vmem:[#allocation8 + $0x100] sm:$0xff]
    %v874 = vld [vmem:[#allocation8 + $0x108] sm:$0xff]
    %v875 = vld [vmem:[#allocation8 + $0x110] sm:$0xff]
    %v876 = vld [vmem:[#allocation8 + $0x118] sm:$0xff]
    %v877 = vld [vmem:[#allocation8 + $0x120] sm:$0xff]
    %v878 = vld [vmem:[#allocation8 + $0x128] sm:$0xff]
    %v879 = vld [vmem:[#allocation8 + $0x130] sm:$0xff]
    %v880 = vld [vmem:[#allocation8 + $0x138] sm:$0xff]
    %v881 = vld [vmem:[#allocation8 + $0x140] sm:$0xff]
    %v882 = vld [vmem:[#allocation8 + $0x148] sm:$0xff]
    %v883 = vld [vmem:[#allocation8 + $0x150] sm:$0xff]
    %v884 = vld [vmem:[#allocation8 + $0x158] sm:$0xff]
    %v885 = vld [vmem:[#allocation8 + $0x160] sm:$0xff]
    %v886 = vld [vmem:[#allocation8 + $0x168] sm:$0xff]
    %v887 = vld [vmem:[#allocation8 + $0x170] sm:$0xff]
    %v888 = vld [vmem:[#allocation8 + $0x178] sm:$0xff]
    %v889 = vld [vmem:[#allocation8 + $0x180] sm:$0xff]
    %v890 = vld [vmem:[#allocation8 + $0x188] sm:$0xff]
    %v891 = vld [vmem:[#allocation8 + $0x190] sm:$0xff]
    %v892 = vld [vmem:[#allocation8 + $0x198] sm:$0xff]
    %v893 = vld [vmem:[#allocation8 + $0x1a0] sm:$0xff]
    %v894 = vld [vmem:[#allocation8 + $0x1a8] sm:$0xff]
    %v895 = vld [vmem:[#allocation8 + $0x1b0] sm:$0xff]
    %v896 = vld [vmem:[#allocation8 + $0x1b8] sm:$0xff]
    %v897 = vld [vmem:[#allocation8 + $0x1c0] sm:$0xff]
    %v898 = vld [vmem:[#allocation8 + $0x1c8] sm:$0xff]
    %v899 = vld [vmem:[#allocation8 + $0x1d0] sm:$0xff]
    %v900 = vld [vmem:[#allocation8 + $0x1d8] sm:$0xff]
    %v901 = vld [vmem:[#allocation8 + $0x1e0] sm:$0xff]
    %v902 = vld [vmem:[#allocation8 + $0x1e8] sm:$0xff]
    %v903 = vld [vmem:[#allocation8 + $0x1f0] sm:$0xff]
    %v904 = vld [vmem:[#allocation8 + $0x1f8] sm:$0xff]
    %v905 = vld [vmem:[#allocation8 + $0x200] sm:$0xff]
    %v906 = vld [vmem:[#allocation8 + $0x208] sm:$0xff]
    %v907 = vld [vmem:[#allocation8 + $0x210] sm:$0xff]
    %v908 = vld [vmem:[#allocation8 + $0x218] sm:$0xff]
    %v909 = vld [vmem:[#allocation8 + $0x220] sm:$0xff]
    %v910 = vld [vmem:[#allocation8 + $0x228] sm:$0xff]
    %v911 = vld [vmem:[#allocation8 + $0x230] sm:$0xff]
    %v912 = vld [vmem:[#allocation8 + $0x238] sm:$0xff]
    %v913 = vld [vmem:[#allocation8 + $0x240] sm:$0xff]
    %v914 = vld [vmem:[#allocation8 + $0x248] sm:$0xff]
    %v915 = vld [vmem:[#allocation8 + $0x250] sm:$0xff]
    %v916 = vld [vmem:[#allocation8 + $0x258] sm:$0xff]
    %v917 = vld [vmem:[#allocation8 + $0x260] sm:$0xff]
    %v918 = vld [vmem:[#allocation8 + $0x268] sm:$0xff]
    %v919 = vld [vmem:[#allocation8 + $0x270] sm:$0xff]
    %v920 = vld [vmem:[#allocation8 + $0x278] sm:$0xff]
    %v921 = vld [vmem:[#allocation8 + $0x280] sm:$0xff]
    %v922 = vld [vmem:[#allocation8 + $0x288] sm:$0xff]
    %v923 = vld [vmem:[#allocation8 + $0x290] sm:$0xff]
    %v924 = vld [vmem:[#allocation8 + $0x298] sm:$0xff]
    %v925 = vld [vmem:[#allocation8 + $0x2a0] sm:$0xff]
    %v926 = vld [vmem:[#allocation8 + $0x2a8] sm:$0xff]
    %v927 = vld [vmem:[#allocation8 + $0x2b0] sm:$0xff]
    %v928 = vld [vmem:[#allocation8 + $0x2b8] sm:$0xff]
    %v929 = vld [vmem:[#allocation8 + $0x2c0] sm:$0xff]
    %v930 = vld [vmem:[#allocation8 + $0x2c8] sm:$0xff]
    %v931 = vld [vmem:[#allocation8 + $0x2d0] sm:$0xff]
    %v932 = vld [vmem:[#allocation8 + $0x2d8] sm:$0xff]
    %v933 = vld [vmem:[#allocation8 + $0x2e0] sm:$0xff]
    %v934 = vld [vmem:[#allocation8 + $0x2e8] sm:$0xff]
    %v935 = vld [vmem:[#allocation8 + $0x2f0] sm:$0xff]
    %v936 = vld [vmem:[#allocation8 + $0x2f8] sm:$0xff]
    %v937 = vld [vmem:[#allocation8 + $0x300] sm:$0xff]
    %v938 = vld [vmem:[#allocation8 + $0x308] sm:$0xff]
    %v939 = vld [vmem:[#allocation8 + $0x310] sm:$0xff]
    %v940 = vld [vmem:[#allocation8 + $0x318] sm:$0xff]
    %v941 = vld [vmem:[#allocation8 + $0x320] sm:$0xff]
    %v942 = vld [vmem:[#allocation8 + $0x328] sm:$0xff]
    %v943 = vld [vmem:[#allocation8 + $0x330] sm:$0xff]
    %v944 = vld [vmem:[#allocation8 + $0x338] sm:$0xff]
    %v945 = vld [vmem:[#allocation8 + $0x340] sm:$0xff]
    %v946 = vld [vmem:[#allocation8 + $0x348] sm:$0xff]
    %v947 = vld [vmem:[#allocation8 + $0x350] sm:$0xff]
    %v948 = vld [vmem:[#allocation8 + $0x358] sm:$0xff]
    %v949 = vld [vmem:[#allocation8 + $0x360] sm:$0xff]
    %v950 = vld [vmem:[#allocation8 + $0x368] sm:$0xff]
    %v951 = vld [vmem:[#allocation8 + $0x370] sm:$0xff]
    %v952 = vld [vmem:[#allocation8 + $0x378] sm:$0xff]
    %v953 = vld [vmem:[#allocation8 + $0x380] sm:$0xff]
    %v954 = vld [vmem:[#allocation8 + $0x388] sm:$0xff]
    %v955 = vld [vmem:[#allocation8 + $0x390] sm:$0xff]
    %v956 = vld [vmem:[#allocation8 + $0x398] sm:$0xff]
    %v957 = vld [vmem:[#allocation8 + $0x3a0] sm:$0xff]
    %v958 = vld [vmem:[#allocation8 + $0x3a8] sm:$0xff]
    %v959 = vld [vmem:[#allocation8 + $0x3b0] sm:$0xff]
    %v960 = vld [vmem:[#allocation8 + $0x3b8] sm:$0xff]
    %v961 = vld [vmem:[#allocation8 + $0x3c0] sm:$0xff]
    %v962 = vld [vmem:[#allocation8 + $0x3c8] sm:$0xff]
    %v963 = vld [vmem:[#allocation8 + $0x3d0] sm:$0xff]
    %v964 = vld [vmem:[#allocation8 + $0x3d8] sm:$0xff]
    %v965 = vld [vmem:[#allocation8 + $0x3e0] sm:$0xff]
    %v966 = vld [vmem:[#allocation8 + $0x3e8] sm:$0xff]
    %v967 = vld [vmem:[#allocation8 + $0x3f0] sm:$0xff]
    %v968 = vld [vmem:[#allocation8 + $0x3f8] sm:$0xff]
    %v969 = vld [vmem:[#allocation8 + $0x400] sm:$0xff]
    %v970 = vld [vmem:[#allocation8 + $0x408] sm:$0xff]
    %v971 = vld [vmem:[#allocation8 + $0x410] sm:$0xff]
    %v972 = vld [vmem:[#allocation8 + $0x418] sm:$0xff]
    %v973 = vld [vmem:[#allocation8 + $0x420] sm:$0xff]
    %v974 = vld [vmem:[#allocation8 + $0x428] sm:$0xff]
    %v975 = vld [vmem:[#allocation8 + $0x430] sm:$0xff]
    %v976 = vld [vmem:[#allocation8 + $0x438] sm:$0xff]
    %v977 = vld [vmem:[#allocation8 + $0x440] sm:$0xff]
    %v978 = vld [vmem:[#allocation8 + $0x448] sm:$0xff]
    %v979 = vld [vmem:[#allocation8 + $0x450] sm:$0xff]
    %v980 = vld [vmem:[#allocation8 + $0x458] sm:$0xff]
    %v981 = vld [vmem:[#allocation8 + $0x460] sm:$0xff]
    %v982 = vld [vmem:[#allocation8 + $0x468] sm:$0xff]
    %v983 = vld [vmem:[#allocation8 + $0x470] sm:$0xff]
    %v984 = vld [vmem:[#allocation8 + $0x478] sm:$0xff]
    %v985 = vld [vmem:[#allocation8 + $0x480] sm:$0xff]
    %v986 = vld [vmem:[#allocation8 + $0x488] sm:$0xff]
    %v987 = vld [vmem:[#allocation8 + $0x490] sm:$0xff]
    %v988 = vld [vmem:[#allocation8 + $0x498] sm:$0xff]
    %v989 = vld [vmem:[#allocation8 + $0x4a0] sm:$0xff]
    %v990 = vld [vmem:[#allocation8 + $0x4a8] sm:$0xff]
    %v991 = vld [vmem:[#allocation8 + $0x4b0] sm:$0xff]
    %v992 = vld [vmem:[#allocation8 + $0x4b8] sm:$0xff]
    %v993 = vld [vmem:[#allocation8 + $0x4c0] sm:$0xff]
    %v994 = vld [vmem:[#allocation8 + $0x4c8] sm:$0xff]
    %v995 = vld [vmem:[#allocation8 + $0x4d0] sm:$0xff]
    %v996 = vld [vmem:[#allocation8 + $0x4d8] sm:$0xff]
    %v997 = vld [vmem:[#allocation8 + $0x4e0] sm:$0xff]
    %v998 = vld [vmem:[#allocation8 + $0x4e8] sm:$0xff]
    %v999 = vld [vmem:[#allocation8 + $0x4f0] sm:$0xff]
    %v1000 = vld [vmem:[#allocation8 + $0x4f8] sm:$0xff]
    %v1001 = vld [vmem:[#allocation8 + $0x500] sm:$0xff]
    %v1002 = vld [vmem:[#allocation8 + $0x508] sm:$0xff]
    %v1003 = vld [vmem:[#allocation8 + $0x510] sm:$0xff]
    %v1004 = vld [vmem:[#allocation8 + $0x518] sm:$0xff]
    %v1005 = vld [vmem:[#allocation8 + $0x520] sm:$0xff]
    %v1006 = vld [vmem:[#allocation8 + $0x528] sm:$0xff]
    %v1007 = vld [vmem:[#allocation8 + $0x530] sm:$0xff]
    %v1008 = vld [vmem:[#allocation8 + $0x538] sm:$0xff]
    %v1009 = vld [vmem:[#allocation8 + $0x540] sm:$0xff]
    %v1010 = vld [vmem:[#allocation8 + $0x548] sm:$0xff]
    %v1011 = vld [vmem:[#allocation8 + $0x550] sm:$0xff]
    %v1012 = vld [vmem:[#allocation8 + $0x558] sm:$0xff]
    %v1013 = vld [vmem:[#allocation8 + $0x560] sm:$0xff]
    %v1014 = vld [vmem:[#allocation8 + $0x568] sm:$0xff]
    %v1015 = vld [vmem:[#allocation8 + $0x570] sm:$0xff]
    %v1016 = vld [vmem:[#allocation8 + $0x578] sm:$0xff]
    %v1017 = vld [vmem:[#allocation8 + $0x580] sm:$0xff]
    %v1018 = vld [vmem:[#allocation8 + $0x588] sm:$0xff]
    %v1019 = vld [vmem:[#allocation8 + $0x590] sm:$0xff]
    %v1020 = vld [vmem:[#allocation8 + $0x598] sm:$0xff]
    %v1021 = vld [vmem:[#allocation8 + $0x5a0] sm:$0xff]
    %v1022 = vld [vmem:[#allocation8 + $0x5a8] sm:$0xff]
    %v1023 = vld [vmem:[#allocation8 + $0x5b0] sm:$0xff]
    %v1024 = vld [vmem:[#allocation8 + $0x5b8] sm:$0xff]
    %v1025 = vld [vmem:[#allocation8 + $0x5c0] sm:$0xff]
    %v1026 = vld [vmem:[#allocation8 + $0x5c8] sm:$0xff]
    %v1027 = vld [vmem:[#allocation8 + $0x5d0] sm:$0xff]
    %v1028 = vld [vmem:[#allocation8 + $0x5d8] sm:$0xff]
    %v1029 = vld [vmem:[#allocation8 + $0x5e0] sm:$0xff]
    %v1030 = vld [vmem:[#allocation8 + $0x5e8] sm:$0xff]
    %v1031 = vld [vmem:[#allocation8 + $0x5f0] sm:$0xff]
    %v1032 = vld [vmem:[#allocation8 + $0x5f8] sm:$0xff]
    %v1033 = vld [vmem:[#allocation8 + $0x600] sm:$0xff]
    %v1034 = vld [vmem:[#allocation8 + $0x608] sm:$0xff]
    %v1035 = vld [vmem:[#allocation8 + $0x610] sm:$0xff]
    %v1036 = vld [vmem:[#allocation8 + $0x618] sm:$0xff]
    %v1037 = vld [vmem:[#allocation8 + $0x620] sm:$0xff]
    %v1038 = vld [vmem:[#allocation8 + $0x628] sm:$0xff]
    %v1039 = vld [vmem:[#allocation8 + $0x630] sm:$0xff]
    %v1040 = vld [vmem:[#allocation8 + $0x638] sm:$0xff]
    %v1041 = vld [vmem:[#allocation8 + $0x640] sm:$0xff]
    %v1042 = vld [vmem:[#allocation8 + $0x648] sm:$0xff]
    %v1043 = vld [vmem:[#allocation8 + $0x650] sm:$0xff]
    %v1044 = vld [vmem:[#allocation8 + $0x658] sm:$0xff]
    %v1045 = vld [vmem:[#allocation8 + $0x660] sm:$0xff]
    %v1046 = vld [vmem:[#allocation8 + $0x668] sm:$0xff]
    %v1047 = vld [vmem:[#allocation8 + $0x670] sm:$0xff]
    %v1048 = vld [vmem:[#allocation8 + $0x678] sm:$0xff]
    %v1049 = vld [vmem:[#allocation8 + $0x680] sm:$0xff]
    %v1050 = vld [vmem:[#allocation8 + $0x688] sm:$0xff]
    %v1051 = vld [vmem:[#allocation8 + $0x690] sm:$0xff]
    %v1052 = vld [vmem:[#allocation8 + $0x698] sm:$0xff]
    %v1053 = vld [vmem:[#allocation8 + $0x6a0] sm:$0xff]
    %v1054 = vld [vmem:[#allocation8 + $0x6a8] sm:$0xff]
    %v1055 = vld [vmem:[#allocation8 + $0x6b0] sm:$0xff]
    %v1056 = vld [vmem:[#allocation8 + $0x6b8] sm:$0xff]
    %v1057 = vld [vmem:[#allocation8 + $0x6c0] sm:$0xff]
    %v1058 = vld [vmem:[#allocation8 + $0x6c8] sm:$0xff]
    %v1059 = vld [vmem:[#allocation8 + $0x6d0] sm:$0xff]
    %v1060 = vld [vmem:[#allocation8 + $0x6d8] sm:$0xff]
    %v1061 = vld [vmem:[#allocation8 + $0x6e0] sm:$0xff]
    %v1062 = vld [vmem:[#allocation8 + $0x6e8] sm:$0xff]
    %v1063 = vld [vmem:[#allocation8 + $0x6f0] sm:$0xff]
    %v1064 = vld [vmem:[#allocation8 + $0x6f8] sm:$0xff]
    %v1065 = vld [vmem:[#allocation8 + $0x700] sm:$0xff]
    %v1066 = vld [vmem:[#allocation8 + $0x708] sm:$0xff]
    %v1067 = vld [vmem:[#allocation8 + $0x710] sm:$0xff]
    %v1068 = vld [vmem:[#allocation8 + $0x718] sm:$0xff]
    %v1069 = vld [vmem:[#allocation8 + $0x720] sm:$0xff]
    %v1070 = vld [vmem:[#allocation8 + $0x728] sm:$0xff]
    %v1071 = vld [vmem:[#allocation8 + $0x730] sm:$0xff]
    %v1072 = vld [vmem:[#allocation8 + $0x738] sm:$0xff]
    %v1073 = vld [vmem:[#allocation8 + $0x740] sm:$0xff]
    %v1074 = vld [vmem:[#allocation8 + $0x748] sm:$0xff]
    %v1075 = vld [vmem:[#allocation8 + $0x750] sm:$0xff]
    %v1076 = vld [vmem:[#allocation8 + $0x758] sm:$0xff]
    %v1077 = vld [vmem:[#allocation8 + $0x760] sm:$0xff]
    %v1078 = vld [vmem:[#allocation8 + $0x768] sm:$0xff]
    %v1079 = vld [vmem:[#allocation8 + $0x770] sm:$0xff]
    %v1080 = vld [vmem:[#allocation8 + $0x778] sm:$0xff]
    %v1081 = vld [vmem:[#allocation8 + $0x780] sm:$0xff]
    %v1082 = vld [vmem:[#allocation8 + $0x788] sm:$0xff]
    %v1083 = vld [vmem:[#allocation8 + $0x790] sm:$0xff]
    %v1084 = vld [vmem:[#allocation8 + $0x798] sm:$0xff]
    %v1085 = vld [vmem:[#allocation8 + $0x7a0] sm:$0xff]
    %v1086 = vld [vmem:[#allocation8 + $0x7a8] sm:$0xff]
    %v1087 = vld [vmem:[#allocation8 + $0x7b0] sm:$0xff]
    %v1088 = vld [vmem:[#allocation8 + $0x7b8] sm:$0xff]
    %v1089 = vld [vmem:[#allocation8 + $0x7c0] sm:$0xff]
    %v1090 = vld [vmem:[#allocation8 + $0x7c8] sm:$0xff]
    %v1091 = vld [vmem:[#allocation8 + $0x7d0] sm:$0xff]
    %v1092 = vld [vmem:[#allocation8 + $0x7d8] sm:$0xff]
    %v1093 = vld [vmem:[#allocation8 + $0x7e0] sm:$0xff]
    %v1094 = vld [vmem:[#allocation8 + $0x7e8] sm:$0xff]
    %v1095 = vld [vmem:[#allocation8 + $0x7f0] sm:$0xff]
    %v1096 = vld [vmem:[#allocation8 + $0x7f8] sm:$0xff]
    %v1097 = vld [vmem:[#allocation8 + $0x800] sm:$0xff]
    %v1098 = vld [vmem:[#allocation8 + $0x808] sm:$0xff]
    %v1099 = vld [vmem:[#allocation8 + $0x810] sm:$0xff]
    %v1100 = vld [vmem:[#allocation8 + $0x818] sm:$0xff]
    %v1101 = vld [vmem:[#allocation8 + $0x820] sm:$0xff]
    %v1102 = vld [vmem:[#allocation8 + $0x828] sm:$0xff]
    %v1103 = vld [vmem:[#allocation8 + $0x830] sm:$0xff]
    %v1104 = vld [vmem:[#allocation8 + $0x838] sm:$0xff]
    %v1105 = vld [vmem:[#allocation8 + $0x840] sm:$0xff]
    %v1106 = vld [vmem:[#allocation8 + $0x848] sm:$0xff]
    %v1107 = vld [vmem:[#allocation8 + $0x850] sm:$0xff]
    %v1108 = vld [vmem:[#allocation8 + $0x858] sm:$0xff]
    %v1109 = vld [vmem:[#allocation8 + $0x860] sm:$0xff]
    %v1110 = vld [vmem:[#allocation8 + $0x868] sm:$0xff]
    %v1111 = vld [vmem:[#allocation8 + $0x870] sm:$0xff]
    %v1112 = vld [vmem:[#allocation8 + $0x878] sm:$0xff]
    %v1113 = vld [vmem:[#allocation8 + $0x880] sm:$0xff]
    %v1114 = vld [vmem:[#allocation8 + $0x888] sm:$0xff]
    %v1115 = vld [vmem:[#allocation8 + $0x890] sm:$0xff]
    %v1116 = vld [vmem:[#allocation8 + $0x898] sm:$0xff]
    %v1117 = vld [vmem:[#allocation8 + $0x8a0] sm:$0xff]
    %v1118 = vld [vmem:[#allocation8 + $0x8a8] sm:$0xff]
    %v1119 = vld [vmem:[#allocation8 + $0x8b0] sm:$0xff]
    %v1120 = vld [vmem:[#allocation8 + $0x8b8] sm:$0xff]
    %v1121 = vld [vmem:[#allocation8 + $0x8c0] sm:$0xff]
    %v1122 = vld [vmem:[#allocation8 + $0x8c8] sm:$0xff]
    %v1123 = vld [vmem:[#allocation8 + $0x8d0] sm:$0xff]
    %v1124 = vld [vmem:[#allocation8 + $0x8d8] sm:$0xff]
    %v1125 = vld [vmem:[#allocation8 + $0x8e0] sm:$0xff]
    %v1126 = vld [vmem:[#allocation8 + $0x8e8] sm:$0xff]
    %v1127 = vld [vmem:[#allocation8 + $0x8f0] sm:$0xff]
    %v1128 = vld [vmem:[#allocation8 + $0x8f8] sm:$0xff]
    %v1129 = vld [vmem:[#allocation8 + $0x900] sm:$0xff]
    %v1130 = vld [vmem:[#allocation8 + $0x908] sm:$0xff]
    %v1131 = vld [vmem:[#allocation8 + $0x910] sm:$0xff]
    %v1132 = vld [vmem:[#allocation8 + $0x918] sm:$0xff]
    %v1133 = vld [vmem:[#allocation8 + $0x920] sm:$0xff]
    %v1134 = vld [vmem:[#allocation8 + $0x928] sm:$0xff]
    %v1135 = vld [vmem:[#allocation8 + $0x930] sm:$0xff]
    %v1136 = vld [vmem:[#allocation8 + $0x938] sm:$0xff]
    %v1137 = vld [vmem:[#allocation8 + $0x940] sm:$0xff]
    %v1138 = vld [vmem:[#allocation8 + $0x948] sm:$0xff]
    %v1139 = vld [vmem:[#allocation8 + $0x950] sm:$0xff]
    %v1140 = vld [vmem:[#allocation8 + $0x958] sm:$0xff]
    %v1141 = vld [vmem:[#allocation8 + $0x960] sm:$0xff]
    %v1142 = vld [vmem:[#allocation8 + $0x968] sm:$0xff]
    %v1143 = vld [vmem:[#allocation8 + $0x970] sm:$0xff]
    %v1144 = vld [vmem:[#allocation8 + $0x978] sm:$0xff]
    %v1145 = vld [vmem:[#allocation8 + $0x980] sm:$0xff]
    %v1146 = vld [vmem:[#allocation8 + $0x988] sm:$0xff]
    %v1147 = vld [vmem:[#allocation8 + $0x990] sm:$0xff]
    %v1148 = vld [vmem:[#allocation8 + $0x998] sm:$0xff]
    %v1149 = vld [vmem:[#allocation8 + $0x9a0] sm:$0xff]
    %v1150 = vld [vmem:[#allocation8 + $0x9a8] sm:$0xff]
    %v1151 = vld [vmem:[#allocation8 + $0x9b0] sm:$0xff]
    %v1152 = vld [vmem:[#allocation8 + $0x9b8] sm:$0xff]
    %v1153 = vld [vmem:[#allocation8 + $0x9c0] sm:$0xff]
    %v1154 = vld [vmem:[#allocation8 + $0x9c8] sm:$0xff]
    %v1155 = vld [vmem:[#allocation8 + $0x9d0] sm:$0xff]
    %v1156 = vld [vmem:[#allocation8 + $0x9d8] sm:$0xff]
    %v1157 = vld [vmem:[#allocation8 + $0x9e0] sm:$0xff]
    %v1158 = vld [vmem:[#allocation8 + $0x9e8] sm:$0xff]
    %v1159 = vld [vmem:[#allocation8 + $0x9f0] sm:$0xff]
    %v1160 = vld [vmem:[#allocation8 + $0x9f8] sm:$0xff]
    %v1161 = vld [vmem:[#allocation8 + $0xa00] sm:$0xff]
    %v1162 = vld [vmem:[#allocation8 + $0xa08] sm:$0xff]
    %v1163 = vld [vmem:[#allocation8 + $0xa10] sm:$0xff]
    %v1164 = vld [vmem:[#allocation8 + $0xa18] sm:$0xff]
    %v1165 = vld [vmem:[#allocation8 + $0xa20] sm:$0xff]
    %v1166 = vld [vmem:[#allocation8 + $0xa28] sm:$0xff]
    %v1167 = vld [vmem:[#allocation8 + $0xa30] sm:$0xff]
    %v1168 = vld [vmem:[#allocation8 + $0xa38] sm:$0xff]
    %v1169 = vld [vmem:[#allocation8 + $0xa40] sm:$0xff]
    %v1170 = vld [vmem:[#allocation8 + $0xa48] sm:$0xff]
    %v1171 = vld [vmem:[#allocation8 + $0xa50] sm:$0xff]
    %v1172 = vld [vmem:[#allocation8 + $0xa58] sm:$0xff]
    %v1173 = vld [vmem:[#allocation8 + $0xa60] sm:$0xff]
    %v1174 = vld [vmem:[#allocation8 + $0xa68] sm:$0xff]
    %v1175 = vld [vmem:[#allocation8 + $0xa70] sm:$0xff]
    %v1176 = vld [vmem:[#allocation8 + $0xa78] sm:$0xff]
    %v1177 = vld [vmem:[#allocation8 + $0xa80] sm:$0xff]
    %v1178 = vld [vmem:[#allocation8 + $0xa88] sm:$0xff]
    %v1179 = vld [vmem:[#allocation8 + $0xa90] sm:$0xff]
    %v1180 = vld [vmem:[#allocation8 + $0xa98] sm:$0xff]
    %v1181 = vld [vmem:[#allocation8 + $0xaa0] sm:$0xff]
    %v1182 = vld [vmem:[#allocation8 + $0xaa8] sm:$0xff]
    %v1183 = vld [vmem:[#allocation8 + $0xab0] sm:$0xff]
    %v1184 = vld [vmem:[#allocation8 + $0xab8] sm:$0xff]
    %v1185 = vld [vmem:[#allocation8 + $0xac0] sm:$0xff]
    %v1186 = vld [vmem:[#allocation8 + $0xac8] sm:$0xff]
    %v1187 = vld [vmem:[#allocation8 + $0xad0] sm:$0xff]
    %v1188 = vld [vmem:[#allocation8 + $0xad8] sm:$0xff]
    %v1189 = vld [vmem:[#allocation8 + $0xae0] sm:$0xff]
    %v1190 = vld [vmem:[#allocation8 + $0xae8] sm:$0xff]
    %v1191 = vld [vmem:[#allocation8 + $0xaf0] sm:$0xff]
    %v1192 = vld [vmem:[#allocation8 + $0xaf8] sm:$0xff]
    %v1193 = vld [vmem:[#allocation8 + $0xb00] sm:$0xff]
    %v1194 = vld [vmem:[#allocation8 + $0xb08] sm:$0xff]
    %v1195 = vld [vmem:[#allocation8 + $0xb10] sm:$0xff]
    %v1196 = vld [vmem:[#allocation8 + $0xb18] sm:$0xff]
    %v1197 = vld [vmem:[#allocation8 + $0xb20] sm:$0xff]
    %v1198 = vld [vmem:[#allocation8 + $0xb28] sm:$0xff]
    %v1199 = vld [vmem:[#allocation8 + $0xb30] sm:$0xff]
    %v1200 = vld [vmem:[#allocation8 + $0xb38] sm:$0xff]
    %v1201 = vld [vmem:[#allocation8 + $0xb40] sm:$0xff]
    %v1202 = vld [vmem:[#allocation8 + $0xb48] sm:$0xff]
    %v1203 = vld [vmem:[#allocation8 + $0xb50] sm:$0xff]
    %v1204 = vld [vmem:[#allocation8 + $0xb58] sm:$0xff]
    %v1205 = vld [vmem:[#allocation8 + $0xb60] sm:$0xff]
    %v1206 = vld [vmem:[#allocation8 + $0xb68] sm:$0xff]
    %v1207 = vld [vmem:[#allocation8 + $0xb70] sm:$0xff]
    %v1208 = vld [vmem:[#allocation8 + $0xb78] sm:$0xff]
    %v1209 = vld [vmem:[#allocation8 + $0xb80] sm:$0xff]
    %v1210 = vld [vmem:[#allocation8 + $0xb88] sm:$0xff]
    %v1211 = vld [vmem:[#allocation8 + $0xb90] sm:$0xff]
    %v1212 = vld [vmem:[#allocation8 + $0xb98] sm:$0xff]
    %v1213 = vld [vmem:[#allocation8 + $0xba0] sm:$0xff]
    %v1214 = vld [vmem:[#allocation8 + $0xba8] sm:$0xff]
    %v1215 = vld [vmem:[#allocation8 + $0xbb0] sm:$0xff]
    %v1216 = vld [vmem:[#allocation8 + $0xbb8] sm:$0xff]
    %v1217 = vld [vmem:[#allocation8 + $0xbc0] sm:$0xff]
    %v1218 = vld [vmem:[#allocation8 + $0xbc8] sm:$0xff]
    %v1219 = vld [vmem:[#allocation8 + $0xbd0] sm:$0xff]
    %v1220 = vld [vmem:[#allocation8 + $0xbd8] sm:$0xff]
    %v1221 = vld [vmem:[#allocation8 + $0xbe0] sm:$0xff]
    %v1222 = vld [vmem:[#allocation8 + $0xbe8] sm:$0xff]
    %v1223 = vld [vmem:[#allocation8 + $0xbf0] sm:$0xff]
    %v1224 = vld [vmem:[#allocation8 + $0xbf8] sm:$0xff]
    %v1225 = vld [vmem:[#allocation8 + $0xc00] sm:$0xff]
    %v1226 = vld [vmem:[#allocation8 + $0xc08] sm:$0xff]
    %v1227 = vld [vmem:[#allocation8 + $0xc10] sm:$0xff]
    %v1228 = vld [vmem:[#allocation8 + $0xc18] sm:$0xff]
    %v1229 = vld [vmem:[#allocation8 + $0xc20] sm:$0xff]
    %v1230 = vld [vmem:[#allocation8 + $0xc28] sm:$0xff]
    %v1231 = vld [vmem:[#allocation8 + $0xc30] sm:$0xff]
    %v1232 = vld [vmem:[#allocation8 + $0xc38] sm:$0xff]
    %v1233 = vld [vmem:[#allocation8 + $0xc40] sm:$0xff]
    %v1234 = vld [vmem:[#allocation8 + $0xc48] sm:$0xff]
    %v1235 = vld [vmem:[#allocation8 + $0xc50] sm:$0xff]
    %v1236 = vld [vmem:[#allocation8 + $0xc58] sm:$0xff]
    %v1237 = vld [vmem:[#allocation8 + $0xc60] sm:$0xff]
    %v1238 = vld [vmem:[#allocation8 + $0xc68] sm:$0xff]
    %v1239 = vld [vmem:[#allocation8 + $0xc70] sm:$0xff]
    %v1240 = vld [vmem:[#allocation8 + $0xc78] sm:$0xff]
    %v1241 = vld [vmem:[#allocation8 + $0xc80] sm:$0xff]
    %v1242 = vld [vmem:[#allocation8 + $0xc88] sm:$0xff]
    %v1243 = vld [vmem:[#allocation8 + $0xc90] sm:$0xff]
    %v1244 = vld [vmem:[#allocation8 + $0xc98] sm:$0xff]
    %v1245 = vld [vmem:[#allocation8 + $0xca0] sm:$0xff]
    %v1246 = vld [vmem:[#allocation8 + $0xca8] sm:$0xff]
    %v1247 = vld [vmem:[#allocation8 + $0xcb0] sm:$0xff]
    %v1248 = vld [vmem:[#allocation8 + $0xcb8] sm:$0xff]
    %v1249 = vld [vmem:[#allocation8 + $0xcc0] sm:$0xff]
    %v1250 = vld [vmem:[#allocation8 + $0xcc8] sm:$0xff]
    %v1251 = vld [vmem:[#allocation8 + $0xcd0] sm:$0xff]
    %v1252 = vld [vmem:[#allocation8 + $0xcd8] sm:$0xff]
    %v1253 = vld [vmem:[#allocation8 + $0xce0] sm:$0xff]
    %v1254 = vld [vmem:[#allocation8 + $0xce8] sm:$0xff]
    %v1255 = vld [vmem:[#allocation8 + $0xcf0] sm:$0xff]
    %v1256 = vld [vmem:[#allocation8 + $0xcf8] sm:$0xff]
    %v1257 = vld [vmem:[#allocation8 + $0xd00] sm:$0xff]
    %v1258 = vld [vmem:[#allocation8 + $0xd08] sm:$0xff]
    %v1259 = vld [vmem:[#allocation8 + $0xd10] sm:$0xff]
    %v1260 = vld [vmem:[#allocation8 + $0xd18] sm:$0xff]
    %v1261 = vld [vmem:[#allocation8 + $0xd20] sm:$0xff]
    %v1262 = vld [vmem:[#allocation8 + $0xd28] sm:$0xff]
    %v1263 = vld [vmem:[#allocation8 + $0xd30] sm:$0xff]
    %v1264 = vld [vmem:[#allocation8 + $0xd38] sm:$0xff]
    %v1265 = vld [vmem:[#allocation8 + $0xd40] sm:$0xff]
    %v1266 = vld [vmem:[#allocation8 + $0xd48] sm:$0xff]
    %v1267 = vld [vmem:[#allocation8 + $0xd50] sm:$0xff]
    %v1268 = vld [vmem:[#allocation8 + $0xd58] sm:$0xff]
    %v1269 = vld [vmem:[#allocation8 + $0xd60] sm:$0xff]
    %v1270 = vld [vmem:[#allocation8 + $0xd68] sm:$0xff]
    %v1271 = vld [vmem:[#allocation8 + $0xd70] sm:$0xff]
    %v1272 = vld [vmem:[#allocation8 + $0xd78] sm:$0xff]
    %v1273 = vld [vmem:[#allocation8 + $0xd80] sm:$0xff]
    %v1274 = vld [vmem:[#allocation8 + $0xd88] sm:$0xff]
    %v1275 = vld [vmem:[#allocation8 + $0xd90] sm:$0xff]
    %v1276 = vld [vmem:[#allocation8 + $0xd98] sm:$0xff]
    %v1277 = vld [vmem:[#allocation8 + $0xda0] sm:$0xff]
    %v1278 = vld [vmem:[#allocation8 + $0xda8] sm:$0xff]
    %v1279 = vld [vmem:[#allocation8 + $0xdb0] sm:$0xff]
    %v1280 = vld [vmem:[#allocation8 + $0xdb8] sm:$0xff]
    %v1281 = vld [vmem:[#allocation8 + $0xdc0] sm:$0xff]
    %v1282 = vld [vmem:[#allocation8 + $0xdc8] sm:$0xff]
    %v1283 = vld [vmem:[#allocation8 + $0xdd0] sm:$0xff]
    %v1284 = vld [vmem:[#allocation8 + $0xdd8] sm:$0xff]
    %v1285 = vld [vmem:[#allocation8 + $0xde0] sm:$0xff]
    %v1286 = vld [vmem:[#allocation8 + $0xde8] sm:$0xff]
    %v1287 = vld [vmem:[#allocation8 + $0xdf0] sm:$0xff]
    %v1288 = vld [vmem:[#allocation8 + $0xdf8] sm:$0xff]
    %v1289 = vld [vmem:[#allocation8 + $0xe00] sm:$0xff]
    %v1290 = vld [vmem:[#allocation8 + $0xe08] sm:$0xff]
    %v1291 = vld [vmem:[#allocation8 + $0xe10] sm:$0xff]
    %v1292 = vld [vmem:[#allocation8 + $0xe18] sm:$0xff]
    %v1293 = vld [vmem:[#allocation8 + $0xe20] sm:$0xff]
    %v1294 = vld [vmem:[#allocation8 + $0xe28] sm:$0xff]
    %v1295 = vld [vmem:[#allocation8 + $0xe30] sm:$0xff]
    %v1296 = vld [vmem:[#allocation8 + $0xe38] sm:$0xff]
    %v1297 = vld [vmem:[#allocation8 + $0xe40] sm:$0xff]
    %v1298 = vld [vmem:[#allocation8 + $0xe48] sm:$0xff]
    %v1299 = vld [vmem:[#allocation8 + $0xe50] sm:$0xff]
    %v1300 = vld [vmem:[#allocation8 + $0xe58] sm:$0xff]
    %v1301 = vld [vmem:[#allocation8 + $0xe60] sm:$0xff]
    %v1302 = vld [vmem:[#allocation8 + $0xe68] sm:$0xff]
    %v1303 = vld [vmem:[#allocation8 + $0xe70] sm:$0xff]
    %v1304 = vld [vmem:[#allocation8 + $0xe78] sm:$0xff]
    %v1305 = vld [vmem:[#allocation8 + $0xe80] sm:$0xff]
    %v1306 = vld [vmem:[#allocation8 + $0xe88] sm:$0xff]
    %v1307 = vld [vmem:[#allocation8 + $0xe90] sm:$0xff]
    %v1308 = vld [vmem:[#allocation8 + $0xe98] sm:$0xff]
    %v1309 = vld [vmem:[#allocation8 + $0xea0] sm:$0xff]
    %v1310 = vld [vmem:[#allocation8 + $0xea8] sm:$0xff]
    %v1311 = vld [vmem:[#allocation8 + $0xeb0] sm:$0xff]
    %v1312 = vld [vmem:[#allocation8 + $0xeb8] sm:$0xff]
    %v1313 = vld [vmem:[#allocation8 + $0xec0] sm:$0xff]
    %v1314 = vld [vmem:[#allocation8 + $0xec8] sm:$0xff]
    %v1315 = vld [vmem:[#allocation8 + $0xed0] sm:$0xff]
    %v1316 = vld [vmem:[#allocation8 + $0xed8] sm:$0xff]
    %v1317 = vld [vmem:[#allocation8 + $0xee0] sm:$0xff]
    %v1318 = vld [vmem:[#allocation8 + $0xee8] sm:$0xff]
    %v1319 = vld [vmem:[#allocation8 + $0xef0] sm:$0xff]
    %v1320 = vld [vmem:[#allocation8 + $0xef8] sm:$0xff]
    %v1321 = vld [vmem:[#allocation8 + $0xf00] sm:$0xff]
    %v1322 = vld [vmem:[#allocation8 + $0xf08] sm:$0xff]
    %v1323 = vld [vmem:[#allocation8 + $0xf10] sm:$0xff]
    %v1324 = vld [vmem:[#allocation8 + $0xf18] sm:$0xff]
    %v1325 = vld [vmem:[#allocation8 + $0xf20] sm:$0xff]
    %v1326 = vld [vmem:[#allocation8 + $0xf28] sm:$0xff]
    %v1327 = vld [vmem:[#allocation8 + $0xf30] sm:$0xff]
    %v1328 = vld [vmem:[#allocation8 + $0xf38] sm:$0xff]
    %v1329 = vld [vmem:[#allocation8 + $0xf40] sm:$0xff]
    %v1330 = vld [vmem:[#allocation8 + $0xf48] sm:$0xff]
    %v1331 = vld [vmem:[#allocation8 + $0xf50] sm:$0xff]
    %v1332 = vld [vmem:[#allocation8 + $0xf58] sm:$0xff]
    %v1333 = vld [vmem:[#allocation8 + $0xf60] sm:$0xff]
    %v1334 = vld [vmem:[#allocation8 + $0xf68] sm:$0xff]
    %v1335 = vld [vmem:[#allocation8 + $0xf70] sm:$0xff]
    %v1336 = vld [vmem:[#allocation8 + $0xf78] sm:$0xff]
    %v1337 = vld [vmem:[#allocation8 + $0xf80] sm:$0xff]
    %v1338 = vld [vmem:[#allocation8 + $0xf88] sm:$0xff]
    %v1339 = vld [vmem:[#allocation8 + $0xf90] sm:$0xff]
    %v1340 = vld [vmem:[#allocation8 + $0xf98] sm:$0xff]
    %v1341 = vld [vmem:[#allocation8 + $0xfa0] sm:$0xff]
    %v1342 = vld [vmem:[#allocation8 + $0xfa8] sm:$0xff]
    %v1343 = vld [vmem:[#allocation8 + $0xfb0] sm:$0xff]
    %v1344 = vld [vmem:[#allocation8 + $0xfb8] sm:$0xff]
    %v1345 = vld [vmem:[#allocation8 + $0xfc0] sm:$0xff]
    %v1346 = vld [vmem:[#allocation8 + $0xfc8] sm:$0xff]
    %v1347 = vld [vmem:[#allocation8 + $0xfd0] sm:$0xff]
    %v1348 = vld [vmem:[#allocation8 + $0xfd8] sm:$0xff]
    %v1349 = vld [vmem:[#allocation8 + $0xfe0] sm:$0xff]
    %v1350 = vld [vmem:[#allocation8 + $0xfe8] sm:$0xff]
    %v1351 = vld [vmem:[#allocation8 + $0xff0] sm:$0xff]
    %v1352 = vld [vmem:[#allocation8 + $0xff8] sm:$0xff]
    %v1353 = vld [vmem:[#allocation8 + $0x1000] sm:$0xff]
    %v1354 = vld [vmem:[#allocation8 + $0x1008] sm:$0xff]
    %v1355 = vld [vmem:[#allocation8 + $0x1010] sm:$0xff]
    %v1356 = vld [vmem:[#allocation8 + $0x1018] sm:$0xff]
    %v1357 = vld [vmem:[#allocation8 + $0x1020] sm:$0xff]
    %v1358 = vld [vmem:[#allocation8 + $0x1028] sm:$0xff]
    %v1359 = vld [vmem:[#allocation8 + $0x1030] sm:$0xff]
    %v1360 = vld [vmem:[#allocation8 + $0x1038] sm:$0xff]
    %v1361 = vld [vmem:[#allocation8 + $0x1040] sm:$0xff]
    %v1362 = vld [vmem:[#allocation8 + $0x1048] sm:$0xff]
    %v1363 = vld [vmem:[#allocation8 + $0x1050] sm:$0xff]
    %v1364 = vld [vmem:[#allocation8 + $0x1058] sm:$0xff]
    %v1365 = vld [vmem:[#allocation8 + $0x1060] sm:$0xff]
    %v1366 = vld [vmem:[#allocation8 + $0x1068] sm:$0xff]
    %v1367 = vld [vmem:[#allocation8 + $0x1070] sm:$0xff]
    %v1368 = vld [vmem:[#allocation8 + $0x1078] sm:$0xff]
    %v1369 = vld [vmem:[#allocation8 + $0x1080] sm:$0xff]
    %v1370 = vld [vmem:[#allocation8 + $0x1088] sm:$0xff]
    %v1371 = vld [vmem:[#allocation8 + $0x1090] sm:$0xff]
    %v1372 = vld [vmem:[#allocation8 + $0x1098] sm:$0xff]
    %v1373 = vld [vmem:[#allocation8 + $0x10a0] sm:$0xff]
    %v1374 = vld [vmem:[#allocation8 + $0x10a8] sm:$0xff]
    %v1375 = vld [vmem:[#allocation8 + $0x10b0] sm:$0xff]
    %v1376 = vld [vmem:[#allocation8 + $0x10b8] sm:$0xff]
    %v1377 = vld [vmem:[#allocation8 + $0x10c0] sm:$0xff]
    %v1378 = vld [vmem:[#allocation8 + $0x10c8] sm:$0xff]
    %v1379 = vld [vmem:[#allocation8 + $0x10d0] sm:$0xff]
    %v1380 = vld [vmem:[#allocation8 + $0x10d8] sm:$0xff]
    %v1381 = vld [vmem:[#allocation8 + $0x10e0] sm:$0xff]
    %v1382 = vld [vmem:[#allocation8 + $0x10e8] sm:$0xff]
    %v1383 = vld [vmem:[#allocation8 + $0x10f0] sm:$0xff]
    %v1384 = vld [vmem:[#allocation8 + $0x10f8] sm:$0xff]
    %v1385 = vld [vmem:[#allocation8 + $0x1100] sm:$0xff]
    %v1386 = vld [vmem:[#allocation8 + $0x1108] sm:$0xff]
    %v1387 = vld [vmem:[#allocation8 + $0x1110] sm:$0xff]
    %v1388 = vld [vmem:[#allocation8 + $0x1118] sm:$0xff]
    %v1389 = vld [vmem:[#allocation8 + $0x1120] sm:$0xff]
    %v1390 = vld [vmem:[#allocation8 + $0x1128] sm:$0xff]
    %v1391 = vld [vmem:[#allocation8 + $0x1130] sm:$0xff]
    %v1392 = vld [vmem:[#allocation8 + $0x1138] sm:$0xff]
    %v1393 = vld [vmem:[#allocation8 + $0x1140] sm:$0xff]
    %v1394 = vld [vmem:[#allocation8 + $0x1148] sm:$0xff]
    %v1395 = vld [vmem:[#allocation8 + $0x1150] sm:$0xff]
    %v1396 = vld [vmem:[#allocation8 + $0x1158] sm:$0xff]
    %v1397 = vld [vmem:[#allocation8 + $0x1160] sm:$0xff]
    %v1398 = vld [vmem:[#allocation8 + $0x1168] sm:$0xff]
    %v1399 = vld [vmem:[#allocation8 + $0x1170] sm:$0xff]
    %v1400 = vld [vmem:[#allocation8 + $0x1178] sm:$0xff]
    %v1401 = vld [vmem:[#allocation8 + $0x1180] sm:$0xff]
    %v1402 = vld [vmem:[#allocation8 + $0x1188] sm:$0xff]
    %v1403 = vld [vmem:[#allocation8 + $0x1190] sm:$0xff]
    %v1404 = vld [vmem:[#allocation8 + $0x1198] sm:$0xff]
    %v1405 = vld [vmem:[#allocation8 + $0x11a0] sm:$0xff]
    %v1406 = vld [vmem:[#allocation8 + $0x11a8] sm:$0xff]
    %v1407 = vld [vmem:[#allocation8 + $0x11b0] sm:$0xff]
    %v1408 = vld [vmem:[#allocation8 + $0x11b8] sm:$0xff]
    %v1409 = vld [vmem:[#allocation8 + $0x11c0] sm:$0xff]
    %v1410 = vld [vmem:[#allocation8 + $0x11c8] sm:$0xff]
    %v1411 = vld [vmem:[#allocation8 + $0x11d0] sm:$0xff]
    %v1412 = vld [vmem:[#allocation8 + $0x11d8] sm:$0xff]
    %v1413 = vld [vmem:[#allocation8 + $0x11e0] sm:$0xff]
    %v1414 = vld [vmem:[#allocation8 + $0x11e8] sm:$0xff]
    %v1415 = vld [vmem:[#allocation8 + $0x11f0] sm:$0xff]
    %v1416 = vld [vmem:[#allocation8 + $0x11f8] sm:$0xff]
    %v1417 = vld [vmem:[#allocation8 + $0x1200] sm:$0xff]
    %v1418 = vld [vmem:[#allocation8 + $0x1208] sm:$0xff]
    %v1419 = vld [vmem:[#allocation8 + $0x1210] sm:$0xff]
    %v1420 = vld [vmem:[#allocation8 + $0x1218] sm:$0xff]
    %v1421 = vld [vmem:[#allocation8 + $0x1220] sm:$0xff]
    %v1422 = vld [vmem:[#allocation8 + $0x1228] sm:$0xff]
    %v1423 = vld [vmem:[#allocation8 + $0x1230] sm:$0xff]
    %v1424 = vld [vmem:[#allocation8 + $0x1238] sm:$0xff]
    %v1425 = vld [vmem:[#allocation8 + $0x1240] sm:$0xff]
    %v1426 = vld [vmem:[#allocation8 + $0x1248] sm:$0xff]
    %v1427 = vld [vmem:[#allocation8 + $0x1250] sm:$0xff]
    %v1428 = vld [vmem:[#allocation8 + $0x1258] sm:$0xff]
    %v1429 = vld [vmem:[#allocation8 + $0x1260] sm:$0xff]
    %v1430 = vld [vmem:[#allocation8 + $0x1268] sm:$0xff]
    %v1431 = vld [vmem:[#allocation8 + $0x1270] sm:$0xff]
    %v1432 = vld [vmem:[#allocation8 + $0x1278] sm:$0xff]
    %v1433 = vld [vmem:[#allocation8 + $0x1280] sm:$0xff]
    %v1434 = vld [vmem:[#allocation8 + $0x1288] sm:$0xff]
    %v1435 = vld [vmem:[#allocation8 + $0x1290] sm:$0xff]
    %v1436 = vld [vmem:[#allocation8 + $0x1298] sm:$0xff]
    %v1437 = vld [vmem:[#allocation8 + $0x12a0] sm:$0xff]
    %v1438 = vld [vmem:[#allocation8 + $0x12a8] sm:$0xff]
    %v1439 = vld [vmem:[#allocation8 + $0x12b0] sm:$0xff]
    %v1440 = vld [vmem:[#allocation8 + $0x12b8] sm:$0xff]
    %v1441 = vld [vmem:[#allocation8 + $0x12c0] sm:$0xff]
    %v1442 = vld [vmem:[#allocation8 + $0x12c8] sm:$0xff]
    %v1443 = vld [vmem:[#allocation8 + $0x12d0] sm:$0xff]
    %v1444 = vld [vmem:[#allocation8 + $0x12d8] sm:$0xff]
    %v1445 = vld [vmem:[#allocation8 + $0x12e0] sm:$0xff]
    %v1446 = vld [vmem:[#allocation8 + $0x12e8] sm:$0xff]
    %v1447 = vld [vmem:[#allocation8 + $0x12f0] sm:$0xff]
    %v1448 = vld [vmem:[#allocation8 + $0x12f8] sm:$0xff]
    %v1449 = vld [vmem:[#allocation8 + $0x1300] sm:$0xff]
    %v1450 = vld [vmem:[#allocation8 + $0x1308] sm:$0xff]
    %v1451 = vld [vmem:[#allocation8 + $0x1310] sm:$0xff]
    %v1452 = vld [vmem:[#allocation8 + $0x1318] sm:$0xff]
    %v1453 = vld [vmem:[#allocation8 + $0x1320] sm:$0xff]
    %v1454 = vld [vmem:[#allocation8 + $0x1328] sm:$0xff]
    %v1455 = vld [vmem:[#allocation8 + $0x1330] sm:$0xff]
    %v1456 = vld [vmem:[#allocation8 + $0x1338] sm:$0xff]
    %v1457 = vld [vmem:[#allocation8 + $0x1340] sm:$0xff]
    %v1458 = vld [vmem:[#allocation8 + $0x1348] sm:$0xff]
    %v1459 = vld [vmem:[#allocation8 + $0x1350] sm:$0xff]
    %v1460 = vld [vmem:[#allocation8 + $0x1358] sm:$0xff]
    %v1461 = vld [vmem:[#allocation8 + $0x1360] sm:$0xff]
    %v1462 = vld [vmem:[#allocation8 + $0x1368] sm:$0xff]
    %v1463 = vld [vmem:[#allocation8 + $0x1370] sm:$0xff]
    %v1464 = vld [vmem:[#allocation8 + $0x1378] sm:$0xff]
    %v1465 = vld [vmem:[#allocation8 + $0x1380] sm:$0xff]
    %v1466 = vld [vmem:[#allocation8 + $0x1388] sm:$0xff]
    %v1467 = vld [vmem:[#allocation8 + $0x1390] sm:$0xff]
    %v1468 = vld [vmem:[#allocation8 + $0x1398] sm:$0xff]
    %v1469 = vld [vmem:[#allocation8 + $0x13a0] sm:$0xff]
    %v1470 = vld [vmem:[#allocation8 + $0x13a8] sm:$0xff]
    %v1471 = vld [vmem:[#allocation8 + $0x13b0] sm:$0xff]
    %v1472 = vld [vmem:[#allocation8 + $0x13b8] sm:$0xff]
    %v1473 = vld [vmem:[#allocation8 + $0x13c0] sm:$0xff]
    %v1474 = vld [vmem:[#allocation8 + $0x13c8] sm:$0xff]
    %v1475 = vld [vmem:[#allocation8 + $0x13d0] sm:$0xff]
    %v1476 = vld [vmem:[#allocation8 + $0x13d8] sm:$0xff]
    %v1477 = vld [vmem:[#allocation8 + $0x13e0] sm:$0xff]
    %v1478 = vld [vmem:[#allocation8 + $0x13e8] sm:$0xff]
    %v1479 = vld [vmem:[#allocation8 + $0x13f0] sm:$0xff]
    %v1480 = vld [vmem:[#allocation8 + $0x13f8] sm:$0xff]
    %v1481 = vld [vmem:[#allocation8 + $0x1400] sm:$0xff]
    %v1482 = vld [vmem:[#allocation8 + $0x1408] sm:$0xff]
    %v1483 = vld [vmem:[#allocation8 + $0x1410] sm:$0xff]
    %v1484 = vld [vmem:[#allocation8 + $0x1418] sm:$0xff]
    %v1485 = vld [vmem:[#allocation8 + $0x1420] sm:$0xff]
    %v1486 = vld [vmem:[#allocation8 + $0x1428] sm:$0xff]
    %v1487 = vld [vmem:[#allocation8 + $0x1430] sm:$0xff]
    %v1488 = vld [vmem:[#allocation8 + $0x1438] sm:$0xff]
    %v1489 = vld [vmem:[#allocation8 + $0x1440] sm:$0xff]
    %v1490 = vld [vmem:[#allocation8 + $0x1448] sm:$0xff]
    %v1491 = vld [vmem:[#allocation8 + $0x1450] sm:$0xff]
    %v1492 = vld [vmem:[#allocation8 + $0x1458] sm:$0xff]
    %v1493 = vld [vmem:[#allocation8 + $0x1460] sm:$0xff]
    %v1494 = vld [vmem:[#allocation8 + $0x1468] sm:$0xff]
    %v1495 = vld [vmem:[#allocation8 + $0x1470] sm:$0xff]
    %v1496 = vld [vmem:[#allocation8 + $0x1478] sm:$0xff]
    %v1497 = vld [vmem:[#allocation8 + $0x1480] sm:$0xff]
    %v1498 = vld [vmem:[#allocation8 + $0x1488] sm:$0xff]
    %v1499 = vld [vmem:[#allocation8 + $0x1490] sm:$0xff]
    %v1500 = vld [vmem:[#allocation8 + $0x1498] sm:$0xff]
    %v1501 = vld [vmem:[#allocation8 + $0x14a0] sm:$0xff]
    %v1502 = vld [vmem:[#allocation8 + $0x14a8] sm:$0xff]
    %v1503 = vld [vmem:[#allocation8 + $0x14b0] sm:$0xff]
    %v1504 = vld [vmem:[#allocation8 + $0x14b8] sm:$0xff]
    %v1505 = vld [vmem:[#allocation8 + $0x14c0] sm:$0xff]
    %v1506 = vld [vmem:[#allocation8 + $0x14c8] sm:$0xff]
    %v1507 = vld [vmem:[#allocation8 + $0x14d0] sm:$0xff]
    %v1508 = vld [vmem:[#allocation8 + $0x14d8] sm:$0xff]
    %v1509 = vld [vmem:[#allocation8 + $0x14e0] sm:$0xff]
    %v1510 = vld [vmem:[#allocation8 + $0x14e8] sm:$0xff]
    %v1511 = vld [vmem:[#allocation8 + $0x14f0] sm:$0xff]
    %v1512 = vld [vmem:[#allocation8 + $0x14f8] sm:$0xff]
    %v1513 = vld [vmem:[#allocation8 + $0x1500] sm:$0xff]
    %v1514 = vld [vmem:[#allocation8 + $0x1508] sm:$0xff]
    %v1515 = vld [vmem:[#allocation8 + $0x1510] sm:$0xff]
    %v1516 = vld [vmem:[#allocation8 + $0x1518] sm:$0xff]
    %v1517 = vld [vmem:[#allocation8 + $0x1520] sm:$0xff]
    %v1518 = vld [vmem:[#allocation8 + $0x1528] sm:$0xff]
    %v1519 = vld [vmem:[#allocation8 + $0x1530] sm:$0xff]
    %v1520 = vld [vmem:[#allocation8 + $0x1538] sm:$0xff]
    %v1521 = vld [vmem:[#allocation8 + $0x1540] sm:$0xff]
    %v1522 = vld [vmem:[#allocation8 + $0x1548] sm:$0xff]
    %v1523 = vld [vmem:[#allocation8 + $0x1550] sm:$0xff]
    %v1524 = vld [vmem:[#allocation8 + $0x1558] sm:$0xff]
    %v1525 = vld [vmem:[#allocation8 + $0x1560] sm:$0xff]
    %v1526 = vld [vmem:[#allocation8 + $0x1568] sm:$0xff]
    %v1527 = vld [vmem:[#allocation8 + $0x1570] sm:$0xff]
    %v1528 = vld [vmem:[#allocation8 + $0x1578] sm:$0xff]
    %v1529 = vld [vmem:[#allocation8 + $0x1580] sm:$0xff]
    %v1530 = vld [vmem:[#allocation8 + $0x1588] sm:$0xff]
    %v1531 = vld [vmem:[#allocation8 + $0x1590] sm:$0xff]
    %v1532 = vld [vmem:[#allocation8 + $0x1598] sm:$0xff]
    %v1533 = vld [vmem:[#allocation8 + $0x15a0] sm:$0xff]
    %v1534 = vld [vmem:[#allocation8 + $0x15a8] sm:$0xff]
    %v1535 = vld [vmem:[#allocation8 + $0x15b0] sm:$0xff]
    %v1536 = vld [vmem:[#allocation8 + $0x15b8] sm:$0xff]
    %v1537 = vld [vmem:[#allocation8 + $0x15c0] sm:$0xff]
    %v1538 = vld [vmem:[#allocation8 + $0x15c8] sm:$0xff]
    %v1539 = vld [vmem:[#allocation8 + $0x15d0] sm:$0xff]
    %v1540 = vld [vmem:[#allocation8 + $0x15d8] sm:$0xff]
    %v1541 = vld [vmem:[#allocation8 + $0x15e0] sm:$0xff]
    %v1542 = vld [vmem:[#allocation8 + $0x15e8] sm:$0xff]
    %v1543 = vld [vmem:[#allocation8 + $0x15f0] sm:$0xff]
    %v1544 = vld [vmem:[#allocation8 + $0x15f8] sm:$0xff]
    %v1545 = vld [vmem:[#allocation8 + $0x1600] sm:$0xff]
    %v1546 = vld [vmem:[#allocation8 + $0x1608] sm:$0xff]
    %v1547 = vld [vmem:[#allocation8 + $0x1610] sm:$0xff]
    %v1548 = vld [vmem:[#allocation8 + $0x1618] sm:$0xff]
    %v1549 = vld [vmem:[#allocation8 + $0x1620] sm:$0xff]
    %v1550 = vld [vmem:[#allocation8 + $0x1628] sm:$0xff]
    %v1551 = vld [vmem:[#allocation8 + $0x1630] sm:$0xff]
    %v1552 = vld [vmem:[#allocation8 + $0x1638] sm:$0xff]
    %v1553 = vld [vmem:[#allocation8 + $0x1640] sm:$0xff]
    %v1554 = vld [vmem:[#allocation8 + $0x1648] sm:$0xff]
    %v1555 = vld [vmem:[#allocation8 + $0x1650] sm:$0xff]
    %v1556 = vld [vmem:[#allocation8 + $0x1658] sm:$0xff]
    %v1557 = vld [vmem:[#allocation8 + $0x1660] sm:$0xff]
    %v1558 = vld [vmem:[#allocation8 + $0x1668] sm:$0xff]
    %v1559 = vld [vmem:[#allocation8 + $0x1670] sm:$0xff]
    %v1560 = vld [vmem:[#allocation8 + $0x1678] sm:$0xff]
    %v1561 = vld [vmem:[#allocation8 + $0x1680] sm:$0xff]
    %v1562 = vld [vmem:[#allocation8 + $0x1688] sm:$0xff]
    %v1563 = vld [vmem:[#allocation8 + $0x1690] sm:$0xff]
    %v1564 = vld [vmem:[#allocation8 + $0x1698] sm:$0xff]
    %v1565 = vld [vmem:[#allocation8 + $0x16a0] sm:$0xff]
    %v1566 = vld [vmem:[#allocation8 + $0x16a8] sm:$0xff]
    %v1567 = vld [vmem:[#allocation8 + $0x16b0] sm:$0xff]
    %v1568 = vld [vmem:[#allocation8 + $0x16b8] sm:$0xff]
    %v1569 = vld [vmem:[#allocation8 + $0x16c0] sm:$0xff]
    %v1570 = vld [vmem:[#allocation8 + $0x16c8] sm:$0xff]
    %v1571 = vld [vmem:[#allocation8 + $0x16d0] sm:$0xff]
    %v1572 = vld [vmem:[#allocation8 + $0x16d8] sm:$0xff]
    %v1573 = vld [vmem:[#allocation8 + $0x16e0] sm:$0xff]
    %v1574 = vld [vmem:[#allocation8 + $0x16e8] sm:$0xff]
    %v1575 = vld [vmem:[#allocation8 + $0x16f0] sm:$0xff]
    %v1576 = vld [vmem:[#allocation8 + $0x16f8] sm:$0xff]
    %v1577 = vld [vmem:[#allocation8 + $0x1700] sm:$0xff]
    %v1578 = vld [vmem:[#allocation8 + $0x1708] sm:$0xff]
    %v1579 = vld [vmem:[#allocation8 + $0x1710] sm:$0xff]
    %v1580 = vld [vmem:[#allocation8 + $0x1718] sm:$0xff]
    %v1581 = vld [vmem:[#allocation8 + $0x1720] sm:$0xff]
    %v1582 = vld [vmem:[#allocation8 + $0x1728] sm:$0xff]
    %v1583 = vld [vmem:[#allocation8 + $0x1730] sm:$0xff]
    %v1584 = vld [vmem:[#allocation8 + $0x1738] sm:$0xff]
    %v1585 = vld [vmem:[#allocation8 + $0x1740] sm:$0xff]
    %v1586 = vld [vmem:[#allocation8 + $0x1748] sm:$0xff]
    %v1587 = vld [vmem:[#allocation8 + $0x1750] sm:$0xff]
    %v1588 = vld [vmem:[#allocation8 + $0x1758] sm:$0xff]
    %v1589 = vld [vmem:[#allocation8 + $0x1760] sm:$0xff]
    %v1590 = vld [vmem:[#allocation8 + $0x1768] sm:$0xff]
    %v1591 = vld [vmem:[#allocation8 + $0x1770] sm:$0xff]
    %v1592 = vld [vmem:[#allocation8 + $0x1778] sm:$0xff]
    %v1593 = vld [vmem:[#allocation8 + $0x1780] sm:$0xff]
    %v1594 = vld [vmem:[#allocation8 + $0x1788] sm:$0xff]
    %v1595 = vld [vmem:[#allocation8 + $0x1790] sm:$0xff]
    %v1596 = vld [vmem:[#allocation8 + $0x1798] sm:$0xff]
    %v1597 = vld [vmem:[#allocation8 + $0x17a0] sm:$0xff]
    %v1598 = vld [vmem:[#allocation8 + $0x17a8] sm:$0xff]
    %v1599 = vld [vmem:[#allocation8 + $0x17b0] sm:$0xff]
    %v1600 = vld [vmem:[#allocation8 + $0x17b8] sm:$0xff]
    %v1601 = vld [vmem:[#allocation8 + $0x17c0] sm:$0xff]
    %v1602 = vld [vmem:[#allocation8 + $0x17c8] sm:$0xff]
    %v1603 = vld [vmem:[#allocation8 + $0x17d0] sm:$0xff]
    %v1604 = vld [vmem:[#allocation8 + $0x17d8] sm:$0xff]
    %v1605 = vld [vmem:[#allocation8 + $0x17e0] sm:$0xff]
    %v1606 = vld [vmem:[#allocation8 + $0x17e8] sm:$0xff]
    %v1607 = vld [vmem:[#allocation8 + $0x17f0] sm:$0xff]
    %v1608 = vld [vmem:[#allocation8 + $0x17f8] sm:$0xff]
    %v1609 = vld [vmem:[#allocation8 + $0x1800] sm:$0xff]
    %v1610 = vld [vmem:[#allocation8 + $0x1808] sm:$0xff]
    %v1611 = vld [vmem:[#allocation8 + $0x1810] sm:$0xff]
    %v1612 = vld [vmem:[#allocation8 + $0x1818] sm:$0xff]
    %v1613 = vld [vmem:[#allocation8 + $0x1820] sm:$0xff]
    %v1614 = vld [vmem:[#allocation8 + $0x1828] sm:$0xff]
    %v1615 = vld [vmem:[#allocation8 + $0x1830] sm:$0xff]
    %v1616 = vld [vmem:[#allocation8 + $0x1838] sm:$0xff]
    %v1617 = vld [vmem:[#allocation8 + $0x1840] sm:$0xff]
    %v1618 = vld [vmem:[#allocation8 + $0x1848] sm:$0xff]
    %v1619 = vld [vmem:[#allocation8 + $0x1850] sm:$0xff]
    %v1620 = vld [vmem:[#allocation8 + $0x1858] sm:$0xff]
    %v1621 = vld [vmem:[#allocation8 + $0x1860] sm:$0xff]
    %v1622 = vld [vmem:[#allocation8 + $0x1868] sm:$0xff]
    %v1623 = vld [vmem:[#allocation8 + $0x1870] sm:$0xff]
    %v1624 = vld [vmem:[#allocation8 + $0x1878] sm:$0xff]
    %v1625 = vld [vmem:[#allocation8 + $0x1880] sm:$0xff]
    %v1626 = vld [vmem:[#allocation8 + $0x1888] sm:$0xff]
    %v1627 = vld [vmem:[#allocation8 + $0x1890] sm:$0xff]
    %v1628 = vld [vmem:[#allocation8 + $0x1898] sm:$0xff]
    %v1629 = vld [vmem:[#allocation8 + $0x18a0] sm:$0xff]
    %v1630 = vld [vmem:[#allocation8 + $0x18a8] sm:$0xff]
    %v1631 = vld [vmem:[#allocation8 + $0x18b0] sm:$0xff]
    %v1632 = vld [vmem:[#allocation8 + $0x18b8] sm:$0xff]
    %v1633 = vld [vmem:[#allocation8 + $0x18c0] sm:$0xff]
    %v1634 = vld [vmem:[#allocation8 + $0x18c8] sm:$0xff]
    %v1635 = vld [vmem:[#allocation8 + $0x18d0] sm:$0xff]
    %v1636 = vld [vmem:[#allocation8 + $0x18d8] sm:$0xff]
    %v1637 = vld [vmem:[#allocation8 + $0x18e0] sm:$0xff]
    %v1638 = vld [vmem:[#allocation8 + $0x18e8] sm:$0xff]
    %v1639 = vld [vmem:[#allocation8 + $0x18f0] sm:$0xff]
    %v1640 = vld [vmem:[#allocation8 + $0x18f8] sm:$0xff]
    %v1641 = vld [vmem:[#allocation10] sm:$0xff]
    %v1642 = vld [vmem:[#allocation10 + $0x8] sm:$0x3]
    %v1645 = vlaneseq
    %v1646 = vshrl.u32 %v1645, 7
    %v1647 = vsub.s32 0, %v1646
    %v1648 = vrot.slane %v1641, %v1647
    %v1649 = vlaneseq
    %v1650 = vshrl.u32 %v1649, 7
    %v1651 = vsub.s32 1, %v1650
    %v1652 = vrot.slane %v1641, %v1651
    %v1653 = vlaneseq
    %v1654 = vshrl.u32 %v1653, 7
    %v1655 = vsub.s32 2, %v1654
    %v1656 = vrot.slane %v1641, %v1655
    %v1657 = vlaneseq
    %v1658 = vshrl.u32 %v1657, 7
    %v1659 = vsub.s32 3, %v1658
    %v1660 = vrot.slane %v1641, %v1659
    %v1661 = vlaneseq
    %v1662 = vshrl.u32 %v1661, 7
    %v1663 = vsub.s32 4, %v1662
    %v1664 = vrot.slane %v1641, %v1663
    %v1665 = vlaneseq
    %v1666 = vshrl.u32 %v1665, 7
    %v1667 = vsub.s32 5, %v1666
    %v1668 = vrot.slane %v1641, %v1667
    %v1669 = vlaneseq
    %v1670 = vshrl.u32 %v1669, 7
    %v1671 = vsub.s32 6, %v1670
    %v1672 = vrot.slane %v1641, %v1671
    %v1673 = vlaneseq
    %v1674 = vshrl.u32 %v1673, 7
    %v1675 = vsub.s32 7, %v1674
    %v1676 = vrot.slane %v1641, %v1675
    %v1677 = vlaneseq
    %v1678 = vshrl.u32 %v1677, 7
    %v1679 = vsub.s32 0, %v1678
    %v1680 = vrot.slane %v1642, %v1679
    %v1681 = vlaneseq
    %v1682 = vshrl.u32 %v1681, 7
    %v1683 = vsub.s32 1, %v1682
    %v1684 = vrot.slane %v1642, %v1683
    %v2495 = vunpack.c.l.b16 %v841
    %v2496 = vunpack.c.h.b16 %v841
    %v2497 = vunpack.c.l.b16 %v842
    %v2498 = vunpack.c.h.b16 %v842
    %v2499 = vunpack.c.l.b16 %v843
    %v2500 = vunpack.c.h.b16 %v843
    %v2501 = vunpack.c.l.b16 %v844
    %v2502 = vunpack.c.h.b16 %v844
    %v2503 = vunpack.c.l.b16 %v845
    %v2504 = vunpack.c.h.b16 %v845
    %v2505 = vunpack.c.l.b16 %v846
    %v2506 = vunpack.c.h.b16 %v846
    %v2507 = vunpack.c.l.b16 %v847
    %v2508 = vunpack.c.h.b16 %v847
    %v2509 = vunpack.c.l.b16 %v848
    %v2510 = vunpack.c.h.b16 %v848
    %v2511 = vunpack.c.l.b16 %v849
    %v2512 = vunpack.c.h.b16 %v849
    %v2513 = vunpack.c.l.b16 %v850
    %v2514 = vunpack.c.h.b16 %v850
    %v2515 = vunpack.c.l.b16 %v851
    %v2516 = vunpack.c.h.b16 %v851
    %v2517 = vunpack.c.l.b16 %v852
    %v2518 = vunpack.c.h.b16 %v852
    %v2519 = vunpack.c.l.b16 %v853
    %v2520 = vunpack.c.h.b16 %v853
    %v2521 = vunpack.c.l.b16 %v854
    %v2522 = vunpack.c.h.b16 %v854
    %v2523 = vunpack.c.l.b16 %v855
    %v2524 = vunpack.c.h.b16 %v855
    %v2525 = vunpack.c.l.b16 %v856
    %v2526 = vunpack.c.h.b16 %v856
    %v2527 = vunpack.c.l.b16 %v857
    %v2528 = vunpack.c.h.b16 %v857
    %v2529 = vunpack.c.l.b16 %v858
    %v2530 = vunpack.c.h.b16 %v858
    %v2531 = vunpack.c.l.b16 %v859
    %v2532 = vunpack.c.h.b16 %v859
    %v2533 = vunpack.c.l.b16 %v860
    %v2534 = vunpack.c.h.b16 %v860
    %v2535 = vunpack.c.l.b16 %v861
    %v2536 = vunpack.c.h.b16 %v861
    %v2537 = vunpack.c.l.b16 %v862
    %v2538 = vunpack.c.h.b16 %v862
    %v2539 = vunpack.c.l.b16 %v863
    %v2540 = vunpack.c.h.b16 %v863
    %v2541 = vunpack.c.l.b16 %v864
    %v2542 = vunpack.c.h.b16 %v864
    %v2543 = vunpack.c.l.b16 %v865
    %v2544 = vunpack.c.h.b16 %v865
    %v2545 = vunpack.c.l.b16 %v866
    %v2546 = vunpack.c.h.b16 %v866
    %v2547 = vunpack.c.l.b16 %v867
    %v2548 = vunpack.c.h.b16 %v867
    %v2549 = vunpack.c.l.b16 %v868
    %v2550 = vunpack.c.h.b16 %v868
    %v2551 = vunpack.c.l.b16 %v869
    %v2552 = vunpack.c.h.b16 %v869
    %v2553 = vunpack.c.l.b16 %v870
    %v2554 = vunpack.c.h.b16 %v870
    %v2555 = vunpack.c.l.b16 %v871
    %v2556 = vunpack.c.h.b16 %v871
    %v2557 = vunpack.c.l.b16 %v872
    %v2558 = vunpack.c.h.b16 %v872
    %v2559 = vunpack.c.l.b16 %v873
    %v2560 = vunpack.c.h.b16 %v873
    %v2561 = vunpack.c.l.b16 %v874
    %v2562 = vunpack.c.h.b16 %v874
    %v2563 = vunpack.c.l.b16 %v875
    %v2564 = vunpack.c.h.b16 %v875
    %v2565 = vunpack.c.l.b16 %v876
    %v2566 = vunpack.c.h.b16 %v876
    %v2567 = vunpack.c.l.b16 %v877
    %v2568 = vunpack.c.h.b16 %v877
    %v2569 = vunpack.c.l.b16 %v878
    %v2570 = vunpack.c.h.b16 %v878
    %v2571 = vunpack.c.l.b16 %v879
    %v2572 = vunpack.c.h.b16 %v879
    %v2573 = vunpack.c.l.b16 %v880
    %v2574 = vunpack.c.h.b16 %v880
    %v2575 = vunpack.c.l.b16 %v881
    %v2576 = vunpack.c.h.b16 %v881
    %v2577 = vunpack.c.l.b16 %v882
    %v2578 = vunpack.c.h.b16 %v882
    %v2579 = vunpack.c.l.b16 %v883
    %v2580 = vunpack.c.h.b16 %v883
    %v2581 = vunpack.c.l.b16 %v884
    %v2582 = vunpack.c.h.b16 %v884
    %v2583 = vunpack.c.l.b16 %v885
    %v2584 = vunpack.c.h.b16 %v885
    %v2585 = vunpack.c.l.b16 %v886
    %v2586 = vunpack.c.h.b16 %v886
    %v2587 = vunpack.c.l.b16 %v887
    %v2588 = vunpack.c.h.b16 %v887
    %v2589 = vunpack.c.l.b16 %v888
    %v2590 = vunpack.c.h.b16 %v888
    %v2591 = vunpack.c.l.b16 %v889
    %v2592 = vunpack.c.h.b16 %v889
    %v2593 = vunpack.c.l.b16 %v890
    %v2594 = vunpack.c.h.b16 %v890
    %v2595 = vunpack.c.l.b16 %v891
    %v2596 = vunpack.c.h.b16 %v891
    %v2597 = vunpack.c.l.b16 %v892
    %v2598 = vunpack.c.h.b16 %v892
    %v2599 = vunpack.c.l.b16 %v893
    %v2600 = vunpack.c.h.b16 %v893
    %v2601 = vunpack.c.l.b16 %v894
    %v2602 = vunpack.c.h.b16 %v894
    %v2603 = vunpack.c.l.b16 %v895
    %v2604 = vunpack.c.h.b16 %v895
    %v2605 = vunpack.c.l.b16 %v896
    %v2606 = vunpack.c.h.b16 %v896
    %v2607 = vunpack.c.l.b16 %v897
    %v2608 = vunpack.c.h.b16 %v897
    %v2609 = vunpack.c.l.b16 %v898
    %v2610 = vunpack.c.h.b16 %v898
    %v2611 = vunpack.c.l.b16 %v899
    %v2612 = vunpack.c.h.b16 %v899
    %v2613 = vunpack.c.l.b16 %v900
    %v2614 = vunpack.c.h.b16 %v900
    %v2615 = vunpack.c.l.b16 %v901
    %v2616 = vunpack.c.h.b16 %v901
    %v2617 = vunpack.c.l.b16 %v902
    %v2618 = vunpack.c.h.b16 %v902
    %v2619 = vunpack.c.l.b16 %v903
    %v2620 = vunpack.c.h.b16 %v903
    %v2621 = vunpack.c.l.b16 %v904
    %v2622 = vunpack.c.h.b16 %v904
    %v2623 = vunpack.c.l.b16 %v905
    %v2624 = vunpack.c.h.b16 %v905
    %v2625 = vunpack.c.l.b16 %v906
    %v2626 = vunpack.c.h.b16 %v906
    %v2627 = vunpack.c.l.b16 %v907
    %v2628 = vunpack.c.h.b16 %v907
    %v2629 = vunpack.c.l.b16 %v908
    %v2630 = vunpack.c.h.b16 %v908
    %v2631 = vunpack.c.l.b16 %v909
    %v2632 = vunpack.c.h.b16 %v909
    %v2633 = vunpack.c.l.b16 %v910
    %v2634 = vunpack.c.h.b16 %v910
    %v2635 = vunpack.c.l.b16 %v911
    %v2636 = vunpack.c.h.b16 %v911
    %v2637 = vunpack.c.l.b16 %v912
    %v2638 = vunpack.c.h.b16 %v912
    %v2639 = vunpack.c.l.b16 %v913
    %v2640 = vunpack.c.h.b16 %v913
    %v2641 = vunpack.c.l.b16 %v914
    %v2642 = vunpack.c.h.b16 %v914
    %v2643 = vunpack.c.l.b16 %v915
    %v2644 = vunpack.c.h.b16 %v915
    %v2645 = vunpack.c.l.b16 %v916
    %v2646 = vunpack.c.h.b16 %v916
    %v2647 = vunpack.c.l.b16 %v917
    %v2648 = vunpack.c.h.b16 %v917
    %v2649 = vunpack.c.l.b16 %v918
    %v2650 = vunpack.c.h.b16 %v918
    %v2651 = vunpack.c.l.b16 %v919
    %v2652 = vunpack.c.h.b16 %v919
    %v2653 = vunpack.c.l.b16 %v920
    %v2654 = vunpack.c.h.b16 %v920
    %v2655 = vunpack.c.l.b16 %v921
    %v2656 = vunpack.c.h.b16 %v921
    %v2657 = vunpack.c.l.b16 %v922
    %v2658 = vunpack.c.h.b16 %v922
    %v2659 = vunpack.c.l.b16 %v923
    %v2660 = vunpack.c.h.b16 %v923
    %v2661 = vunpack.c.l.b16 %v924
    %v2662 = vunpack.c.h.b16 %v924
    %v2663 = vunpack.c.l.b16 %v925
    %v2664 = vunpack.c.h.b16 %v925
    %v2665 = vunpack.c.l.b16 %v926
    %v2666 = vunpack.c.h.b16 %v926
    %v2667 = vunpack.c.l.b16 %v927
    %v2668 = vunpack.c.h.b16 %v927
    %v2669 = vunpack.c.l.b16 %v928
    %v2670 = vunpack.c.h.b16 %v928
    %v2671 = vunpack.c.l.b16 %v929
    %v2672 = vunpack.c.h.b16 %v929
    %v2673 = vunpack.c.l.b16 %v930
    %v2674 = vunpack.c.h.b16 %v930
    %v2675 = vunpack.c.l.b16 %v931
    %v2676 = vunpack.c.h.b16 %v931
    %v2677 = vunpack.c.l.b16 %v932
    %v2678 = vunpack.c.h.b16 %v932
    %v2679 = vunpack.c.l.b16 %v933
    %v2680 = vunpack.c.h.b16 %v933
    %v2681 = vunpack.c.l.b16 %v934
    %v2682 = vunpack.c.h.b16 %v934
    %v2683 = vunpack.c.l.b16 %v935
    %v2684 = vunpack.c.h.b16 %v935
    %v2685 = vunpack.c.l.b16 %v936
    %v2686 = vunpack.c.h.b16 %v936
    %v2687 = vunpack.c.l.b16 %v937
    %v2688 = vunpack.c.h.b16 %v937
    %v2689 = vunpack.c.l.b16 %v938
    %v2690 = vunpack.c.h.b16 %v938
    %v2691 = vunpack.c.l.b16 %v939
    %v2692 = vunpack.c.h.b16 %v939
    %v2693 = vunpack.c.l.b16 %v940
    %v2694 = vunpack.c.h.b16 %v940
    %v2695 = vunpack.c.l.b16 %v941
    %v2696 = vunpack.c.h.b16 %v941
    %v2697 = vunpack.c.l.b16 %v942
    %v2698 = vunpack.c.h.b16 %v942
    %v2699 = vunpack.c.l.b16 %v943
    %v2700 = vunpack.c.h.b16 %v943
    %v2701 = vunpack.c.l.b16 %v944
    %v2702 = vunpack.c.h.b16 %v944
    %v2703 = vunpack.c.l.b16 %v945
    %v2704 = vunpack.c.h.b16 %v945
    %v2705 = vunpack.c.l.b16 %v946
    %v2706 = vunpack.c.h.b16 %v946
    %v2707 = vunpack.c.l.b16 %v947
    %v2708 = vunpack.c.h.b16 %v947
    %v2709 = vunpack.c.l.b16 %v948
    %v2710 = vunpack.c.h.b16 %v948
    %v2711 = vunpack.c.l.b16 %v949
    %v2712 = vunpack.c.h.b16 %v949
    %v2713 = vunpack.c.l.b16 %v950
    %v2714 = vunpack.c.h.b16 %v950
    %v2715 = vunpack.c.l.b16 %v951
    %v2716 = vunpack.c.h.b16 %v951
    %v2717 = vunpack.c.l.b16 %v952
    %v2718 = vunpack.c.h.b16 %v952
    %v2719 = vunpack.c.l.b16 %v953
    %v2720 = vunpack.c.h.b16 %v953
    %v2721 = vunpack.c.l.b16 %v954
    %v2722 = vunpack.c.h.b16 %v954
    %v2723 = vunpack.c.l.b16 %v955
    %v2724 = vunpack.c.h.b16 %v955
    %v2725 = vunpack.c.l.b16 %v956
    %v2726 = vunpack.c.h.b16 %v956
    %v2727 = vunpack.c.l.b16 %v957
    %v2728 = vunpack.c.h.b16 %v957
    %v2729 = vunpack.c.l.b16 %v958
    %v2730 = vunpack.c.h.b16 %v958
    %v2731 = vunpack.c.l.b16 %v959
    %v2732 = vunpack.c.h.b16 %v959
    %v2733 = vunpack.c.l.b16 %v960
    %v2734 = vunpack.c.h.b16 %v960
    %v2735 = vunpack.c.l.b16 %v961
    %v2736 = vunpack.c.h.b16 %v961
    %v2737 = vunpack.c.l.b16 %v962
    %v2738 = vunpack.c.h.b16 %v962
    %v2739 = vunpack.c.l.b16 %v963
    %v2740 = vunpack.c.h.b16 %v963
    %v2741 = vunpack.c.l.b16 %v964
    %v2742 = vunpack.c.h.b16 %v964
    %v2743 = vunpack.c.l.b16 %v965
    %v2744 = vunpack.c.h.b16 %v965
    %v2745 = vunpack.c.l.b16 %v966
    %v2746 = vunpack.c.h.b16 %v966
    %v2747 = vunpack.c.l.b16 %v967
    %v2748 = vunpack.c.h.b16 %v967
    %v2749 = vunpack.c.l.b16 %v968
    %v2750 = vunpack.c.h.b16 %v968
    %v2751 = vunpack.c.l.b16 %v969
    %v2752 = vunpack.c.h.b16 %v969
    %v2753 = vunpack.c.l.b16 %v970
    %v2754 = vunpack.c.h.b16 %v970
    %v2755 = vunpack.c.l.b16 %v971
    %v2756 = vunpack.c.h.b16 %v971
    %v2757 = vunpack.c.l.b16 %v972
    %v2758 = vunpack.c.h.b16 %v972
    %v2759 = vunpack.c.l.b16 %v973
    %v2760 = vunpack.c.h.b16 %v973
    %v2761 = vunpack.c.l.b16 %v974
    %v2762 = vunpack.c.h.b16 %v974
    %v2763 = vunpack.c.l.b16 %v975
    %v2764 = vunpack.c.h.b16 %v975
    %v2765 = vunpack.c.l.b16 %v976
    %v2766 = vunpack.c.h.b16 %v976
    %v2767 = vunpack.c.l.b16 %v977
    %v2768 = vunpack.c.h.b16 %v977
    %v2769 = vunpack.c.l.b16 %v978
    %v2770 = vunpack.c.h.b16 %v978
    %v2771 = vunpack.c.l.b16 %v979
    %v2772 = vunpack.c.h.b16 %v979
    %v2773 = vunpack.c.l.b16 %v980
    %v2774 = vunpack.c.h.b16 %v980
    %v2775 = vunpack.c.l.b16 %v981
    %v2776 = vunpack.c.h.b16 %v981
    %v2777 = vunpack.c.l.b16 %v982
    %v2778 = vunpack.c.h.b16 %v982
    %v2779 = vunpack.c.l.b16 %v983
    %v2780 = vunpack.c.h.b16 %v983
    %v2781 = vunpack.c.l.b16 %v984
    %v2782 = vunpack.c.h.b16 %v984
    %v2783 = vunpack.c.l.b16 %v985
    %v2784 = vunpack.c.h.b16 %v985
    %v2785 = vunpack.c.l.b16 %v986
    %v2786 = vunpack.c.h.b16 %v986
    %v2787 = vunpack.c.l.b16 %v987
    %v2788 = vunpack.c.h.b16 %v987
    %v2789 = vunpack.c.l.b16 %v988
    %v2790 = vunpack.c.h.b16 %v988
    %v2791 = vunpack.c.l.b16 %v989
    %v2792 = vunpack.c.h.b16 %v989
    %v2793 = vunpack.c.l.b16 %v990
    %v2794 = vunpack.c.h.b16 %v990
    %v2795 = vunpack.c.l.b16 %v991
    %v2796 = vunpack.c.h.b16 %v991
    %v2797 = vunpack.c.l.b16 %v992
    %v2798 = vunpack.c.h.b16 %v992
    %v2799 = vunpack.c.l.b16 %v993
    %v2800 = vunpack.c.h.b16 %v993
    %v2801 = vunpack.c.l.b16 %v994
    %v2802 = vunpack.c.h.b16 %v994
    %v2803 = vunpack.c.l.b16 %v995
    %v2804 = vunpack.c.h.b16 %v995
    %v2805 = vunpack.c.l.b16 %v996
    %v2806 = vunpack.c.h.b16 %v996
    %v2807 = vunpack.c.l.b16 %v997
    %v2808 = vunpack.c.h.b16 %v997
    %v2809 = vunpack.c.l.b16 %v998
    %v2810 = vunpack.c.h.b16 %v998
    %v2811 = vunpack.c.l.b16 %v999
    %v2812 = vunpack.c.h.b16 %v999
    %v2813 = vunpack.c.l.b16 %v1000
    %v2814 = vunpack.c.h.b16 %v1000
    %v2815 = vunpack.c.l.b16 %v1001
    %v2816 = vunpack.c.h.b16 %v1001
    %v2817 = vunpack.c.l.b16 %v1002
    %v2818 = vunpack.c.h.b16 %v1002
    %v2819 = vunpack.c.l.b16 %v1003
    %v2820 = vunpack.c.h.b16 %v1003
    %v2821 = vunpack.c.l.b16 %v1004
    %v2822 = vunpack.c.h.b16 %v1004
    %v2823 = vunpack.c.l.b16 %v1005
    %v2824 = vunpack.c.h.b16 %v1005
    %v2825 = vunpack.c.l.b16 %v1006
    %v2826 = vunpack.c.h.b16 %v1006
    %v2827 = vunpack.c.l.b16 %v1007
    %v2828 = vunpack.c.h.b16 %v1007
    %v2829 = vunpack.c.l.b16 %v1008
    %v2830 = vunpack.c.h.b16 %v1008
    %v2831 = vunpack.c.l.b16 %v1009
    %v2832 = vunpack.c.h.b16 %v1009
    %v2833 = vunpack.c.l.b16 %v1010
    %v2834 = vunpack.c.h.b16 %v1010
    %v2835 = vunpack.c.l.b16 %v1011
    %v2836 = vunpack.c.h.b16 %v1011
    %v2837 = vunpack.c.l.b16 %v1012
    %v2838 = vunpack.c.h.b16 %v1012
    %v2839 = vunpack.c.l.b16 %v1013
    %v2840 = vunpack.c.h.b16 %v1013
    %v2841 = vunpack.c.l.b16 %v1014
    %v2842 = vunpack.c.h.b16 %v1014
    %v2843 = vunpack.c.l.b16 %v1015
    %v2844 = vunpack.c.h.b16 %v1015
    %v2845 = vunpack.c.l.b16 %v1016
    %v2846 = vunpack.c.h.b16 %v1016
    %v2847 = vunpack.c.l.b16 %v1017
    %v2848 = vunpack.c.h.b16 %v1017
    %v2849 = vunpack.c.l.b16 %v1018
    %v2850 = vunpack.c.h.b16 %v1018
    %v2851 = vunpack.c.l.b16 %v1019
    %v2852 = vunpack.c.h.b16 %v1019
    %v2853 = vunpack.c.l.b16 %v1020
    %v2854 = vunpack.c.h.b16 %v1020
    %v2855 = vunpack.c.l.b16 %v1021
    %v2856 = vunpack.c.h.b16 %v1021
    %v2857 = vunpack.c.l.b16 %v1022
    %v2858 = vunpack.c.h.b16 %v1022
    %v2859 = vunpack.c.l.b16 %v1023
    %v2860 = vunpack.c.h.b16 %v1023
    %v2861 = vunpack.c.l.b16 %v1024
    %v2862 = vunpack.c.h.b16 %v1024
    %v2863 = vunpack.c.l.b16 %v1025
    %v2864 = vunpack.c.h.b16 %v1025
    %v2865 = vunpack.c.l.b16 %v1026
    %v2866 = vunpack.c.h.b16 %v1026
    %v2867 = vunpack.c.l.b16 %v1027
    %v2868 = vunpack.c.h.b16 %v1027
    %v2869 = vunpack.c.l.b16 %v1028
    %v2870 = vunpack.c.h.b16 %v1028
    %v2871 = vunpack.c.l.b16 %v1029
    %v2872 = vunpack.c.h.b16 %v1029
    %v2873 = vunpack.c.l.b16 %v1030
    %v2874 = vunpack.c.h.b16 %v1030
    %v2875 = vunpack.c.l.b16 %v1031
    %v2876 = vunpack.c.h.b16 %v1031
    %v2877 = vunpack.c.l.b16 %v1032
    %v2878 = vunpack.c.h.b16 %v1032
    %v2879 = vunpack.c.l.b16 %v1033
    %v2880 = vunpack.c.h.b16 %v1033
    %v2881 = vunpack.c.l.b16 %v1034
    %v2882 = vunpack.c.h.b16 %v1034
    %v2883 = vunpack.c.l.b16 %v1035
    %v2884 = vunpack.c.h.b16 %v1035
    %v2885 = vunpack.c.l.b16 %v1036
    %v2886 = vunpack.c.h.b16 %v1036
    %v2887 = vunpack.c.l.b16 %v1037
    %v2888 = vunpack.c.h.b16 %v1037
    %v2889 = vunpack.c.l.b16 %v1038
    %v2890 = vunpack.c.h.b16 %v1038
    %v2891 = vunpack.c.l.b16 %v1039
    %v2892 = vunpack.c.h.b16 %v1039
    %v2893 = vunpack.c.l.b16 %v1040
    %v2894 = vunpack.c.h.b16 %v1040
    %v2895 = vunpack.c.l.b16 %v1041
    %v2896 = vunpack.c.h.b16 %v1041
    %v2897 = vunpack.c.l.b16 %v1042
    %v2898 = vunpack.c.h.b16 %v1042
    %v2899 = vunpack.c.l.b16 %v1043
    %v2900 = vunpack.c.h.b16 %v1043
    %v2901 = vunpack.c.l.b16 %v1044
    %v2902 = vunpack.c.h.b16 %v1044
    %v2903 = vunpack.c.l.b16 %v1045
    %v2904 = vunpack.c.h.b16 %v1045
    %v2905 = vunpack.c.l.b16 %v1046
    %v2906 = vunpack.c.h.b16 %v1046
    %v2907 = vunpack.c.l.b16 %v1047
    %v2908 = vunpack.c.h.b16 %v1047
    %v2909 = vunpack.c.l.b16 %v1048
    %v2910 = vunpack.c.h.b16 %v1048
    %v2911 = vunpack.c.l.b16 %v1049
    %v2912 = vunpack.c.h.b16 %v1049
    %v2913 = vunpack.c.l.b16 %v1050
    %v2914 = vunpack.c.h.b16 %v1050
    %v2915 = vunpack.c.l.b16 %v1051
    %v2916 = vunpack.c.h.b16 %v1051
    %v2917 = vunpack.c.l.b16 %v1052
    %v2918 = vunpack.c.h.b16 %v1052
    %v2919 = vunpack.c.l.b16 %v1053
    %v2920 = vunpack.c.h.b16 %v1053
    %v2921 = vunpack.c.l.b16 %v1054
    %v2922 = vunpack.c.h.b16 %v1054
    %v2923 = vunpack.c.l.b16 %v1055
    %v2924 = vunpack.c.h.b16 %v1055
    %v2925 = vunpack.c.l.b16 %v1056
    %v2926 = vunpack.c.h.b16 %v1056
    %v2927 = vunpack.c.l.b16 %v1057
    %v2928 = vunpack.c.h.b16 %v1057
    %v2929 = vunpack.c.l.b16 %v1058
    %v2930 = vunpack.c.h.b16 %v1058
    %v2931 = vunpack.c.l.b16 %v1059
    %v2932 = vunpack.c.h.b16 %v1059
    %v2933 = vunpack.c.l.b16 %v1060
    %v2934 = vunpack.c.h.b16 %v1060
    %v2935 = vunpack.c.l.b16 %v1061
    %v2936 = vunpack.c.h.b16 %v1061
    %v2937 = vunpack.c.l.b16 %v1062
    %v2938 = vunpack.c.h.b16 %v1062
    %v2939 = vunpack.c.l.b16 %v1063
    %v2940 = vunpack.c.h.b16 %v1063
    %v2941 = vunpack.c.l.b16 %v1064
    %v2942 = vunpack.c.h.b16 %v1064
    %v2943 = vunpack.c.l.b16 %v1065
    %v2944 = vunpack.c.h.b16 %v1065
    %v2945 = vunpack.c.l.b16 %v1066
    %v2946 = vunpack.c.h.b16 %v1066
    %v2947 = vunpack.c.l.b16 %v1067
    %v2948 = vunpack.c.h.b16 %v1067
    %v2949 = vunpack.c.l.b16 %v1068
    %v2950 = vunpack.c.h.b16 %v1068
    %v2951 = vunpack.c.l.b16 %v1069
    %v2952 = vunpack.c.h.b16 %v1069
    %v2953 = vunpack.c.l.b16 %v1070
    %v2954 = vunpack.c.h.b16 %v1070
    %v2955 = vunpack.c.l.b16 %v1071
    %v2956 = vunpack.c.h.b16 %v1071
    %v2957 = vunpack.c.l.b16 %v1072
    %v2958 = vunpack.c.h.b16 %v1072
    %v2959 = vunpack.c.l.b16 %v1073
    %v2960 = vunpack.c.h.b16 %v1073
    %v2961 = vunpack.c.l.b16 %v1074
    %v2962 = vunpack.c.h.b16 %v1074
    %v2963 = vunpack.c.l.b16 %v1075
    %v2964 = vunpack.c.h.b16 %v1075
    %v2965 = vunpack.c.l.b16 %v1076
    %v2966 = vunpack.c.h.b16 %v1076
    %v2967 = vunpack.c.l.b16 %v1077
    %v2968 = vunpack.c.h.b16 %v1077
    %v2969 = vunpack.c.l.b16 %v1078
    %v2970 = vunpack.c.h.b16 %v1078
    %v2971 = vunpack.c.l.b16 %v1079
    %v2972 = vunpack.c.h.b16 %v1079
    %v2973 = vunpack.c.l.b16 %v1080
    %v2974 = vunpack.c.h.b16 %v1080
    %v2975 = vunpack.c.l.b16 %v1081
    %v2976 = vunpack.c.h.b16 %v1081
    %v2977 = vunpack.c.l.b16 %v1082
    %v2978 = vunpack.c.h.b16 %v1082
    %v2979 = vunpack.c.l.b16 %v1083
    %v2980 = vunpack.c.h.b16 %v1083
    %v2981 = vunpack.c.l.b16 %v1084
    %v2982 = vunpack.c.h.b16 %v1084
    %v2983 = vunpack.c.l.b16 %v1085
    %v2984 = vunpack.c.h.b16 %v1085
    %v2985 = vunpack.c.l.b16 %v1086
    %v2986 = vunpack.c.h.b16 %v1086
    %v2987 = vunpack.c.l.b16 %v1087
    %v2988 = vunpack.c.h.b16 %v1087
    %v2989 = vunpack.c.l.b16 %v1088
    %v2990 = vunpack.c.h.b16 %v1088
    %v2991 = vunpack.c.l.b16 %v1089
    %v2992 = vunpack.c.h.b16 %v1089
    %v2993 = vunpack.c.l.b16 %v1090
    %v2994 = vunpack.c.h.b16 %v1090
    %v2995 = vunpack.c.l.b16 %v1091
    %v2996 = vunpack.c.h.b16 %v1091
    %v2997 = vunpack.c.l.b16 %v1092
    %v2998 = vunpack.c.h.b16 %v1092
    %v2999 = vunpack.c.l.b16 %v1093
    %v3000 = vunpack.c.h.b16 %v1093
    %v3001 = vunpack.c.l.b16 %v1094
    %v3002 = vunpack.c.h.b16 %v1094
    %v3003 = vunpack.c.l.b16 %v1095
    %v3004 = vunpack.c.h.b16 %v1095
    %v3005 = vunpack.c.l.b16 %v1096
    %v3006 = vunpack.c.h.b16 %v1096
    %v3007 = vunpack.c.l.b16 %v1097
    %v3008 = vunpack.c.h.b16 %v1097
    %v3009 = vunpack.c.l.b16 %v1098
    %v3010 = vunpack.c.h.b16 %v1098
    %v3011 = vunpack.c.l.b16 %v1099
    %v3012 = vunpack.c.h.b16 %v1099
    %v3013 = vunpack.c.l.b16 %v1100
    %v3014 = vunpack.c.h.b16 %v1100
    %v3015 = vunpack.c.l.b16 %v1101
    %v3016 = vunpack.c.h.b16 %v1101
    %v3017 = vunpack.c.l.b16 %v1102
    %v3018 = vunpack.c.h.b16 %v1102
    %v3019 = vunpack.c.l.b16 %v1103
    %v3020 = vunpack.c.h.b16 %v1103
    %v3021 = vunpack.c.l.b16 %v1104
    %v3022 = vunpack.c.h.b16 %v1104
    %v3023 = vunpack.c.l.b16 %v1105
    %v3024 = vunpack.c.h.b16 %v1105
    %v3025 = vunpack.c.l.b16 %v1106
    %v3026 = vunpack.c.h.b16 %v1106
    %v3027 = vunpack.c.l.b16 %v1107
    %v3028 = vunpack.c.h.b16 %v1107
    %v3029 = vunpack.c.l.b16 %v1108
    %v3030 = vunpack.c.h.b16 %v1108
    %v3031 = vunpack.c.l.b16 %v1109
    %v3032 = vunpack.c.h.b16 %v1109
    %v3033 = vunpack.c.l.b16 %v1110
    %v3034 = vunpack.c.h.b16 %v1110
    %v3035 = vunpack.c.l.b16 %v1111
    %v3036 = vunpack.c.h.b16 %v1111
    %v3037 = vunpack.c.l.b16 %v1112
    %v3038 = vunpack.c.h.b16 %v1112
    %v3039 = vunpack.c.l.b16 %v1113
    %v3040 = vunpack.c.h.b16 %v1113
    %v3041 = vunpack.c.l.b16 %v1114
    %v3042 = vunpack.c.h.b16 %v1114
    %v3043 = vunpack.c.l.b16 %v1115
    %v3044 = vunpack.c.h.b16 %v1115
    %v3045 = vunpack.c.l.b16 %v1116
    %v3046 = vunpack.c.h.b16 %v1116
    %v3047 = vunpack.c.l.b16 %v1117
    %v3048 = vunpack.c.h.b16 %v1117
    %v3049 = vunpack.c.l.b16 %v1118
    %v3050 = vunpack.c.h.b16 %v1118
    %v3051 = vunpack.c.l.b16 %v1119
    %v3052 = vunpack.c.h.b16 %v1119
    %v3053 = vunpack.c.l.b16 %v1120
    %v3054 = vunpack.c.h.b16 %v1120
    %v3055 = vunpack.c.l.b16 %v1121
    %v3056 = vunpack.c.h.b16 %v1121
    %v3057 = vunpack.c.l.b16 %v1122
    %v3058 = vunpack.c.h.b16 %v1122
    %v3059 = vunpack.c.l.b16 %v1123
    %v3060 = vunpack.c.h.b16 %v1123
    %v3061 = vunpack.c.l.b16 %v1124
    %v3062 = vunpack.c.h.b16 %v1124
    %v3063 = vunpack.c.l.b16 %v1125
    %v3064 = vunpack.c.h.b16 %v1125
    %v3065 = vunpack.c.l.b16 %v1126
    %v3066 = vunpack.c.h.b16 %v1126
    %v3067 = vunpack.c.l.b16 %v1127
    %v3068 = vunpack.c.h.b16 %v1127
    %v3069 = vunpack.c.l.b16 %v1128
    %v3070 = vunpack.c.h.b16 %v1128
    %v3071 = vunpack.c.l.b16 %v1129
    %v3072 = vunpack.c.h.b16 %v1129
    %v3073 = vunpack.c.l.b16 %v1130
    %v3074 = vunpack.c.h.b16 %v1130
    %v3075 = vunpack.c.l.b16 %v1131
    %v3076 = vunpack.c.h.b16 %v1131
    %v3077 = vunpack.c.l.b16 %v1132
    %v3078 = vunpack.c.h.b16 %v1132
    %v3079 = vunpack.c.l.b16 %v1133
    %v3080 = vunpack.c.h.b16 %v1133
    %v3081 = vunpack.c.l.b16 %v1134
    %v3082 = vunpack.c.h.b16 %v1134
    %v3083 = vunpack.c.l.b16 %v1135
    %v3084 = vunpack.c.h.b16 %v1135
    %v3085 = vunpack.c.l.b16 %v1136
    %v3086 = vunpack.c.h.b16 %v1136
    %v3087 = vunpack.c.l.b16 %v1137
    %v3088 = vunpack.c.h.b16 %v1137
    %v3089 = vunpack.c.l.b16 %v1138
    %v3090 = vunpack.c.h.b16 %v1138
    %v3091 = vunpack.c.l.b16 %v1139
    %v3092 = vunpack.c.h.b16 %v1139
    %v3093 = vunpack.c.l.b16 %v1140
    %v3094 = vunpack.c.h.b16 %v1140
    %v3095 = vunpack.c.l.b16 %v1141
    %v3096 = vunpack.c.h.b16 %v1141
    %v3097 = vunpack.c.l.b16 %v1142
    %v3098 = vunpack.c.h.b16 %v1142
    %v3099 = vunpack.c.l.b16 %v1143
    %v3100 = vunpack.c.h.b16 %v1143
    %v3101 = vunpack.c.l.b16 %v1144
    %v3102 = vunpack.c.h.b16 %v1144
    %v3103 = vunpack.c.l.b16 %v1145
    %v3104 = vunpack.c.h.b16 %v1145
    %v3105 = vunpack.c.l.b16 %v1146
    %v3106 = vunpack.c.h.b16 %v1146
    %v3107 = vunpack.c.l.b16 %v1147
    %v3108 = vunpack.c.h.b16 %v1147
    %v3109 = vunpack.c.l.b16 %v1148
    %v3110 = vunpack.c.h.b16 %v1148
    %v3111 = vunpack.c.l.b16 %v1149
    %v3112 = vunpack.c.h.b16 %v1149
    %v3113 = vunpack.c.l.b16 %v1150
    %v3114 = vunpack.c.h.b16 %v1150
    %v3115 = vunpack.c.l.b16 %v1151
    %v3116 = vunpack.c.h.b16 %v1151
    %v3117 = vunpack.c.l.b16 %v1152
    %v3118 = vunpack.c.h.b16 %v1152
    %v3119 = vunpack.c.l.b16 %v1153
    %v3120 = vunpack.c.h.b16 %v1153
    %v3121 = vunpack.c.l.b16 %v1154
    %v3122 = vunpack.c.h.b16 %v1154
    %v3123 = vunpack.c.l.b16 %v1155
    %v3124 = vunpack.c.h.b16 %v1155
    %v3125 = vunpack.c.l.b16 %v1156
    %v3126 = vunpack.c.h.b16 %v1156
    %v3127 = vunpack.c.l.b16 %v1157
    %v3128 = vunpack.c.h.b16 %v1157
    %v3129 = vunpack.c.l.b16 %v1158
    %v3130 = vunpack.c.h.b16 %v1158
    %v3131 = vunpack.c.l.b16 %v1159
    %v3132 = vunpack.c.h.b16 %v1159
    %v3133 = vunpack.c.l.b16 %v1160
    %v3134 = vunpack.c.h.b16 %v1160
    %v3135 = vunpack.c.l.b16 %v1161
    %v3136 = vunpack.c.h.b16 %v1161
    %v3137 = vunpack.c.l.b16 %v1162
    %v3138 = vunpack.c.h.b16 %v1162
    %v3139 = vunpack.c.l.b16 %v1163
    %v3140 = vunpack.c.h.b16 %v1163
    %v3141 = vunpack.c.l.b16 %v1164
    %v3142 = vunpack.c.h.b16 %v1164
    %v3143 = vunpack.c.l.b16 %v1165
    %v3144 = vunpack.c.h.b16 %v1165
    %v3145 = vunpack.c.l.b16 %v1166
    %v3146 = vunpack.c.h.b16 %v1166
    %v3147 = vunpack.c.l.b16 %v1167
    %v3148 = vunpack.c.h.b16 %v1167
    %v3149 = vunpack.c.l.b16 %v1168
    %v3150 = vunpack.c.h.b16 %v1168
    %v3151 = vunpack.c.l.b16 %v1169
    %v3152 = vunpack.c.h.b16 %v1169
    %v3153 = vunpack.c.l.b16 %v1170
    %v3154 = vunpack.c.h.b16 %v1170
    %v3155 = vunpack.c.l.b16 %v1171
    %v3156 = vunpack.c.h.b16 %v1171
    %v3157 = vunpack.c.l.b16 %v1172
    %v3158 = vunpack.c.h.b16 %v1172
    %v3159 = vunpack.c.l.b16 %v1173
    %v3160 = vunpack.c.h.b16 %v1173
    %v3161 = vunpack.c.l.b16 %v1174
    %v3162 = vunpack.c.h.b16 %v1174
    %v3163 = vunpack.c.l.b16 %v1175
    %v3164 = vunpack.c.h.b16 %v1175
    %v3165 = vunpack.c.l.b16 %v1176
    %v3166 = vunpack.c.h.b16 %v1176
    %v3167 = vunpack.c.l.b16 %v1177
    %v3168 = vunpack.c.h.b16 %v1177
    %v3169 = vunpack.c.l.b16 %v1178
    %v3170 = vunpack.c.h.b16 %v1178
    %v3171 = vunpack.c.l.b16 %v1179
    %v3172 = vunpack.c.h.b16 %v1179
    %v3173 = vunpack.c.l.b16 %v1180
    %v3174 = vunpack.c.h.b16 %v1180
    %v3175 = vunpack.c.l.b16 %v1181
    %v3176 = vunpack.c.h.b16 %v1181
    %v3177 = vunpack.c.l.b16 %v1182
    %v3178 = vunpack.c.h.b16 %v1182
    %v3179 = vunpack.c.l.b16 %v1183
    %v3180 = vunpack.c.h.b16 %v1183
    %v3181 = vunpack.c.l.b16 %v1184
    %v3182 = vunpack.c.h.b16 %v1184
    %v3183 = vunpack.c.l.b16 %v1185
    %v3184 = vunpack.c.h.b16 %v1185
    %v3185 = vunpack.c.l.b16 %v1186
    %v3186 = vunpack.c.h.b16 %v1186
    %v3187 = vunpack.c.l.b16 %v1187
    %v3188 = vunpack.c.h.b16 %v1187
    %v3189 = vunpack.c.l.b16 %v1188
    %v3190 = vunpack.c.h.b16 %v1188
    %v3191 = vunpack.c.l.b16 %v1189
    %v3192 = vunpack.c.h.b16 %v1189
    %v3193 = vunpack.c.l.b16 %v1190
    %v3194 = vunpack.c.h.b16 %v1190
    %v3195 = vunpack.c.l.b16 %v1191
    %v3196 = vunpack.c.h.b16 %v1191
    %v3197 = vunpack.c.l.b16 %v1192
    %v3198 = vunpack.c.h.b16 %v1192
    %v3199 = vunpack.c.l.b16 %v1193
    %v3200 = vunpack.c.h.b16 %v1193
    %v3201 = vunpack.c.l.b16 %v1194
    %v3202 = vunpack.c.h.b16 %v1194
    %v3203 = vunpack.c.l.b16 %v1195
    %v3204 = vunpack.c.h.b16 %v1195
    %v3205 = vunpack.c.l.b16 %v1196
    %v3206 = vunpack.c.h.b16 %v1196
    %v3207 = vunpack.c.l.b16 %v1197
    %v3208 = vunpack.c.h.b16 %v1197
    %v3209 = vunpack.c.l.b16 %v1198
    %v3210 = vunpack.c.h.b16 %v1198
    %v3211 = vunpack.c.l.b16 %v1199
    %v3212 = vunpack.c.h.b16 %v1199
    %v3213 = vunpack.c.l.b16 %v1200
    %v3214 = vunpack.c.h.b16 %v1200
    %v3215 = vunpack.c.l.b16 %v1201
    %v3216 = vunpack.c.h.b16 %v1201
    %v3217 = vunpack.c.l.b16 %v1202
    %v3218 = vunpack.c.h.b16 %v1202
    %v3219 = vunpack.c.l.b16 %v1203
    %v3220 = vunpack.c.h.b16 %v1203
    %v3221 = vunpack.c.l.b16 %v1204
    %v3222 = vunpack.c.h.b16 %v1204
    %v3223 = vunpack.c.l.b16 %v1205
    %v3224 = vunpack.c.h.b16 %v1205
    %v3225 = vunpack.c.l.b16 %v1206
    %v3226 = vunpack.c.h.b16 %v1206
    %v3227 = vunpack.c.l.b16 %v1207
    %v3228 = vunpack.c.h.b16 %v1207
    %v3229 = vunpack.c.l.b16 %v1208
    %v3230 = vunpack.c.h.b16 %v1208
    %v3231 = vunpack.c.l.b16 %v1209
    %v3232 = vunpack.c.h.b16 %v1209
    %v3233 = vunpack.c.l.b16 %v1210
    %v3234 = vunpack.c.h.b16 %v1210
    %v3235 = vunpack.c.l.b16 %v1211
    %v3236 = vunpack.c.h.b16 %v1211
    %v3237 = vunpack.c.l.b16 %v1212
    %v3238 = vunpack.c.h.b16 %v1212
    %v3239 = vunpack.c.l.b16 %v1213
    %v3240 = vunpack.c.h.b16 %v1213
    %v3241 = vunpack.c.l.b16 %v1214
    %v3242 = vunpack.c.h.b16 %v1214
    %v3243 = vunpack.c.l.b16 %v1215
    %v3244 = vunpack.c.h.b16 %v1215
    %v3245 = vunpack.c.l.b16 %v1216
    %v3246 = vunpack.c.h.b16 %v1216
    %v3247 = vunpack.c.l.b16 %v1217
    %v3248 = vunpack.c.h.b16 %v1217
    %v3249 = vunpack.c.l.b16 %v1218
    %v3250 = vunpack.c.h.b16 %v1218
    %v3251 = vunpack.c.l.b16 %v1219
    %v3252 = vunpack.c.h.b16 %v1219
    %v3253 = vunpack.c.l.b16 %v1220
    %v3254 = vunpack.c.h.b16 %v1220
    %v3255 = vunpack.c.l.b16 %v1221
    %v3256 = vunpack.c.h.b16 %v1221
    %v3257 = vunpack.c.l.b16 %v1222
    %v3258 = vunpack.c.h.b16 %v1222
    %v3259 = vunpack.c.l.b16 %v1223
    %v3260 = vunpack.c.h.b16 %v1223
    %v3261 = vunpack.c.l.b16 %v1224
    %v3262 = vunpack.c.h.b16 %v1224
    %v3263 = vunpack.c.l.b16 %v1225
    %v3264 = vunpack.c.h.b16 %v1225
    %v3265 = vunpack.c.l.b16 %v1226
    %v3266 = vunpack.c.h.b16 %v1226
    %v3267 = vunpack.c.l.b16 %v1227
    %v3268 = vunpack.c.h.b16 %v1227
    %v3269 = vunpack.c.l.b16 %v1228
    %v3270 = vunpack.c.h.b16 %v1228
    %v3271 = vunpack.c.l.b16 %v1229
    %v3272 = vunpack.c.h.b16 %v1229
    %v3273 = vunpack.c.l.b16 %v1230
    %v3274 = vunpack.c.h.b16 %v1230
    %v3275 = vunpack.c.l.b16 %v1231
    %v3276 = vunpack.c.h.b16 %v1231
    %v3277 = vunpack.c.l.b16 %v1232
    %v3278 = vunpack.c.h.b16 %v1232
    %v3279 = vunpack.c.l.b16 %v1233
    %v3280 = vunpack.c.h.b16 %v1233
    %v3281 = vunpack.c.l.b16 %v1234
    %v3282 = vunpack.c.h.b16 %v1234
    %v3283 = vunpack.c.l.b16 %v1235
    %v3284 = vunpack.c.h.b16 %v1235
    %v3285 = vunpack.c.l.b16 %v1236
    %v3286 = vunpack.c.h.b16 %v1236
    %v3287 = vunpack.c.l.b16 %v1237
    %v3288 = vunpack.c.h.b16 %v1237
    %v3289 = vunpack.c.l.b16 %v1238
    %v3290 = vunpack.c.h.b16 %v1238
    %v3291 = vunpack.c.l.b16 %v1239
    %v3292 = vunpack.c.h.b16 %v1239
    %v3293 = vunpack.c.l.b16 %v1240
    %v3294 = vunpack.c.h.b16 %v1240
    %v3295 = vunpack.c.l.b16 %v1241
    %v3296 = vunpack.c.h.b16 %v1241
    %v3297 = vunpack.c.l.b16 %v1242
    %v3298 = vunpack.c.h.b16 %v1242
    %v3299 = vunpack.c.l.b16 %v1243
    %v3300 = vunpack.c.h.b16 %v1243
    %v3301 = vunpack.c.l.b16 %v1244
    %v3302 = vunpack.c.h.b16 %v1244
    %v3303 = vunpack.c.l.b16 %v1245
    %v3304 = vunpack.c.h.b16 %v1245
    %v3305 = vunpack.c.l.b16 %v1246
    %v3306 = vunpack.c.h.b16 %v1246
    %v3307 = vunpack.c.l.b16 %v1247
    %v3308 = vunpack.c.h.b16 %v1247
    %v3309 = vunpack.c.l.b16 %v1248
    %v3310 = vunpack.c.h.b16 %v1248
    %v3311 = vunpack.c.l.b16 %v1249
    %v3312 = vunpack.c.h.b16 %v1249
    %v3313 = vunpack.c.l.b16 %v1250
    %v3314 = vunpack.c.h.b16 %v1250
    %v3315 = vunpack.c.l.b16 %v1251
    %v3316 = vunpack.c.h.b16 %v1251
    %v3317 = vunpack.c.l.b16 %v1252
    %v3318 = vunpack.c.h.b16 %v1252
    %v3319 = vunpack.c.l.b16 %v1253
    %v3320 = vunpack.c.h.b16 %v1253
    %v3321 = vunpack.c.l.b16 %v1254
    %v3322 = vunpack.c.h.b16 %v1254
    %v3323 = vunpack.c.l.b16 %v1255
    %v3324 = vunpack.c.h.b16 %v1255
    %v3325 = vunpack.c.l.b16 %v1256
    %v3326 = vunpack.c.h.b16 %v1256
    %v3327 = vunpack.c.l.b16 %v1257
    %v3328 = vunpack.c.h.b16 %v1257
    %v3329 = vunpack.c.l.b16 %v1258
    %v3330 = vunpack.c.h.b16 %v1258
    %v3331 = vunpack.c.l.b16 %v1259
    %v3332 = vunpack.c.h.b16 %v1259
    %v3333 = vunpack.c.l.b16 %v1260
    %v3334 = vunpack.c.h.b16 %v1260
    %v3335 = vunpack.c.l.b16 %v1261
    %v3336 = vunpack.c.h.b16 %v1261
    %v3337 = vunpack.c.l.b16 %v1262
    %v3338 = vunpack.c.h.b16 %v1262
    %v3339 = vunpack.c.l.b16 %v1263
    %v3340 = vunpack.c.h.b16 %v1263
    %v3341 = vunpack.c.l.b16 %v1264
    %v3342 = vunpack.c.h.b16 %v1264
    %v3343 = vunpack.c.l.b16 %v1265
    %v3344 = vunpack.c.h.b16 %v1265
    %v3345 = vunpack.c.l.b16 %v1266
    %v3346 = vunpack.c.h.b16 %v1266
    %v3347 = vunpack.c.l.b16 %v1267
    %v3348 = vunpack.c.h.b16 %v1267
    %v3349 = vunpack.c.l.b16 %v1268
    %v3350 = vunpack.c.h.b16 %v1268
    %v3351 = vunpack.c.l.b16 %v1269
    %v3352 = vunpack.c.h.b16 %v1269
    %v3353 = vunpack.c.l.b16 %v1270
    %v3354 = vunpack.c.h.b16 %v1270
    %v3355 = vunpack.c.l.b16 %v1271
    %v3356 = vunpack.c.h.b16 %v1271
    %v3357 = vunpack.c.l.b16 %v1272
    %v3358 = vunpack.c.h.b16 %v1272
    %v3359 = vunpack.c.l.b16 %v1273
    %v3360 = vunpack.c.h.b16 %v1273
    %v3361 = vunpack.c.l.b16 %v1274
    %v3362 = vunpack.c.h.b16 %v1274
    %v3363 = vunpack.c.l.b16 %v1275
    %v3364 = vunpack.c.h.b16 %v1275
    %v3365 = vunpack.c.l.b16 %v1276
    %v3366 = vunpack.c.h.b16 %v1276
    %v3367 = vunpack.c.l.b16 %v1277
    %v3368 = vunpack.c.h.b16 %v1277
    %v3369 = vunpack.c.l.b16 %v1278
    %v3370 = vunpack.c.h.b16 %v1278
    %v3371 = vunpack.c.l.b16 %v1279
    %v3372 = vunpack.c.h.b16 %v1279
    %v3373 = vunpack.c.l.b16 %v1280
    %v3374 = vunpack.c.h.b16 %v1280
    %v3375 = vunpack.c.l.b16 %v1281
    %v3376 = vunpack.c.h.b16 %v1281
    %v3377 = vunpack.c.l.b16 %v1282
    %v3378 = vunpack.c.h.b16 %v1282
    %v3379 = vunpack.c.l.b16 %v1283
    %v3380 = vunpack.c.h.b16 %v1283
    %v3381 = vunpack.c.l.b16 %v1284
    %v3382 = vunpack.c.h.b16 %v1284
    %v3383 = vunpack.c.l.b16 %v1285
    %v3384 = vunpack.c.h.b16 %v1285
    %v3385 = vunpack.c.l.b16 %v1286
    %v3386 = vunpack.c.h.b16 %v1286
    %v3387 = vunpack.c.l.b16 %v1287
    %v3388 = vunpack.c.h.b16 %v1287
    %v3389 = vunpack.c.l.b16 %v1288
    %v3390 = vunpack.c.h.b16 %v1288
    %v3391 = vunpack.c.l.b16 %v1289
    %v3392 = vunpack.c.h.b16 %v1289
    %v3393 = vunpack.c.l.b16 %v1290
    %v3394 = vunpack.c.h.b16 %v1290
    %v3395 = vunpack.c.l.b16 %v1291
    %v3396 = vunpack.c.h.b16 %v1291
    %v3397 = vunpack.c.l.b16 %v1292
    %v3398 = vunpack.c.h.b16 %v1292
    %v3399 = vunpack.c.l.b16 %v1293
    %v3400 = vunpack.c.h.b16 %v1293
    %v3401 = vunpack.c.l.b16 %v1294
    %v3402 = vunpack.c.h.b16 %v1294
    %v3403 = vunpack.c.l.b16 %v1295
    %v3404 = vunpack.c.h.b16 %v1295
    %v3405 = vunpack.c.l.b16 %v1296
    %v3406 = vunpack.c.h.b16 %v1296
    %v3407 = vunpack.c.l.b16 %v1297
    %v3408 = vunpack.c.h.b16 %v1297
    %v3409 = vunpack.c.l.b16 %v1298
    %v3410 = vunpack.c.h.b16 %v1298
    %v3411 = vunpack.c.l.b16 %v1299
    %v3412 = vunpack.c.h.b16 %v1299
    %v3413 = vunpack.c.l.b16 %v1300
    %v3414 = vunpack.c.h.b16 %v1300
    %v3415 = vunpack.c.l.b16 %v1301
    %v3416 = vunpack.c.h.b16 %v1301
    %v3417 = vunpack.c.l.b16 %v1302
    %v3418 = vunpack.c.h.b16 %v1302
    %v3419 = vunpack.c.l.b16 %v1303
    %v3420 = vunpack.c.h.b16 %v1303
    %v3421 = vunpack.c.l.b16 %v1304
    %v3422 = vunpack.c.h.b16 %v1304
    %v3423 = vunpack.c.l.b16 %v1305
    %v3424 = vunpack.c.h.b16 %v1305
    %v3425 = vunpack.c.l.b16 %v1306
    %v3426 = vunpack.c.h.b16 %v1306
    %v3427 = vunpack.c.l.b16 %v1307
    %v3428 = vunpack.c.h.b16 %v1307
    %v3429 = vunpack.c.l.b16 %v1308
    %v3430 = vunpack.c.h.b16 %v1308
    %v3431 = vunpack.c.l.b16 %v1309
    %v3432 = vunpack.c.h.b16 %v1309
    %v3433 = vunpack.c.l.b16 %v1310
    %v3434 = vunpack.c.h.b16 %v1310
    %v3435 = vunpack.c.l.b16 %v1311
    %v3436 = vunpack.c.h.b16 %v1311
    %v3437 = vunpack.c.l.b16 %v1312
    %v3438 = vunpack.c.h.b16 %v1312
    %v3439 = vunpack.c.l.b16 %v1313
    %v3440 = vunpack.c.h.b16 %v1313
    %v3441 = vunpack.c.l.b16 %v1314
    %v3442 = vunpack.c.h.b16 %v1314
    %v3443 = vunpack.c.l.b16 %v1315
    %v3444 = vunpack.c.h.b16 %v1315
    %v3445 = vunpack.c.l.b16 %v1316
    %v3446 = vunpack.c.h.b16 %v1316
    %v3447 = vunpack.c.l.b16 %v1317
    %v3448 = vunpack.c.h.b16 %v1317
    %v3449 = vunpack.c.l.b16 %v1318
    %v3450 = vunpack.c.h.b16 %v1318
    %v3451 = vunpack.c.l.b16 %v1319
    %v3452 = vunpack.c.h.b16 %v1319
    %v3453 = vunpack.c.l.b16 %v1320
    %v3454 = vunpack.c.h.b16 %v1320
    %v3455 = vunpack.c.l.b16 %v1321
    %v3456 = vunpack.c.h.b16 %v1321
    %v3457 = vunpack.c.l.b16 %v1322
    %v3458 = vunpack.c.h.b16 %v1322
    %v3459 = vunpack.c.l.b16 %v1323
    %v3460 = vunpack.c.h.b16 %v1323
    %v3461 = vunpack.c.l.b16 %v1324
    %v3462 = vunpack.c.h.b16 %v1324
    %v3463 = vunpack.c.l.b16 %v1325
    %v3464 = vunpack.c.h.b16 %v1325
    %v3465 = vunpack.c.l.b16 %v1326
    %v3466 = vunpack.c.h.b16 %v1326
    %v3467 = vunpack.c.l.b16 %v1327
    %v3468 = vunpack.c.h.b16 %v1327
    %v3469 = vunpack.c.l.b16 %v1328
    %v3470 = vunpack.c.h.b16 %v1328
    %v3471 = vunpack.c.l.b16 %v1329
    %v3472 = vunpack.c.h.b16 %v1329
    %v3473 = vunpack.c.l.b16 %v1330
    %v3474 = vunpack.c.h.b16 %v1330
    %v3475 = vunpack.c.l.b16 %v1331
    %v3476 = vunpack.c.h.b16 %v1331
    %v3477 = vunpack.c.l.b16 %v1332
    %v3478 = vunpack.c.h.b16 %v1332
    %v3479 = vunpack.c.l.b16 %v1333
    %v3480 = vunpack.c.h.b16 %v1333
    %v3481 = vunpack.c.l.b16 %v1334
    %v3482 = vunpack.c.h.b16 %v1334
    %v3483 = vunpack.c.l.b16 %v1335
    %v3484 = vunpack.c.h.b16 %v1335
    %v3485 = vunpack.c.l.b16 %v1336
    %v3486 = vunpack.c.h.b16 %v1336
    %v3487 = vunpack.c.l.b16 %v1337
    %v3488 = vunpack.c.h.b16 %v1337
    %v3489 = vunpack.c.l.b16 %v1338
    %v3490 = vunpack.c.h.b16 %v1338
    %v3491 = vunpack.c.l.b16 %v1339
    %v3492 = vunpack.c.h.b16 %v1339
    %v3493 = vunpack.c.l.b16 %v1340
    %v3494 = vunpack.c.h.b16 %v1340
    %v3495 = vunpack.c.l.b16 %v1341
    %v3496 = vunpack.c.h.b16 %v1341
    %v3497 = vunpack.c.l.b16 %v1342
    %v3498 = vunpack.c.h.b16 %v1342
    %v3499 = vunpack.c.l.b16 %v1343
    %v3500 = vunpack.c.h.b16 %v1343
    %v3501 = vunpack.c.l.b16 %v1344
    %v3502 = vunpack.c.h.b16 %v1344
    %v3503 = vunpack.c.l.b16 %v1345
    %v3504 = vunpack.c.h.b16 %v1345
    %v3505 = vunpack.c.l.b16 %v1346
    %v3506 = vunpack.c.h.b16 %v1346
    %v3507 = vunpack.c.l.b16 %v1347
    %v3508 = vunpack.c.h.b16 %v1347
    %v3509 = vunpack.c.l.b16 %v1348
    %v3510 = vunpack.c.h.b16 %v1348
    %v3511 = vunpack.c.l.b16 %v1349
    %v3512 = vunpack.c.h.b16 %v1349
    %v3513 = vunpack.c.l.b16 %v1350
    %v3514 = vunpack.c.h.b16 %v1350
    %v3515 = vunpack.c.l.b16 %v1351
    %v3516 = vunpack.c.h.b16 %v1351
    %v3517 = vunpack.c.l.b16 %v1352
    %v3518 = vunpack.c.h.b16 %v1352
    %v3519 = vunpack.c.l.b16 %v1353
    %v3520 = vunpack.c.h.b16 %v1353
    %v3521 = vunpack.c.l.b16 %v1354
    %v3522 = vunpack.c.h.b16 %v1354
    %v3523 = vunpack.c.l.b16 %v1355
    %v3524 = vunpack.c.h.b16 %v1355
    %v3525 = vunpack.c.l.b16 %v1356
    %v3526 = vunpack.c.h.b16 %v1356
    %v3527 = vunpack.c.l.b16 %v1357
    %v3528 = vunpack.c.h.b16 %v1357
    %v3529 = vunpack.c.l.b16 %v1358
    %v3530 = vunpack.c.h.b16 %v1358
    %v3531 = vunpack.c.l.b16 %v1359
    %v3532 = vunpack.c.h.b16 %v1359
    %v3533 = vunpack.c.l.b16 %v1360
    %v3534 = vunpack.c.h.b16 %v1360
    %v3535 = vunpack.c.l.b16 %v1361
    %v3536 = vunpack.c.h.b16 %v1361
    %v3537 = vunpack.c.l.b16 %v1362
    %v3538 = vunpack.c.h.b16 %v1362
    %v3539 = vunpack.c.l.b16 %v1363
    %v3540 = vunpack.c.h.b16 %v1363
    %v3541 = vunpack.c.l.b16 %v1364
    %v3542 = vunpack.c.h.b16 %v1364
    %v3543 = vunpack.c.l.b16 %v1365
    %v3544 = vunpack.c.h.b16 %v1365
    %v3545 = vunpack.c.l.b16 %v1366
    %v3546 = vunpack.c.h.b16 %v1366
    %v3547 = vunpack.c.l.b16 %v1367
    %v3548 = vunpack.c.h.b16 %v1367
    %v3549 = vunpack.c.l.b16 %v1368
    %v3550 = vunpack.c.h.b16 %v1368
    %v3551 = vunpack.c.l.b16 %v1369
    %v3552 = vunpack.c.h.b16 %v1369
    %v3553 = vunpack.c.l.b16 %v1370
    %v3554 = vunpack.c.h.b16 %v1370
    %v3555 = vunpack.c.l.b16 %v1371
    %v3556 = vunpack.c.h.b16 %v1371
    %v3557 = vunpack.c.l.b16 %v1372
    %v3558 = vunpack.c.h.b16 %v1372
    %v3559 = vunpack.c.l.b16 %v1373
    %v3560 = vunpack.c.h.b16 %v1373
    %v3561 = vunpack.c.l.b16 %v1374
    %v3562 = vunpack.c.h.b16 %v1374
    %v3563 = vunpack.c.l.b16 %v1375
    %v3564 = vunpack.c.h.b16 %v1375
    %v3565 = vunpack.c.l.b16 %v1376
    %v3566 = vunpack.c.h.b16 %v1376
    %v3567 = vunpack.c.l.b16 %v1377
    %v3568 = vunpack.c.h.b16 %v1377
    %v3569 = vunpack.c.l.b16 %v1378
    %v3570 = vunpack.c.h.b16 %v1378
    %v3571 = vunpack.c.l.b16 %v1379
    %v3572 = vunpack.c.h.b16 %v1379
    %v3573 = vunpack.c.l.b16 %v1380
    %v3574 = vunpack.c.h.b16 %v1380
    %v3575 = vunpack.c.l.b16 %v1381
    %v3576 = vunpack.c.h.b16 %v1381
    %v3577 = vunpack.c.l.b16 %v1382
    %v3578 = vunpack.c.h.b16 %v1382
    %v3579 = vunpack.c.l.b16 %v1383
    %v3580 = vunpack.c.h.b16 %v1383
    %v3581 = vunpack.c.l.b16 %v1384
    %v3582 = vunpack.c.h.b16 %v1384
    %v3583 = vunpack.c.l.b16 %v1385
    %v3584 = vunpack.c.h.b16 %v1385
    %v3585 = vunpack.c.l.b16 %v1386
    %v3586 = vunpack.c.h.b16 %v1386
    %v3587 = vunpack.c.l.b16 %v1387
    %v3588 = vunpack.c.h.b16 %v1387
    %v3589 = vunpack.c.l.b16 %v1388
    %v3590 = vunpack.c.h.b16 %v1388
    %v3591 = vunpack.c.l.b16 %v1389
    %v3592 = vunpack.c.h.b16 %v1389
    %v3593 = vunpack.c.l.b16 %v1390
    %v3594 = vunpack.c.h.b16 %v1390
    %v3595 = vunpack.c.l.b16 %v1391
    %v3596 = vunpack.c.h.b16 %v1391
    %v3597 = vunpack.c.l.b16 %v1392
    %v3598 = vunpack.c.h.b16 %v1392
    %v3599 = vunpack.c.l.b16 %v1393
    %v3600 = vunpack.c.h.b16 %v1393
    %v3601 = vunpack.c.l.b16 %v1394
    %v3602 = vunpack.c.h.b16 %v1394
    %v3603 = vunpack.c.l.b16 %v1395
    %v3604 = vunpack.c.h.b16 %v1395
    %v3605 = vunpack.c.l.b16 %v1396
    %v3606 = vunpack.c.h.b16 %v1396
    %v3607 = vunpack.c.l.b16 %v1397
    %v3608 = vunpack.c.h.b16 %v1397
    %v3609 = vunpack.c.l.b16 %v1398
    %v3610 = vunpack.c.h.b16 %v1398
    %v3611 = vunpack.c.l.b16 %v1399
    %v3612 = vunpack.c.h.b16 %v1399
    %v3613 = vunpack.c.l.b16 %v1400
    %v3614 = vunpack.c.h.b16 %v1400
    %v3615 = vunpack.c.l.b16 %v1401
    %v3616 = vunpack.c.h.b16 %v1401
    %v3617 = vunpack.c.l.b16 %v1402
    %v3618 = vunpack.c.h.b16 %v1402
    %v3619 = vunpack.c.l.b16 %v1403
    %v3620 = vunpack.c.h.b16 %v1403
    %v3621 = vunpack.c.l.b16 %v1404
    %v3622 = vunpack.c.h.b16 %v1404
    %v3623 = vunpack.c.l.b16 %v1405
    %v3624 = vunpack.c.h.b16 %v1405
    %v3625 = vunpack.c.l.b16 %v1406
    %v3626 = vunpack.c.h.b16 %v1406
    %v3627 = vunpack.c.l.b16 %v1407
    %v3628 = vunpack.c.h.b16 %v1407
    %v3629 = vunpack.c.l.b16 %v1408
    %v3630 = vunpack.c.h.b16 %v1408
    %v3631 = vunpack.c.l.b16 %v1409
    %v3632 = vunpack.c.h.b16 %v1409
    %v3633 = vunpack.c.l.b16 %v1410
    %v3634 = vunpack.c.h.b16 %v1410
    %v3635 = vunpack.c.l.b16 %v1411
    %v3636 = vunpack.c.h.b16 %v1411
    %v3637 = vunpack.c.l.b16 %v1412
    %v3638 = vunpack.c.h.b16 %v1412
    %v3639 = vunpack.c.l.b16 %v1413
    %v3640 = vunpack.c.h.b16 %v1413
    %v3641 = vunpack.c.l.b16 %v1414
    %v3642 = vunpack.c.h.b16 %v1414
    %v3643 = vunpack.c.l.b16 %v1415
    %v3644 = vunpack.c.h.b16 %v1415
    %v3645 = vunpack.c.l.b16 %v1416
    %v3646 = vunpack.c.h.b16 %v1416
    %v3647 = vunpack.c.l.b16 %v1417
    %v3648 = vunpack.c.h.b16 %v1417
    %v3649 = vunpack.c.l.b16 %v1418
    %v3650 = vunpack.c.h.b16 %v1418
    %v3651 = vunpack.c.l.b16 %v1419
    %v3652 = vunpack.c.h.b16 %v1419
    %v3653 = vunpack.c.l.b16 %v1420
    %v3654 = vunpack.c.h.b16 %v1420
    %v3655 = vunpack.c.l.b16 %v1421
    %v3656 = vunpack.c.h.b16 %v1421
    %v3657 = vunpack.c.l.b16 %v1422
    %v3658 = vunpack.c.h.b16 %v1422
    %v3659 = vunpack.c.l.b16 %v1423
    %v3660 = vunpack.c.h.b16 %v1423
    %v3661 = vunpack.c.l.b16 %v1424
    %v3662 = vunpack.c.h.b16 %v1424
    %v3663 = vunpack.c.l.b16 %v1425
    %v3664 = vunpack.c.h.b16 %v1425
    %v3665 = vunpack.c.l.b16 %v1426
    %v3666 = vunpack.c.h.b16 %v1426
    %v3667 = vunpack.c.l.b16 %v1427
    %v3668 = vunpack.c.h.b16 %v1427
    %v3669 = vunpack.c.l.b16 %v1428
    %v3670 = vunpack.c.h.b16 %v1428
    %v3671 = vunpack.c.l.b16 %v1429
    %v3672 = vunpack.c.h.b16 %v1429
    %v3673 = vunpack.c.l.b16 %v1430
    %v3674 = vunpack.c.h.b16 %v1430
    %v3675 = vunpack.c.l.b16 %v1431
    %v3676 = vunpack.c.h.b16 %v1431
    %v3677 = vunpack.c.l.b16 %v1432
    %v3678 = vunpack.c.h.b16 %v1432
    %v3679 = vunpack.c.l.b16 %v1433
    %v3680 = vunpack.c.h.b16 %v1433
    %v3681 = vunpack.c.l.b16 %v1434
    %v3682 = vunpack.c.h.b16 %v1434
    %v3683 = vunpack.c.l.b16 %v1435
    %v3684 = vunpack.c.h.b16 %v1435
    %v3685 = vunpack.c.l.b16 %v1436
    %v3686 = vunpack.c.h.b16 %v1436
    %v3687 = vunpack.c.l.b16 %v1437
    %v3688 = vunpack.c.h.b16 %v1437
    %v3689 = vunpack.c.l.b16 %v1438
    %v3690 = vunpack.c.h.b16 %v1438
    %v3691 = vunpack.c.l.b16 %v1439
    %v3692 = vunpack.c.h.b16 %v1439
    %v3693 = vunpack.c.l.b16 %v1440
    %v3694 = vunpack.c.h.b16 %v1440
    %v3695 = vunpack.c.l.b16 %v1441
    %v3696 = vunpack.c.h.b16 %v1441
    %v3697 = vunpack.c.l.b16 %v1442
    %v3698 = vunpack.c.h.b16 %v1442
    %v3699 = vunpack.c.l.b16 %v1443
    %v3700 = vunpack.c.h.b16 %v1443
    %v3701 = vunpack.c.l.b16 %v1444
    %v3702 = vunpack.c.h.b16 %v1444
    %v3703 = vunpack.c.l.b16 %v1445
    %v3704 = vunpack.c.h.b16 %v1445
    %v3705 = vunpack.c.l.b16 %v1446
    %v3706 = vunpack.c.h.b16 %v1446
    %v3707 = vunpack.c.l.b16 %v1447
    %v3708 = vunpack.c.h.b16 %v1447
    %v3709 = vunpack.c.l.b16 %v1448
    %v3710 = vunpack.c.h.b16 %v1448
    %v3711 = vunpack.c.l.b16 %v1449
    %v3712 = vunpack.c.h.b16 %v1449
    %v3713 = vunpack.c.l.b16 %v1450
    %v3714 = vunpack.c.h.b16 %v1450
    %v3715 = vunpack.c.l.b16 %v1451
    %v3716 = vunpack.c.h.b16 %v1451
    %v3717 = vunpack.c.l.b16 %v1452
    %v3718 = vunpack.c.h.b16 %v1452
    %v3719 = vunpack.c.l.b16 %v1453
    %v3720 = vunpack.c.h.b16 %v1453
    %v3721 = vunpack.c.l.b16 %v1454
    %v3722 = vunpack.c.h.b16 %v1454
    %v3723 = vunpack.c.l.b16 %v1455
    %v3724 = vunpack.c.h.b16 %v1455
    %v3725 = vunpack.c.l.b16 %v1456
    %v3726 = vunpack.c.h.b16 %v1456
    %v3727 = vunpack.c.l.b16 %v1457
    %v3728 = vunpack.c.h.b16 %v1457
    %v3729 = vunpack.c.l.b16 %v1458
    %v3730 = vunpack.c.h.b16 %v1458
    %v3731 = vunpack.c.l.b16 %v1459
    %v3732 = vunpack.c.h.b16 %v1459
    %v3733 = vunpack.c.l.b16 %v1460
    %v3734 = vunpack.c.h.b16 %v1460
    %v3735 = vunpack.c.l.b16 %v1461
    %v3736 = vunpack.c.h.b16 %v1461
    %v3737 = vunpack.c.l.b16 %v1462
    %v3738 = vunpack.c.h.b16 %v1462
    %v3739 = vunpack.c.l.b16 %v1463
    %v3740 = vunpack.c.h.b16 %v1463
    %v3741 = vunpack.c.l.b16 %v1464
    %v3742 = vunpack.c.h.b16 %v1464
    %v3743 = vunpack.c.l.b16 %v1465
    %v3744 = vunpack.c.h.b16 %v1465
    %v3745 = vunpack.c.l.b16 %v1466
    %v3746 = vunpack.c.h.b16 %v1466
    %v3747 = vunpack.c.l.b16 %v1467
    %v3748 = vunpack.c.h.b16 %v1467
    %v3749 = vunpack.c.l.b16 %v1468
    %v3750 = vunpack.c.h.b16 %v1468
    %v3751 = vunpack.c.l.b16 %v1469
    %v3752 = vunpack.c.h.b16 %v1469
    %v3753 = vunpack.c.l.b16 %v1470
    %v3754 = vunpack.c.h.b16 %v1470
    %v3755 = vunpack.c.l.b16 %v1471
    %v3756 = vunpack.c.h.b16 %v1471
    %v3757 = vunpack.c.l.b16 %v1472
    %v3758 = vunpack.c.h.b16 %v1472
    %v3759 = vunpack.c.l.b16 %v1473
    %v3760 = vunpack.c.h.b16 %v1473
    %v3761 = vunpack.c.l.b16 %v1474
    %v3762 = vunpack.c.h.b16 %v1474
    %v3763 = vunpack.c.l.b16 %v1475
    %v3764 = vunpack.c.h.b16 %v1475
    %v3765 = vunpack.c.l.b16 %v1476
    %v3766 = vunpack.c.h.b16 %v1476
    %v3767 = vunpack.c.l.b16 %v1477
    %v3768 = vunpack.c.h.b16 %v1477
    %v3769 = vunpack.c.l.b16 %v1478
    %v3770 = vunpack.c.h.b16 %v1478
    %v3771 = vunpack.c.l.b16 %v1479
    %v3772 = vunpack.c.h.b16 %v1479
    %v3773 = vunpack.c.l.b16 %v1480
    %v3774 = vunpack.c.h.b16 %v1480
    %v3775 = vunpack.c.l.b16 %v1481
    %v3776 = vunpack.c.h.b16 %v1481
    %v3777 = vunpack.c.l.b16 %v1482
    %v3778 = vunpack.c.h.b16 %v1482
    %v3779 = vunpack.c.l.b16 %v1483
    %v3780 = vunpack.c.h.b16 %v1483
    %v3781 = vunpack.c.l.b16 %v1484
    %v3782 = vunpack.c.h.b16 %v1484
    %v3783 = vunpack.c.l.b16 %v1485
    %v3784 = vunpack.c.h.b16 %v1485
    %v3785 = vunpack.c.l.b16 %v1486
    %v3786 = vunpack.c.h.b16 %v1486
    %v3787 = vunpack.c.l.b16 %v1487
    %v3788 = vunpack.c.h.b16 %v1487
    %v3789 = vunpack.c.l.b16 %v1488
    %v3790 = vunpack.c.h.b16 %v1488
    %v3791 = vunpack.c.l.b16 %v1489
    %v3792 = vunpack.c.h.b16 %v1489
    %v3793 = vunpack.c.l.b16 %v1490
    %v3794 = vunpack.c.h.b16 %v1490
    %v3795 = vunpack.c.l.b16 %v1491
    %v3796 = vunpack.c.h.b16 %v1491
    %v3797 = vunpack.c.l.b16 %v1492
    %v3798 = vunpack.c.h.b16 %v1492
    %v3799 = vunpack.c.l.b16 %v1493
    %v3800 = vunpack.c.h.b16 %v1493
    %v3801 = vunpack.c.l.b16 %v1494
    %v3802 = vunpack.c.h.b16 %v1494
    %v3803 = vunpack.c.l.b16 %v1495
    %v3804 = vunpack.c.h.b16 %v1495
    %v3805 = vunpack.c.l.b16 %v1496
    %v3806 = vunpack.c.h.b16 %v1496
    %v3807 = vunpack.c.l.b16 %v1497
    %v3808 = vunpack.c.h.b16 %v1497
    %v3809 = vunpack.c.l.b16 %v1498
    %v3810 = vunpack.c.h.b16 %v1498
    %v3811 = vunpack.c.l.b16 %v1499
    %v3812 = vunpack.c.h.b16 %v1499
    %v3813 = vunpack.c.l.b16 %v1500
    %v3814 = vunpack.c.h.b16 %v1500
    %v3815 = vunpack.c.l.b16 %v1501
    %v3816 = vunpack.c.h.b16 %v1501
    %v3817 = vunpack.c.l.b16 %v1502
    %v3818 = vunpack.c.h.b16 %v1502
    %v3819 = vunpack.c.l.b16 %v1503
    %v3820 = vunpack.c.h.b16 %v1503
    %v3821 = vunpack.c.l.b16 %v1504
    %v3822 = vunpack.c.h.b16 %v1504
    %v3823 = vunpack.c.l.b16 %v1505
    %v3824 = vunpack.c.h.b16 %v1505
    %v3825 = vunpack.c.l.b16 %v1506
    %v3826 = vunpack.c.h.b16 %v1506
    %v3827 = vunpack.c.l.b16 %v1507
    %v3828 = vunpack.c.h.b16 %v1507
    %v3829 = vunpack.c.l.b16 %v1508
    %v3830 = vunpack.c.h.b16 %v1508
    %v3831 = vunpack.c.l.b16 %v1509
    %v3832 = vunpack.c.h.b16 %v1509
    %v3833 = vunpack.c.l.b16 %v1510
    %v3834 = vunpack.c.h.b16 %v1510
    %v3835 = vunpack.c.l.b16 %v1511
    %v3836 = vunpack.c.h.b16 %v1511
    %v3837 = vunpack.c.l.b16 %v1512
    %v3838 = vunpack.c.h.b16 %v1512
    %v3839 = vunpack.c.l.b16 %v1513
    %v3840 = vunpack.c.h.b16 %v1513
    %v3841 = vunpack.c.l.b16 %v1514
    %v3842 = vunpack.c.h.b16 %v1514
    %v3843 = vunpack.c.l.b16 %v1515
    %v3844 = vunpack.c.h.b16 %v1515
    %v3845 = vunpack.c.l.b16 %v1516
    %v3846 = vunpack.c.h.b16 %v1516
    %v3847 = vunpack.c.l.b16 %v1517
    %v3848 = vunpack.c.h.b16 %v1517
    %v3849 = vunpack.c.l.b16 %v1518
    %v3850 = vunpack.c.h.b16 %v1518
    %v3851 = vunpack.c.l.b16 %v1519
    %v3852 = vunpack.c.h.b16 %v1519
    %v3853 = vunpack.c.l.b16 %v1520
    %v3854 = vunpack.c.h.b16 %v1520
    %v3855 = vunpack.c.l.b16 %v1521
    %v3856 = vunpack.c.h.b16 %v1521
    %v3857 = vunpack.c.l.b16 %v1522
    %v3858 = vunpack.c.h.b16 %v1522
    %v3859 = vunpack.c.l.b16 %v1523
    %v3860 = vunpack.c.h.b16 %v1523
    %v3861 = vunpack.c.l.b16 %v1524
    %v3862 = vunpack.c.h.b16 %v1524
    %v3863 = vunpack.c.l.b16 %v1525
    %v3864 = vunpack.c.h.b16 %v1525
    %v3865 = vunpack.c.l.b16 %v1526
    %v3866 = vunpack.c.h.b16 %v1526
    %v3867 = vunpack.c.l.b16 %v1527
    %v3868 = vunpack.c.h.b16 %v1527
    %v3869 = vunpack.c.l.b16 %v1528
    %v3870 = vunpack.c.h.b16 %v1528
    %v3871 = vunpack.c.l.b16 %v1529
    %v3872 = vunpack.c.h.b16 %v1529
    %v3873 = vunpack.c.l.b16 %v1530
    %v3874 = vunpack.c.h.b16 %v1530
    %v3875 = vunpack.c.l.b16 %v1531
    %v3876 = vunpack.c.h.b16 %v1531
    %v3877 = vunpack.c.l.b16 %v1532
    %v3878 = vunpack.c.h.b16 %v1532
    %v3879 = vunpack.c.l.b16 %v1533
    %v3880 = vunpack.c.h.b16 %v1533
    %v3881 = vunpack.c.l.b16 %v1534
    %v3882 = vunpack.c.h.b16 %v1534
    %v3883 = vunpack.c.l.b16 %v1535
    %v3884 = vunpack.c.h.b16 %v1535
    %v3885 = vunpack.c.l.b16 %v1536
    %v3886 = vunpack.c.h.b16 %v1536
    %v3887 = vunpack.c.l.b16 %v1537
    %v3888 = vunpack.c.h.b16 %v1537
    %v3889 = vunpack.c.l.b16 %v1538
    %v3890 = vunpack.c.h.b16 %v1538
    %v3891 = vunpack.c.l.b16 %v1539
    %v3892 = vunpack.c.h.b16 %v1539
    %v3893 = vunpack.c.l.b16 %v1540
    %v3894 = vunpack.c.h.b16 %v1540
    %v3895 = vunpack.c.l.b16 %v1541
    %v3896 = vunpack.c.h.b16 %v1541
    %v3897 = vunpack.c.l.b16 %v1542
    %v3898 = vunpack.c.h.b16 %v1542
    %v3899 = vunpack.c.l.b16 %v1543
    %v3900 = vunpack.c.h.b16 %v1543
    %v3901 = vunpack.c.l.b16 %v1544
    %v3902 = vunpack.c.h.b16 %v1544
    %v3903 = vunpack.c.l.b16 %v1545
    %v3904 = vunpack.c.h.b16 %v1545
    %v3905 = vunpack.c.l.b16 %v1546
    %v3906 = vunpack.c.h.b16 %v1546
    %v3907 = vunpack.c.l.b16 %v1547
    %v3908 = vunpack.c.h.b16 %v1547
    %v3909 = vunpack.c.l.b16 %v1548
    %v3910 = vunpack.c.h.b16 %v1548
    %v3911 = vunpack.c.l.b16 %v1549
    %v3912 = vunpack.c.h.b16 %v1549
    %v3913 = vunpack.c.l.b16 %v1550
    %v3914 = vunpack.c.h.b16 %v1550
    %v3915 = vunpack.c.l.b16 %v1551
    %v3916 = vunpack.c.h.b16 %v1551
    %v3917 = vunpack.c.l.b16 %v1552
    %v3918 = vunpack.c.h.b16 %v1552
    %v3919 = vunpack.c.l.b16 %v1553
    %v3920 = vunpack.c.h.b16 %v1553
    %v3921 = vunpack.c.l.b16 %v1554
    %v3922 = vunpack.c.h.b16 %v1554
    %v3923 = vunpack.c.l.b16 %v1555
    %v3924 = vunpack.c.h.b16 %v1555
    %v3925 = vunpack.c.l.b16 %v1556
    %v3926 = vunpack.c.h.b16 %v1556
    %v3927 = vunpack.c.l.b16 %v1557
    %v3928 = vunpack.c.h.b16 %v1557
    %v3929 = vunpack.c.l.b16 %v1558
    %v3930 = vunpack.c.h.b16 %v1558
    %v3931 = vunpack.c.l.b16 %v1559
    %v3932 = vunpack.c.h.b16 %v1559
    %v3933 = vunpack.c.l.b16 %v1560
    %v3934 = vunpack.c.h.b16 %v1560
    %v3935 = vunpack.c.l.b16 %v1561
    %v3936 = vunpack.c.h.b16 %v1561
    %v3937 = vunpack.c.l.b16 %v1562
    %v3938 = vunpack.c.h.b16 %v1562
    %v3939 = vunpack.c.l.b16 %v1563
    %v3940 = vunpack.c.h.b16 %v1563
    %v3941 = vunpack.c.l.b16 %v1564
    %v3942 = vunpack.c.h.b16 %v1564
    %v3943 = vunpack.c.l.b16 %v1565
    %v3944 = vunpack.c.h.b16 %v1565
    %v3945 = vunpack.c.l.b16 %v1566
    %v3946 = vunpack.c.h.b16 %v1566
    %v3947 = vunpack.c.l.b16 %v1567
    %v3948 = vunpack.c.h.b16 %v1567
    %v3949 = vunpack.c.l.b16 %v1568
    %v3950 = vunpack.c.h.b16 %v1568
    %v3951 = vunpack.c.l.b16 %v1569
    %v3952 = vunpack.c.h.b16 %v1569
    %v3953 = vunpack.c.l.b16 %v1570
    %v3954 = vunpack.c.h.b16 %v1570
    %v3955 = vunpack.c.l.b16 %v1571
    %v3956 = vunpack.c.h.b16 %v1571
    %v3957 = vunpack.c.l.b16 %v1572
    %v3958 = vunpack.c.h.b16 %v1572
    %v3959 = vunpack.c.l.b16 %v1573
    %v3960 = vunpack.c.h.b16 %v1573
    %v3961 = vunpack.c.l.b16 %v1574
    %v3962 = vunpack.c.h.b16 %v1574
    %v3963 = vunpack.c.l.b16 %v1575
    %v3964 = vunpack.c.h.b16 %v1575
    %v3965 = vunpack.c.l.b16 %v1576
    %v3966 = vunpack.c.h.b16 %v1576
    %v3967 = vunpack.c.l.b16 %v1577
    %v3968 = vunpack.c.h.b16 %v1577
    %v3969 = vunpack.c.l.b16 %v1578
    %v3970 = vunpack.c.h.b16 %v1578
    %v3971 = vunpack.c.l.b16 %v1579
    %v3972 = vunpack.c.h.b16 %v1579
    %v3973 = vunpack.c.l.b16 %v1580
    %v3974 = vunpack.c.h.b16 %v1580
    %v3975 = vunpack.c.l.b16 %v1581
    %v3976 = vunpack.c.h.b16 %v1581
    %v3977 = vunpack.c.l.b16 %v1582
    %v3978 = vunpack.c.h.b16 %v1582
    %v3979 = vunpack.c.l.b16 %v1583
    %v3980 = vunpack.c.h.b16 %v1583
    %v3981 = vunpack.c.l.b16 %v1584
    %v3982 = vunpack.c.h.b16 %v1584
    %v3983 = vunpack.c.l.b16 %v1585
    %v3984 = vunpack.c.h.b16 %v1585
    %v3985 = vunpack.c.l.b16 %v1586
    %v3986 = vunpack.c.h.b16 %v1586
    %v3987 = vunpack.c.l.b16 %v1587
    %v3988 = vunpack.c.h.b16 %v1587
    %v3989 = vunpack.c.l.b16 %v1588
    %v3990 = vunpack.c.h.b16 %v1588
    %v3991 = vunpack.c.l.b16 %v1589
    %v3992 = vunpack.c.h.b16 %v1589
    %v3993 = vunpack.c.l.b16 %v1590
    %v3994 = vunpack.c.h.b16 %v1590
    %v3995 = vunpack.c.l.b16 %v1591
    %v3996 = vunpack.c.h.b16 %v1591
    %v3997 = vunpack.c.l.b16 %v1592
    %v3998 = vunpack.c.h.b16 %v1592
    %v3999 = vunpack.c.l.b16 %v1593
    %v4000 = vunpack.c.h.b16 %v1593
    %v4001 = vunpack.c.l.b16 %v1594
    %v4002 = vunpack.c.h.b16 %v1594
    %v4003 = vunpack.c.l.b16 %v1595
    %v4004 = vunpack.c.h.b16 %v1595
    %v4005 = vunpack.c.l.b16 %v1596
    %v4006 = vunpack.c.h.b16 %v1596
    %v4007 = vunpack.c.l.b16 %v1597
    %v4008 = vunpack.c.h.b16 %v1597
    %v4009 = vunpack.c.l.b16 %v1598
    %v4010 = vunpack.c.h.b16 %v1598
    %v4011 = vunpack.c.l.b16 %v1599
    %v4012 = vunpack.c.h.b16 %v1599
    %v4013 = vunpack.c.l.b16 %v1600
    %v4014 = vunpack.c.h.b16 %v1600
    %v4015 = vunpack.c.l.b16 %v1601
    %v4016 = vunpack.c.h.b16 %v1601
    %v4017 = vunpack.c.l.b16 %v1602
    %v4018 = vunpack.c.h.b16 %v1602
    %v4019 = vunpack.c.l.b16 %v1603
    %v4020 = vunpack.c.h.b16 %v1603
    %v4021 = vunpack.c.l.b16 %v1604
    %v4022 = vunpack.c.h.b16 %v1604
    %v4023 = vunpack.c.l.b16 %v1605
    %v4024 = vunpack.c.h.b16 %v1605
    %v4025 = vunpack.c.l.b16 %v1606
    %v4026 = vunpack.c.h.b16 %v1606
    %v4027 = vunpack.c.l.b16 %v1607
    %v4028 = vunpack.c.h.b16 %v1607
    %v4029 = vunpack.c.l.b16 %v1608
    %v4030 = vunpack.c.h.b16 %v1608
    %v4031 = vunpack.c.l.b16 %v1609
    %v4032 = vunpack.c.h.b16 %v1609
    %v4033 = vunpack.c.l.b16 %v1610
    %v4034 = vunpack.c.h.b16 %v1610
    %v4035 = vunpack.c.l.b16 %v1611
    %v4036 = vunpack.c.h.b16 %v1611
    %v4037 = vunpack.c.l.b16 %v1612
    %v4038 = vunpack.c.h.b16 %v1612
    %v4039 = vunpack.c.l.b16 %v1613
    %v4040 = vunpack.c.h.b16 %v1613
    %v4041 = vunpack.c.l.b16 %v1614
    %v4042 = vunpack.c.h.b16 %v1614
    %v4043 = vunpack.c.l.b16 %v1615
    %v4044 = vunpack.c.h.b16 %v1615
    %v4045 = vunpack.c.l.b16 %v1616
    %v4046 = vunpack.c.h.b16 %v1616
    %v4047 = vunpack.c.l.b16 %v1617
    %v4048 = vunpack.c.h.b16 %v1617
    %v4049 = vunpack.c.l.b16 %v1618
    %v4050 = vunpack.c.h.b16 %v1618
    %v4051 = vunpack.c.l.b16 %v1619
    %v4052 = vunpack.c.h.b16 %v1619
    %v4053 = vunpack.c.l.b16 %v1620
    %v4054 = vunpack.c.h.b16 %v1620
    %v4055 = vunpack.c.l.b16 %v1621
    %v4056 = vunpack.c.h.b16 %v1621
    %v4057 = vunpack.c.l.b16 %v1622
    %v4058 = vunpack.c.h.b16 %v1622
    %v4059 = vunpack.c.l.b16 %v1623
    %v4060 = vunpack.c.h.b16 %v1623
    %v4061 = vunpack.c.l.b16 %v1624
    %v4062 = vunpack.c.h.b16 %v1624
    %v4063 = vunpack.c.l.b16 %v1625
    %v4064 = vunpack.c.h.b16 %v1625
    %v4065 = vunpack.c.l.b16 %v1626
    %v4066 = vunpack.c.h.b16 %v1626
    %v4067 = vunpack.c.l.b16 %v1627
    %v4068 = vunpack.c.h.b16 %v1627
    %v4069 = vunpack.c.l.b16 %v1628
    %v4070 = vunpack.c.h.b16 %v1628
    %v4071 = vunpack.c.l.b16 %v1629
    %v4072 = vunpack.c.h.b16 %v1629
    %v4073 = vunpack.c.l.b16 %v1630
    %v4074 = vunpack.c.h.b16 %v1630
    %v4075 = vunpack.c.l.b16 %v1631
    %v4076 = vunpack.c.h.b16 %v1631
    %v4077 = vunpack.c.l.b16 %v1632
    %v4078 = vunpack.c.h.b16 %v1632
    %v4079 = vunpack.c.l.b16 %v1633
    %v4080 = vunpack.c.h.b16 %v1633
    %v4081 = vunpack.c.l.b16 %v1634
    %v4082 = vunpack.c.h.b16 %v1634
    %v4083 = vunpack.c.l.b16 %v1635
    %v4084 = vunpack.c.h.b16 %v1635
    %v4085 = vunpack.c.l.b16 %v1636
    %v4086 = vunpack.c.h.b16 %v1636
    %v4087 = vunpack.c.l.b16 %v1637
    %v4088 = vunpack.c.h.b16 %v1637
    %v4089 = vunpack.c.l.b16 %v1638
    %v4090 = vunpack.c.h.b16 %v1638
    %v4091 = vunpack.c.l.b16 %v1639
    %v4092 = vunpack.c.h.b16 %v1639
    %v4093 = vunpack.c.l.b16 %v1640
    %v4094 = vunpack.c.h.b16 %v1640
    %v4095 = vpack.c.b16 %v2505, %v2495
    %v4096 = vpack.c.b16 %v2506, %v2496
    %v4097 = vpack.c.b16 %v2507, %v2497
    %v4098 = vpack.c.b16 %v2508, %v2498
    %v4099 = vpack.c.b16 %v2509, %v2499
    %v4100 = vpack.c.b16 %v2510, %v2500
    %v4101 = vpack.c.b16 %v2511, %v2501
    %v4102 = vpack.c.b16 %v2512, %v2502
    %v4103 = vpack.c.b16 %v2513, %v2503
    %v4104 = vpack.c.b16 %v2514, %v2504
    %v4105 = vpack.c.b16 %v2525, %v2515
    %v4106 = vpack.c.b16 %v2526, %v2516
    %v4107 = vpack.c.b16 %v2527, %v2517
    %v4108 = vpack.c.b16 %v2528, %v2518
    %v4109 = vpack.c.b16 %v2529, %v2519
    %v4110 = vpack.c.b16 %v2530, %v2520
    %v4111 = vpack.c.b16 %v2531, %v2521
    %v4112 = vpack.c.b16 %v2532, %v2522
    %v4113 = vpack.c.b16 %v2533, %v2523
    %v4114 = vpack.c.b16 %v2534, %v2524
    %v4115 = vpack.c.b16 %v2545, %v2535
    %v4116 = vpack.c.b16 %v2546, %v2536
    %v4117 = vpack.c.b16 %v2547, %v2537
    %v4118 = vpack.c.b16 %v2548, %v2538
    %v4119 = vpack.c.b16 %v2549, %v2539
    %v4120 = vpack.c.b16 %v2550, %v2540
    %v4121 = vpack.c.b16 %v2551, %v2541
    %v4122 = vpack.c.b16 %v2552, %v2542
    %v4123 = vpack.c.b16 %v2553, %v2543
    %v4124 = vpack.c.b16 %v2554, %v2544
    %v4125 = vpack.c.b16 %v2565, %v2555
    %v4126 = vpack.c.b16 %v2566, %v2556
    %v4127 = vpack.c.b16 %v2567, %v2557
    %v4128 = vpack.c.b16 %v2568, %v2558
    %v4129 = vpack.c.b16 %v2569, %v2559
    %v4130 = vpack.c.b16 %v2570, %v2560
    %v4131 = vpack.c.b16 %v2571, %v2561
    %v4132 = vpack.c.b16 %v2572, %v2562
    %v4133 = vpack.c.b16 %v2573, %v2563
    %v4134 = vpack.c.b16 %v2574, %v2564
    %v4135 = vpack.c.b16 %v2585, %v2575
    %v4136 = vpack.c.b16 %v2586, %v2576
    %v4137 = vpack.c.b16 %v2587, %v2577
    %v4138 = vpack.c.b16 %v2588, %v2578
    %v4139 = vpack.c.b16 %v2589, %v2579
    %v4140 = vpack.c.b16 %v2590, %v2580
    %v4141 = vpack.c.b16 %v2591, %v2581
    %v4142 = vpack.c.b16 %v2592, %v2582
    %v4143 = vpack.c.b16 %v2593, %v2583
    %v4144 = vpack.c.b16 %v2594, %v2584
    %v4145 = vpack.c.b16 %v2605, %v2595
    %v4146 = vpack.c.b16 %v2606, %v2596
    %v4147 = vpack.c.b16 %v2607, %v2597
    %v4148 = vpack.c.b16 %v2608, %v2598
    %v4149 = vpack.c.b16 %v2609, %v2599
    %v4150 = vpack.c.b16 %v2610, %v2600
    %v4151 = vpack.c.b16 %v2611, %v2601
    %v4152 = vpack.c.b16 %v2612, %v2602
    %v4153 = vpack.c.b16 %v2613, %v2603
    %v4154 = vpack.c.b16 %v2614, %v2604
    %v4155 = vpack.c.b16 %v2625, %v2615
    %v4156 = vpack.c.b16 %v2626, %v2616
    %v4157 = vpack.c.b16 %v2627, %v2617
    %v4158 = vpack.c.b16 %v2628, %v2618
    %v4159 = vpack.c.b16 %v2629, %v2619
    %v4160 = vpack.c.b16 %v2630, %v2620
    %v4161 = vpack.c.b16 %v2631, %v2621
    %v4162 = vpack.c.b16 %v2632, %v2622
    %v4163 = vpack.c.b16 %v2633, %v2623
    %v4164 = vpack.c.b16 %v2634, %v2624
    %v4165 = vpack.c.b16 %v2645, %v2635
    %v4166 = vpack.c.b16 %v2646, %v2636
    %v4167 = vpack.c.b16 %v2647, %v2637
    %v4168 = vpack.c.b16 %v2648, %v2638
    %v4169 = vpack.c.b16 %v2649, %v2639
    %v4170 = vpack.c.b16 %v2650, %v2640
    %v4171 = vpack.c.b16 %v2651, %v2641
    %v4172 = vpack.c.b16 %v2652, %v2642
    %v4173 = vpack.c.b16 %v2653, %v2643
    %v4174 = vpack.c.b16 %v2654, %v2644
    %v4175 = vpack.c.b16 %v2665, %v2655
    %v4176 = vpack.c.b16 %v2666, %v2656
    %v4177 = vpack.c.b16 %v2667, %v2657
    %v4178 = vpack.c.b16 %v2668, %v2658
    %v4179 = vpack.c.b16 %v2669, %v2659
    %v4180 = vpack.c.b16 %v2670, %v2660
    %v4181 = vpack.c.b16 %v2671, %v2661
    %v4182 = vpack.c.b16 %v2672, %v2662
    %v4183 = vpack.c.b16 %v2673, %v2663
    %v4184 = vpack.c.b16 %v2674, %v2664
    %v4185 = vpack.c.b16 %v2685, %v2675
    %v4186 = vpack.c.b16 %v2686, %v2676
    %v4187 = vpack.c.b16 %v2687, %v2677
    %v4188 = vpack.c.b16 %v2688, %v2678
    %v4189 = vpack.c.b16 %v2689, %v2679
    %v4190 = vpack.c.b16 %v2690, %v2680
    %v4191 = vpack.c.b16 %v2691, %v2681
    %v4192 = vpack.c.b16 %v2692, %v2682
    %v4193 = vpack.c.b16 %v2693, %v2683
    %v4194 = vpack.c.b16 %v2694, %v2684
    %v4195 = vpack.c.b16 %v2705, %v2695
    %v4196 = vpack.c.b16 %v2706, %v2696
    %v4197 = vpack.c.b16 %v2707, %v2697
    %v4198 = vpack.c.b16 %v2708, %v2698
    %v4199 = vpack.c.b16 %v2709, %v2699
    %v4200 = vpack.c.b16 %v2710, %v2700
    %v4201 = vpack.c.b16 %v2711, %v2701
    %v4202 = vpack.c.b16 %v2712, %v2702
    %v4203 = vpack.c.b16 %v2713, %v2703
    %v4204 = vpack.c.b16 %v2714, %v2704
    %v4205 = vpack.c.b16 %v2725, %v2715
    %v4206 = vpack.c.b16 %v2726, %v2716
    %v4207 = vpack.c.b16 %v2727, %v2717
    %v4208 = vpack.c.b16 %v2728, %v2718
    %v4209 = vpack.c.b16 %v2729, %v2719
    %v4210 = vpack.c.b16 %v2730, %v2720
    %v4211 = vpack.c.b16 %v2731, %v2721
    %v4212 = vpack.c.b16 %v2732, %v2722
    %v4213 = vpack.c.b16 %v2733, %v2723
    %v4214 = vpack.c.b16 %v2734, %v2724
    %v4215 = vpack.c.b16 %v2745, %v2735
    %v4216 = vpack.c.b16 %v2746, %v2736
    %v4217 = vpack.c.b16 %v2747, %v2737
    %v4218 = vpack.c.b16 %v2748, %v2738
    %v4219 = vpack.c.b16 %v2749, %v2739
    %v4220 = vpack.c.b16 %v2750, %v2740
    %v4221 = vpack.c.b16 %v2751, %v2741
    %v4222 = vpack.c.b16 %v2752, %v2742
    %v4223 = vpack.c.b16 %v2753, %v2743
    %v4224 = vpack.c.b16 %v2754, %v2744
    %v4225 = vpack.c.b16 %v2765, %v2755
    %v4226 = vpack.c.b16 %v2766, %v2756
    %v4227 = vpack.c.b16 %v2767, %v2757
    %v4228 = vpack.c.b16 %v2768, %v2758
    %v4229 = vpack.c.b16 %v2769, %v2759
    %v4230 = vpack.c.b16 %v2770, %v2760
    %v4231 = vpack.c.b16 %v2771, %v2761
    %v4232 = vpack.c.b16 %v2772, %v2762
    %v4233 = vpack.c.b16 %v2773, %v2763
    %v4234 = vpack.c.b16 %v2774, %v2764
    %v4235 = vpack.c.b16 %v2785, %v2775
    %v4236 = vpack.c.b16 %v2786, %v2776
    %v4237 = vpack.c.b16 %v2787, %v2777
    %v4238 = vpack.c.b16 %v2788, %v2778
    %v4239 = vpack.c.b16 %v2789, %v2779
    %v4240 = vpack.c.b16 %v2790, %v2780
    %v4241 = vpack.c.b16 %v2791, %v2781
    %v4242 = vpack.c.b16 %v2792, %v2782
    %v4243 = vpack.c.b16 %v2793, %v2783
    %v4244 = vpack.c.b16 %v2794, %v2784
    %v4245 = vpack.c.b16 %v2805, %v2795
    %v4246 = vpack.c.b16 %v2806, %v2796
    %v4247 = vpack.c.b16 %v2807, %v2797
    %v4248 = vpack.c.b16 %v2808, %v2798
    %v4249 = vpack.c.b16 %v2809, %v2799
    %v4250 = vpack.c.b16 %v2810, %v2800
    %v4251 = vpack.c.b16 %v2811, %v2801
    %v4252 = vpack.c.b16 %v2812, %v2802
    %v4253 = vpack.c.b16 %v2813, %v2803
    %v4254 = vpack.c.b16 %v2814, %v2804
    %v4255 = vpack.c.b16 %v2825, %v2815
    %v4256 = vpack.c.b16 %v2826, %v2816
    %v4257 = vpack.c.b16 %v2827, %v2817
    %v4258 = vpack.c.b16 %v2828, %v2818
    %v4259 = vpack.c.b16 %v2829, %v2819
    %v4260 = vpack.c.b16 %v2830, %v2820
    %v4261 = vpack.c.b16 %v2831, %v2821
    %v4262 = vpack.c.b16 %v2832, %v2822
    %v4263 = vpack.c.b16 %v2833, %v2823
    %v4264 = vpack.c.b16 %v2834, %v2824
    %v4265 = vpack.c.b16 %v2845, %v2835
    %v4266 = vpack.c.b16 %v2846, %v2836
    %v4267 = vpack.c.b16 %v2847, %v2837
    %v4268 = vpack.c.b16 %v2848, %v2838
    %v4269 = vpack.c.b16 %v2849, %v2839
    %v4270 = vpack.c.b16 %v2850, %v2840
    %v4271 = vpack.c.b16 %v2851, %v2841
    %v4272 = vpack.c.b16 %v2852, %v2842
    %v4273 = vpack.c.b16 %v2853, %v2843
    %v4274 = vpack.c.b16 %v2854, %v2844
    %v4275 = vpack.c.b16 %v2865, %v2855
    %v4276 = vpack.c.b16 %v2866, %v2856
    %v4277 = vpack.c.b16 %v2867, %v2857
    %v4278 = vpack.c.b16 %v2868, %v2858
    %v4279 = vpack.c.b16 %v2869, %v2859
    %v4280 = vpack.c.b16 %v2870, %v2860
    %v4281 = vpack.c.b16 %v2871, %v2861
    %v4282 = vpack.c.b16 %v2872, %v2862
    %v4283 = vpack.c.b16 %v2873, %v2863
    %v4284 = vpack.c.b16 %v2874, %v2864
    %v4285 = vpack.c.b16 %v2885, %v2875
    %v4286 = vpack.c.b16 %v2886, %v2876
    %v4287 = vpack.c.b16 %v2887, %v2877
    %v4288 = vpack.c.b16 %v2888, %v2878
    %v4289 = vpack.c.b16 %v2889, %v2879
    %v4290 = vpack.c.b16 %v2890, %v2880
    %v4291 = vpack.c.b16 %v2891, %v2881
    %v4292 = vpack.c.b16 %v2892, %v2882
    %v4293 = vpack.c.b16 %v2893, %v2883
    %v4294 = vpack.c.b16 %v2894, %v2884
    %v4295 = vpack.c.b16 %v2905, %v2895
    %v4296 = vpack.c.b16 %v2906, %v2896
    %v4297 = vpack.c.b16 %v2907, %v2897
    %v4298 = vpack.c.b16 %v2908, %v2898
    %v4299 = vpack.c.b16 %v2909, %v2899
    %v4300 = vpack.c.b16 %v2910, %v2900
    %v4301 = vpack.c.b16 %v2911, %v2901
    %v4302 = vpack.c.b16 %v2912, %v2902
    %v4303 = vpack.c.b16 %v2913, %v2903
    %v4304 = vpack.c.b16 %v2914, %v2904
    %v4305 = vpack.c.b16 %v2925, %v2915
    %v4306 = vpack.c.b16 %v2926, %v2916
    %v4307 = vpack.c.b16 %v2927, %v2917
    %v4308 = vpack.c.b16 %v2928, %v2918
    %v4309 = vpack.c.b16 %v2929, %v2919
    %v4310 = vpack.c.b16 %v2930, %v2920
    %v4311 = vpack.c.b16 %v2931, %v2921
    %v4312 = vpack.c.b16 %v2932, %v2922
    %v4313 = vpack.c.b16 %v2933, %v2923
    %v4314 = vpack.c.b16 %v2934, %v2924
    %v4315 = vpack.c.b16 %v2945, %v2935
    %v4316 = vpack.c.b16 %v2946, %v2936
    %v4317 = vpack.c.b16 %v2947, %v2937
    %v4318 = vpack.c.b16 %v2948, %v2938
    %v4319 = vpack.c.b16 %v2949, %v2939
    %v4320 = vpack.c.b16 %v2950, %v2940
    %v4321 = vpack.c.b16 %v2951, %v2941
    %v4322 = vpack.c.b16 %v2952, %v2942
    %v4323 = vpack.c.b16 %v2953, %v2943
    %v4324 = vpack.c.b16 %v2954, %v2944
    %v4325 = vpack.c.b16 %v2965, %v2955
    %v4326 = vpack.c.b16 %v2966, %v2956
    %v4327 = vpack.c.b16 %v2967, %v2957
    %v4328 = vpack.c.b16 %v2968, %v2958
    %v4329 = vpack.c.b16 %v2969, %v2959
    %v4330 = vpack.c.b16 %v2970, %v2960
    %v4331 = vpack.c.b16 %v2971, %v2961
    %v4332 = vpack.c.b16 %v2972, %v2962
    %v4333 = vpack.c.b16 %v2973, %v2963
    %v4334 = vpack.c.b16 %v2974, %v2964
    %v4335 = vpack.c.b16 %v2985, %v2975
    %v4336 = vpack.c.b16 %v2986, %v2976
    %v4337 = vpack.c.b16 %v2987, %v2977
    %v4338 = vpack.c.b16 %v2988, %v2978
    %v4339 = vpack.c.b16 %v2989, %v2979
    %v4340 = vpack.c.b16 %v2990, %v2980
    %v4341 = vpack.c.b16 %v2991, %v2981
    %v4342 = vpack.c.b16 %v2992, %v2982
    %v4343 = vpack.c.b16 %v2993, %v2983
    %v4344 = vpack.c.b16 %v2994, %v2984
    %v4345 = vpack.c.b16 %v3005, %v2995
    %v4346 = vpack.c.b16 %v3006, %v2996
    %v4347 = vpack.c.b16 %v3007, %v2997
    %v4348 = vpack.c.b16 %v3008, %v2998
    %v4349 = vpack.c.b16 %v3009, %v2999
    %v4350 = vpack.c.b16 %v3010, %v3000
    %v4351 = vpack.c.b16 %v3011, %v3001
    %v4352 = vpack.c.b16 %v3012, %v3002
    %v4353 = vpack.c.b16 %v3013, %v3003
    %v4354 = vpack.c.b16 %v3014, %v3004
    %v4355 = vpack.c.b16 %v3025, %v3015
    %v4356 = vpack.c.b16 %v3026, %v3016
    %v4357 = vpack.c.b16 %v3027, %v3017
    %v4358 = vpack.c.b16 %v3028, %v3018
    %v4359 = vpack.c.b16 %v3029, %v3019
    %v4360 = vpack.c.b16 %v3030, %v3020
    %v4361 = vpack.c.b16 %v3031, %v3021
    %v4362 = vpack.c.b16 %v3032, %v3022
    %v4363 = vpack.c.b16 %v3033, %v3023
    %v4364 = vpack.c.b16 %v3034, %v3024
    %v4365 = vpack.c.b16 %v3045, %v3035
    %v4366 = vpack.c.b16 %v3046, %v3036
    %v4367 = vpack.c.b16 %v3047, %v3037
    %v4368 = vpack.c.b16 %v3048, %v3038
    %v4369 = vpack.c.b16 %v3049, %v3039
    %v4370 = vpack.c.b16 %v3050, %v3040
    %v4371 = vpack.c.b16 %v3051, %v3041
    %v4372 = vpack.c.b16 %v3052, %v3042
    %v4373 = vpack.c.b16 %v3053, %v3043
    %v4374 = vpack.c.b16 %v3054, %v3044
    %v4375 = vpack.c.b16 %v3065, %v3055
    %v4376 = vpack.c.b16 %v3066, %v3056
    %v4377 = vpack.c.b16 %v3067, %v3057
    %v4378 = vpack.c.b16 %v3068, %v3058
    %v4379 = vpack.c.b16 %v3069, %v3059
    %v4380 = vpack.c.b16 %v3070, %v3060
    %v4381 = vpack.c.b16 %v3071, %v3061
    %v4382 = vpack.c.b16 %v3072, %v3062
    %v4383 = vpack.c.b16 %v3073, %v3063
    %v4384 = vpack.c.b16 %v3074, %v3064
    %v4385 = vpack.c.b16 %v3085, %v3075
    %v4386 = vpack.c.b16 %v3086, %v3076
    %v4387 = vpack.c.b16 %v3087, %v3077
    %v4388 = vpack.c.b16 %v3088, %v3078
    %v4389 = vpack.c.b16 %v3089, %v3079
    %v4390 = vpack.c.b16 %v3090, %v3080
    %v4391 = vpack.c.b16 %v3091, %v3081
    %v4392 = vpack.c.b16 %v3092, %v3082
    %v4393 = vpack.c.b16 %v3093, %v3083
    %v4394 = vpack.c.b16 %v3094, %v3084
    %v4395 = vpack.c.b16 %v3105, %v3095
    %v4396 = vpack.c.b16 %v3106, %v3096
    %v4397 = vpack.c.b16 %v3107, %v3097
    %v4398 = vpack.c.b16 %v3108, %v3098
    %v4399 = vpack.c.b16 %v3109, %v3099
    %v4400 = vpack.c.b16 %v3110, %v3100
    %v4401 = vpack.c.b16 %v3111, %v3101
    %v4402 = vpack.c.b16 %v3112, %v3102
    %v4403 = vpack.c.b16 %v3113, %v3103
    %v4404 = vpack.c.b16 %v3114, %v3104
    %v4405 = vpack.c.b16 %v3125, %v3115
    %v4406 = vpack.c.b16 %v3126, %v3116
    %v4407 = vpack.c.b16 %v3127, %v3117
    %v4408 = vpack.c.b16 %v3128, %v3118
    %v4409 = vpack.c.b16 %v3129, %v3119
    %v4410 = vpack.c.b16 %v3130, %v3120
    %v4411 = vpack.c.b16 %v3131, %v3121
    %v4412 = vpack.c.b16 %v3132, %v3122
    %v4413 = vpack.c.b16 %v3133, %v3123
    %v4414 = vpack.c.b16 %v3134, %v3124
    %v4415 = vpack.c.b16 %v3145, %v3135
    %v4416 = vpack.c.b16 %v3146, %v3136
    %v4417 = vpack.c.b16 %v3147, %v3137
    %v4418 = vpack.c.b16 %v3148, %v3138
    %v4419 = vpack.c.b16 %v3149, %v3139
    %v4420 = vpack.c.b16 %v3150, %v3140
    %v4421 = vpack.c.b16 %v3151, %v3141
    %v4422 = vpack.c.b16 %v3152, %v3142
    %v4423 = vpack.c.b16 %v3153, %v3143
    %v4424 = vpack.c.b16 %v3154, %v3144
    %v4425 = vpack.c.b16 %v3165, %v3155
    %v4426 = vpack.c.b16 %v3166, %v3156
    %v4427 = vpack.c.b16 %v3167, %v3157
    %v4428 = vpack.c.b16 %v3168, %v3158
    %v4429 = vpack.c.b16 %v3169, %v3159
    %v4430 = vpack.c.b16 %v3170, %v3160
    %v4431 = vpack.c.b16 %v3171, %v3161
    %v4432 = vpack.c.b16 %v3172, %v3162
    %v4433 = vpack.c.b16 %v3173, %v3163
    %v4434 = vpack.c.b16 %v3174, %v3164
    %v4435 = vpack.c.b16 %v3185, %v3175
    %v4436 = vpack.c.b16 %v3186, %v3176
    %v4437 = vpack.c.b16 %v3187, %v3177
    %v4438 = vpack.c.b16 %v3188, %v3178
    %v4439 = vpack.c.b16 %v3189, %v3179
    %v4440 = vpack.c.b16 %v3190, %v3180
    %v4441 = vpack.c.b16 %v3191, %v3181
    %v4442 = vpack.c.b16 %v3192, %v3182
    %v4443 = vpack.c.b16 %v3193, %v3183
    %v4444 = vpack.c.b16 %v3194, %v3184
    %v4445 = vpack.c.b16 %v3205, %v3195
    %v4446 = vpack.c.b16 %v3206, %v3196
    %v4447 = vpack.c.b16 %v3207, %v3197
    %v4448 = vpack.c.b16 %v3208, %v3198
    %v4449 = vpack.c.b16 %v3209, %v3199
    %v4450 = vpack.c.b16 %v3210, %v3200
    %v4451 = vpack.c.b16 %v3211, %v3201
    %v4452 = vpack.c.b16 %v3212, %v3202
    %v4453 = vpack.c.b16 %v3213, %v3203
    %v4454 = vpack.c.b16 %v3214, %v3204
    %v4455 = vpack.c.b16 %v3225, %v3215
    %v4456 = vpack.c.b16 %v3226, %v3216
    %v4457 = vpack.c.b16 %v3227, %v3217
    %v4458 = vpack.c.b16 %v3228, %v3218
    %v4459 = vpack.c.b16 %v3229, %v3219
    %v4460 = vpack.c.b16 %v3230, %v3220
    %v4461 = vpack.c.b16 %v3231, %v3221
    %v4462 = vpack.c.b16 %v3232, %v3222
    %v4463 = vpack.c.b16 %v3233, %v3223
    %v4464 = vpack.c.b16 %v3234, %v3224
    %v4465 = vpack.c.b16 %v3245, %v3235
    %v4466 = vpack.c.b16 %v3246, %v3236
    %v4467 = vpack.c.b16 %v3247, %v3237
    %v4468 = vpack.c.b16 %v3248, %v3238
    %v4469 = vpack.c.b16 %v3249, %v3239
    %v4470 = vpack.c.b16 %v3250, %v3240
    %v4471 = vpack.c.b16 %v3251, %v3241
    %v4472 = vpack.c.b16 %v3252, %v3242
    %v4473 = vpack.c.b16 %v3253, %v3243
    %v4474 = vpack.c.b16 %v3254, %v3244
    %v4475 = vpack.c.b16 %v3265, %v3255
    %v4476 = vpack.c.b16 %v3266, %v3256
    %v4477 = vpack.c.b16 %v3267, %v3257
    %v4478 = vpack.c.b16 %v3268, %v3258
    %v4479 = vpack.c.b16 %v3269, %v3259
    %v4480 = vpack.c.b16 %v3270, %v3260
    %v4481 = vpack.c.b16 %v3271, %v3261
    %v4482 = vpack.c.b16 %v3272, %v3262
    %v4483 = vpack.c.b16 %v3273, %v3263
    %v4484 = vpack.c.b16 %v3274, %v3264
    %v4485 = vpack.c.b16 %v3285, %v3275
    %v4486 = vpack.c.b16 %v3286, %v3276
    %v4487 = vpack.c.b16 %v3287, %v3277
    %v4488 = vpack.c.b16 %v3288, %v3278
    %v4489 = vpack.c.b16 %v3289, %v3279
    %v4490 = vpack.c.b16 %v3290, %v3280
    %v4491 = vpack.c.b16 %v3291, %v3281
    %v4492 = vpack.c.b16 %v3292, %v3282
    %v4493 = vpack.c.b16 %v3293, %v3283
    %v4494 = vpack.c.b16 %v3294, %v3284
    %v4495 = vpack.c.b16 %v3305, %v3295
    %v4496 = vpack.c.b16 %v3306, %v3296
    %v4497 = vpack.c.b16 %v3307, %v3297
    %v4498 = vpack.c.b16 %v3308, %v3298
    %v4499 = vpack.c.b16 %v3309, %v3299
    %v4500 = vpack.c.b16 %v3310, %v3300
    %v4501 = vpack.c.b16 %v3311, %v3301
    %v4502 = vpack.c.b16 %v3312, %v3302
    %v4503 = vpack.c.b16 %v3313, %v3303
    %v4504 = vpack.c.b16 %v3314, %v3304
    %v4505 = vpack.c.b16 %v3325, %v3315
    %v4506 = vpack.c.b16 %v3326, %v3316
    %v4507 = vpack.c.b16 %v3327, %v3317
    %v4508 = vpack.c.b16 %v3328, %v3318
    %v4509 = vpack.c.b16 %v3329, %v3319
    %v4510 = vpack.c.b16 %v3330, %v3320
    %v4511 = vpack.c.b16 %v3331, %v3321
    %v4512 = vpack.c.b16 %v3332, %v3322
    %v4513 = vpack.c.b16 %v3333, %v3323
    %v4514 = vpack.c.b16 %v3334, %v3324
    %v4515 = vpack.c.b16 %v3345, %v3335
    %v4516 = vpack.c.b16 %v3346, %v3336
    %v4517 = vpack.c.b16 %v3347, %v3337
    %v4518 = vpack.c.b16 %v3348, %v3338
    %v4519 = vpack.c.b16 %v3349, %v3339
    %v4520 = vpack.c.b16 %v3350, %v3340
    %v4521 = vpack.c.b16 %v3351, %v3341
    %v4522 = vpack.c.b16 %v3352, %v3342
    %v4523 = vpack.c.b16 %v3353, %v3343
    %v4524 = vpack.c.b16 %v3354, %v3344
    %v4525 = vpack.c.b16 %v3365, %v3355
    %v4526 = vpack.c.b16 %v3366, %v3356
    %v4527 = vpack.c.b16 %v3367, %v3357
    %v4528 = vpack.c.b16 %v3368, %v3358
    %v4529 = vpack.c.b16 %v3369, %v3359
    %v4530 = vpack.c.b16 %v3370, %v3360
    %v4531 = vpack.c.b16 %v3371, %v3361
    %v4532 = vpack.c.b16 %v3372, %v3362
    %v4533 = vpack.c.b16 %v3373, %v3363
    %v4534 = vpack.c.b16 %v3374, %v3364
    %v4535 = vpack.c.b16 %v3385, %v3375
    %v4536 = vpack.c.b16 %v3386, %v3376
    %v4537 = vpack.c.b16 %v3387, %v3377
    %v4538 = vpack.c.b16 %v3388, %v3378
    %v4539 = vpack.c.b16 %v3389, %v3379
    %v4540 = vpack.c.b16 %v3390, %v3380
    %v4541 = vpack.c.b16 %v3391, %v3381
    %v4542 = vpack.c.b16 %v3392, %v3382
    %v4543 = vpack.c.b16 %v3393, %v3383
    %v4544 = vpack.c.b16 %v3394, %v3384
    %v4545 = vpack.c.b16 %v3405, %v3395
    %v4546 = vpack.c.b16 %v3406, %v3396
    %v4547 = vpack.c.b16 %v3407, %v3397
    %v4548 = vpack.c.b16 %v3408, %v3398
    %v4549 = vpack.c.b16 %v3409, %v3399
    %v4550 = vpack.c.b16 %v3410, %v3400
    %v4551 = vpack.c.b16 %v3411, %v3401
    %v4552 = vpack.c.b16 %v3412, %v3402
    %v4553 = vpack.c.b16 %v3413, %v3403
    %v4554 = vpack.c.b16 %v3414, %v3404
    %v4555 = vpack.c.b16 %v3425, %v3415
    %v4556 = vpack.c.b16 %v3426, %v3416
    %v4557 = vpack.c.b16 %v3427, %v3417
    %v4558 = vpack.c.b16 %v3428, %v3418
    %v4559 = vpack.c.b16 %v3429, %v3419
    %v4560 = vpack.c.b16 %v3430, %v3420
    %v4561 = vpack.c.b16 %v3431, %v3421
    %v4562 = vpack.c.b16 %v3432, %v3422
    %v4563 = vpack.c.b16 %v3433, %v3423
    %v4564 = vpack.c.b16 %v3434, %v3424
    %v4565 = vpack.c.b16 %v3445, %v3435
    %v4566 = vpack.c.b16 %v3446, %v3436
    %v4567 = vpack.c.b16 %v3447, %v3437
    %v4568 = vpack.c.b16 %v3448, %v3438
    %v4569 = vpack.c.b16 %v3449, %v3439
    %v4570 = vpack.c.b16 %v3450, %v3440
    %v4571 = vpack.c.b16 %v3451, %v3441
    %v4572 = vpack.c.b16 %v3452, %v3442
    %v4573 = vpack.c.b16 %v3453, %v3443
    %v4574 = vpack.c.b16 %v3454, %v3444
    %v4575 = vpack.c.b16 %v3465, %v3455
    %v4576 = vpack.c.b16 %v3466, %v3456
    %v4577 = vpack.c.b16 %v3467, %v3457
    %v4578 = vpack.c.b16 %v3468, %v3458
    %v4579 = vpack.c.b16 %v3469, %v3459
    %v4580 = vpack.c.b16 %v3470, %v3460
    %v4581 = vpack.c.b16 %v3471, %v3461
    %v4582 = vpack.c.b16 %v3472, %v3462
    %v4583 = vpack.c.b16 %v3473, %v3463
    %v4584 = vpack.c.b16 %v3474, %v3464
    %v4585 = vpack.c.b16 %v3485, %v3475
    %v4586 = vpack.c.b16 %v3486, %v3476
    %v4587 = vpack.c.b16 %v3487, %v3477
    %v4588 = vpack.c.b16 %v3488, %v3478
    %v4589 = vpack.c.b16 %v3489, %v3479
    %v4590 = vpack.c.b16 %v3490, %v3480
    %v4591 = vpack.c.b16 %v3491, %v3481
    %v4592 = vpack.c.b16 %v3492, %v3482
    %v4593 = vpack.c.b16 %v3493, %v3483
    %v4594 = vpack.c.b16 %v3494, %v3484
    %v4595 = vpack.c.b16 %v3505, %v3495
    %v4596 = vpack.c.b16 %v3506, %v3496
    %v4597 = vpack.c.b16 %v3507, %v3497
    %v4598 = vpack.c.b16 %v3508, %v3498
    %v4599 = vpack.c.b16 %v3509, %v3499
    %v4600 = vpack.c.b16 %v3510, %v3500
    %v4601 = vpack.c.b16 %v3511, %v3501
    %v4602 = vpack.c.b16 %v3512, %v3502
    %v4603 = vpack.c.b16 %v3513, %v3503
    %v4604 = vpack.c.b16 %v3514, %v3504
    %v4605 = vpack.c.b16 %v3525, %v3515
    %v4606 = vpack.c.b16 %v3526, %v3516
    %v4607 = vpack.c.b16 %v3527, %v3517
    %v4608 = vpack.c.b16 %v3528, %v3518
    %v4609 = vpack.c.b16 %v3529, %v3519
    %v4610 = vpack.c.b16 %v3530, %v3520
    %v4611 = vpack.c.b16 %v3531, %v3521
    %v4612 = vpack.c.b16 %v3532, %v3522
    %v4613 = vpack.c.b16 %v3533, %v3523
    %v4614 = vpack.c.b16 %v3534, %v3524
    %v4615 = vpack.c.b16 %v3545, %v3535
    %v4616 = vpack.c.b16 %v3546, %v3536
    %v4617 = vpack.c.b16 %v3547, %v3537
    %v4618 = vpack.c.b16 %v3548, %v3538
    %v4619 = vpack.c.b16 %v3549, %v3539
    %v4620 = vpack.c.b16 %v3550, %v3540
    %v4621 = vpack.c.b16 %v3551, %v3541
    %v4622 = vpack.c.b16 %v3552, %v3542
    %v4623 = vpack.c.b16 %v3553, %v3543
    %v4624 = vpack.c.b16 %v3554, %v3544
    %v4625 = vpack.c.b16 %v3565, %v3555
    %v4626 = vpack.c.b16 %v3566, %v3556
    %v4627 = vpack.c.b16 %v3567, %v3557
    %v4628 = vpack.c.b16 %v3568, %v3558
    %v4629 = vpack.c.b16 %v3569, %v3559
    %v4630 = vpack.c.b16 %v3570, %v3560
    %v4631 = vpack.c.b16 %v3571, %v3561
    %v4632 = vpack.c.b16 %v3572, %v3562
    %v4633 = vpack.c.b16 %v3573, %v3563
    %v4634 = vpack.c.b16 %v3574, %v3564
    %v4635 = vpack.c.b16 %v3585, %v3575
    %v4636 = vpack.c.b16 %v3586, %v3576
    %v4637 = vpack.c.b16 %v3587, %v3577
    %v4638 = vpack.c.b16 %v3588, %v3578
    %v4639 = vpack.c.b16 %v3589, %v3579
    %v4640 = vpack.c.b16 %v3590, %v3580
    %v4641 = vpack.c.b16 %v3591, %v3581
    %v4642 = vpack.c.b16 %v3592, %v3582
    %v4643 = vpack.c.b16 %v3593, %v3583
    %v4644 = vpack.c.b16 %v3594, %v3584
    %v4645 = vpack.c.b16 %v3605, %v3595
    %v4646 = vpack.c.b16 %v3606, %v3596
    %v4647 = vpack.c.b16 %v3607, %v3597
    %v4648 = vpack.c.b16 %v3608, %v3598
    %v4649 = vpack.c.b16 %v3609, %v3599
    %v4650 = vpack.c.b16 %v3610, %v3600
    %v4651 = vpack.c.b16 %v3611, %v3601
    %v4652 = vpack.c.b16 %v3612, %v3602
    %v4653 = vpack.c.b16 %v3613, %v3603
    %v4654 = vpack.c.b16 %v3614, %v3604
    %v4655 = vpack.c.b16 %v3625, %v3615
    %v4656 = vpack.c.b16 %v3626, %v3616
    %v4657 = vpack.c.b16 %v3627, %v3617
    %v4658 = vpack.c.b16 %v3628, %v3618
    %v4659 = vpack.c.b16 %v3629, %v3619
    %v4660 = vpack.c.b16 %v3630, %v3620
    %v4661 = vpack.c.b16 %v3631, %v3621
    %v4662 = vpack.c.b16 %v3632, %v3622
    %v4663 = vpack.c.b16 %v3633, %v3623
    %v4664 = vpack.c.b16 %v3634, %v3624
    %v4665 = vpack.c.b16 %v3645, %v3635
    %v4666 = vpack.c.b16 %v3646, %v3636
    %v4667 = vpack.c.b16 %v3647, %v3637
    %v4668 = vpack.c.b16 %v3648, %v3638
    %v4669 = vpack.c.b16 %v3649, %v3639
    %v4670 = vpack.c.b16 %v3650, %v3640
    %v4671 = vpack.c.b16 %v3651, %v3641
    %v4672 = vpack.c.b16 %v3652, %v3642
    %v4673 = vpack.c.b16 %v3653, %v3643
    %v4674 = vpack.c.b16 %v3654, %v3644
    %v4675 = vpack.c.b16 %v3665, %v3655
    %v4676 = vpack.c.b16 %v3666, %v3656
    %v4677 = vpack.c.b16 %v3667, %v3657
    %v4678 = vpack.c.b16 %v3668, %v3658
    %v4679 = vpack.c.b16 %v3669, %v3659
    %v4680 = vpack.c.b16 %v3670, %v3660
    %v4681 = vpack.c.b16 %v3671, %v3661
    %v4682 = vpack.c.b16 %v3672, %v3662
    %v4683 = vpack.c.b16 %v3673, %v3663
    %v4684 = vpack.c.b16 %v3674, %v3664
    %v4685 = vpack.c.b16 %v3685, %v3675
    %v4686 = vpack.c.b16 %v3686, %v3676
    %v4687 = vpack.c.b16 %v3687, %v3677
    %v4688 = vpack.c.b16 %v3688, %v3678
    %v4689 = vpack.c.b16 %v3689, %v3679
    %v4690 = vpack.c.b16 %v3690, %v3680
    %v4691 = vpack.c.b16 %v3691, %v3681
    %v4692 = vpack.c.b16 %v3692, %v3682
    %v4693 = vpack.c.b16 %v3693, %v3683
    %v4694 = vpack.c.b16 %v3694, %v3684
    %v4695 = vpack.c.b16 %v3705, %v3695
    %v4696 = vpack.c.b16 %v3706, %v3696
    %v4697 = vpack.c.b16 %v3707, %v3697
    %v4698 = vpack.c.b16 %v3708, %v3698
    %v4699 = vpack.c.b16 %v3709, %v3699
    %v4700 = vpack.c.b16 %v3710, %v3700
    %v4701 = vpack.c.b16 %v3711, %v3701
    %v4702 = vpack.c.b16 %v3712, %v3702
    %v4703 = vpack.c.b16 %v3713, %v3703
    %v4704 = vpack.c.b16 %v3714, %v3704
    %v4705 = vpack.c.b16 %v3725, %v3715
    %v4706 = vpack.c.b16 %v3726, %v3716
    %v4707 = vpack.c.b16 %v3727, %v3717
    %v4708 = vpack.c.b16 %v3728, %v3718
    %v4709 = vpack.c.b16 %v3729, %v3719
    %v4710 = vpack.c.b16 %v3730, %v3720
    %v4711 = vpack.c.b16 %v3731, %v3721
    %v4712 = vpack.c.b16 %v3732, %v3722
    %v4713 = vpack.c.b16 %v3733, %v3723
    %v4714 = vpack.c.b16 %v3734, %v3724
    %v4715 = vpack.c.b16 %v3745, %v3735
    %v4716 = vpack.c.b16 %v3746, %v3736
    %v4717 = vpack.c.b16 %v3747, %v3737
    %v4718 = vpack.c.b16 %v3748, %v3738
    %v4719 = vpack.c.b16 %v3749, %v3739
    %v4720 = vpack.c.b16 %v3750, %v3740
    %v4721 = vpack.c.b16 %v3751, %v3741
    %v4722 = vpack.c.b16 %v3752, %v3742
    %v4723 = vpack.c.b16 %v3753, %v3743
    %v4724 = vpack.c.b16 %v3754, %v3744
    %v4725 = vpack.c.b16 %v3765, %v3755
    %v4726 = vpack.c.b16 %v3766, %v3756
    %v4727 = vpack.c.b16 %v3767, %v3757
    %v4728 = vpack.c.b16 %v3768, %v3758
    %v4729 = vpack.c.b16 %v3769, %v3759
    %v4730 = vpack.c.b16 %v3770, %v3760
    %v4731 = vpack.c.b16 %v3771, %v3761
    %v4732 = vpack.c.b16 %v3772, %v3762
    %v4733 = vpack.c.b16 %v3773, %v3763
    %v4734 = vpack.c.b16 %v3774, %v3764
    %v4735 = vpack.c.b16 %v3785, %v3775
    %v4736 = vpack.c.b16 %v3786, %v3776
    %v4737 = vpack.c.b16 %v3787, %v3777
    %v4738 = vpack.c.b16 %v3788, %v3778
    %v4739 = vpack.c.b16 %v3789, %v3779
    %v4740 = vpack.c.b16 %v3790, %v3780
    %v4741 = vpack.c.b16 %v3791, %v3781
    %v4742 = vpack.c.b16 %v3792, %v3782
    %v4743 = vpack.c.b16 %v3793, %v3783
    %v4744 = vpack.c.b16 %v3794, %v3784
    %v4745 = vpack.c.b16 %v3805, %v3795
    %v4746 = vpack.c.b16 %v3806, %v3796
    %v4747 = vpack.c.b16 %v3807, %v3797
    %v4748 = vpack.c.b16 %v3808, %v3798
    %v4749 = vpack.c.b16 %v3809, %v3799
    %v4750 = vpack.c.b16 %v3810, %v3800
    %v4751 = vpack.c.b16 %v3811, %v3801
    %v4752 = vpack.c.b16 %v3812, %v3802
    %v4753 = vpack.c.b16 %v3813, %v3803
    %v4754 = vpack.c.b16 %v3814, %v3804
    %v4755 = vpack.c.b16 %v3825, %v3815
    %v4756 = vpack.c.b16 %v3826, %v3816
    %v4757 = vpack.c.b16 %v3827, %v3817
    %v4758 = vpack.c.b16 %v3828, %v3818
    %v4759 = vpack.c.b16 %v3829, %v3819
    %v4760 = vpack.c.b16 %v3830, %v3820
    %v4761 = vpack.c.b16 %v3831, %v3821
    %v4762 = vpack.c.b16 %v3832, %v3822
    %v4763 = vpack.c.b16 %v3833, %v3823
    %v4764 = vpack.c.b16 %v3834, %v3824
    %v4765 = vpack.c.b16 %v3845, %v3835
    %v4766 = vpack.c.b16 %v3846, %v3836
    %v4767 = vpack.c.b16 %v3847, %v3837
    %v4768 = vpack.c.b16 %v3848, %v3838
    %v4769 = vpack.c.b16 %v3849, %v3839
    %v4770 = vpack.c.b16 %v3850, %v3840
    %v4771 = vpack.c.b16 %v3851, %v3841
    %v4772 = vpack.c.b16 %v3852, %v3842
    %v4773 = vpack.c.b16 %v3853, %v3843
    %v4774 = vpack.c.b16 %v3854, %v3844
    %v4775 = vpack.c.b16 %v3865, %v3855
    %v4776 = vpack.c.b16 %v3866, %v3856
    %v4777 = vpack.c.b16 %v3867, %v3857
    %v4778 = vpack.c.b16 %v3868, %v3858
    %v4779 = vpack.c.b16 %v3869, %v3859
    %v4780 = vpack.c.b16 %v3870, %v3860
    %v4781 = vpack.c.b16 %v3871, %v3861
    %v4782 = vpack.c.b16 %v3872, %v3862
    %v4783 = vpack.c.b16 %v3873, %v3863
    %v4784 = vpack.c.b16 %v3874, %v3864
    %v4785 = vpack.c.b16 %v3885, %v3875
    %v4786 = vpack.c.b16 %v3886, %v3876
    %v4787 = vpack.c.b16 %v3887, %v3877
    %v4788 = vpack.c.b16 %v3888, %v3878
    %v4789 = vpack.c.b16 %v3889, %v3879
    %v4790 = vpack.c.b16 %v3890, %v3880
    %v4791 = vpack.c.b16 %v3891, %v3881
    %v4792 = vpack.c.b16 %v3892, %v3882
    %v4793 = vpack.c.b16 %v3893, %v3883
    %v4794 = vpack.c.b16 %v3894, %v3884
    %v4795 = vpack.c.b16 %v3905, %v3895
    %v4796 = vpack.c.b16 %v3906, %v3896
    %v4797 = vpack.c.b16 %v3907, %v3897
    %v4798 = vpack.c.b16 %v3908, %v3898
    %v4799 = vpack.c.b16 %v3909, %v3899
    %v4800 = vpack.c.b16 %v3910, %v3900
    %v4801 = vpack.c.b16 %v3911, %v3901
    %v4802 = vpack.c.b16 %v3912, %v3902
    %v4803 = vpack.c.b16 %v3913, %v3903
    %v4804 = vpack.c.b16 %v3914, %v3904
    %v4805 = vpack.c.b16 %v3925, %v3915
    %v4806 = vpack.c.b16 %v3926, %v3916
    %v4807 = vpack.c.b16 %v3927, %v3917
    %v4808 = vpack.c.b16 %v3928, %v3918
    %v4809 = vpack.c.b16 %v3929, %v3919
    %v4810 = vpack.c.b16 %v3930, %v3920
    %v4811 = vpack.c.b16 %v3931, %v3921
    %v4812 = vpack.c.b16 %v3932, %v3922
    %v4813 = vpack.c.b16 %v3933, %v3923
    %v4814 = vpack.c.b16 %v3934, %v3924
    %v4815 = vpack.c.b16 %v3945, %v3935
    %v4816 = vpack.c.b16 %v3946, %v3936
    %v4817 = vpack.c.b16 %v3947, %v3937
    %v4818 = vpack.c.b16 %v3948, %v3938
    %v4819 = vpack.c.b16 %v3949, %v3939
    %v4820 = vpack.c.b16 %v3950, %v3940
    %v4821 = vpack.c.b16 %v3951, %v3941
    %v4822 = vpack.c.b16 %v3952, %v3942
    %v4823 = vpack.c.b16 %v3953, %v3943
    %v4824 = vpack.c.b16 %v3954, %v3944
    %v4825 = vpack.c.b16 %v3965, %v3955
    %v4826 = vpack.c.b16 %v3966, %v3956
    %v4827 = vpack.c.b16 %v3967, %v3957
    %v4828 = vpack.c.b16 %v3968, %v3958
    %v4829 = vpack.c.b16 %v3969, %v3959
    %v4830 = vpack.c.b16 %v3970, %v3960
    %v4831 = vpack.c.b16 %v3971, %v3961
    %v4832 = vpack.c.b16 %v3972, %v3962
    %v4833 = vpack.c.b16 %v3973, %v3963
    %v4834 = vpack.c.b16 %v3974, %v3964
    %v4835 = vpack.c.b16 %v3985, %v3975
    %v4836 = vpack.c.b16 %v3986, %v3976
    %v4837 = vpack.c.b16 %v3987, %v3977
    %v4838 = vpack.c.b16 %v3988, %v3978
    %v4839 = vpack.c.b16 %v3989, %v3979
    %v4840 = vpack.c.b16 %v3990, %v3980
    %v4841 = vpack.c.b16 %v3991, %v3981
    %v4842 = vpack.c.b16 %v3992, %v3982
    %v4843 = vpack.c.b16 %v3993, %v3983
    %v4844 = vpack.c.b16 %v3994, %v3984
    %v4845 = vpack.c.b16 %v4005, %v3995
    %v4846 = vpack.c.b16 %v4006, %v3996
    %v4847 = vpack.c.b16 %v4007, %v3997
    %v4848 = vpack.c.b16 %v4008, %v3998
    %v4849 = vpack.c.b16 %v4009, %v3999
    %v4850 = vpack.c.b16 %v4010, %v4000
    %v4851 = vpack.c.b16 %v4011, %v4001
    %v4852 = vpack.c.b16 %v4012, %v4002
    %v4853 = vpack.c.b16 %v4013, %v4003
    %v4854 = vpack.c.b16 %v4014, %v4004
    %v4855 = vpack.c.b16 %v4025, %v4015
    %v4856 = vpack.c.b16 %v4026, %v4016
    %v4857 = vpack.c.b16 %v4027, %v4017
    %v4858 = vpack.c.b16 %v4028, %v4018
    %v4859 = vpack.c.b16 %v4029, %v4019
    %v4860 = vpack.c.b16 %v4030, %v4020
    %v4861 = vpack.c.b16 %v4031, %v4021
    %v4862 = vpack.c.b16 %v4032, %v4022
    %v4863 = vpack.c.b16 %v4033, %v4023
    %v4864 = vpack.c.b16 %v4034, %v4024
    %v4865 = vpack.c.b16 %v4045, %v4035
    %v4866 = vpack.c.b16 %v4046, %v4036
    %v4867 = vpack.c.b16 %v4047, %v4037
    %v4868 = vpack.c.b16 %v4048, %v4038
    %v4869 = vpack.c.b16 %v4049, %v4039
    %v4870 = vpack.c.b16 %v4050, %v4040
    %v4871 = vpack.c.b16 %v4051, %v4041
    %v4872 = vpack.c.b16 %v4052, %v4042
    %v4873 = vpack.c.b16 %v4053, %v4043
    %v4874 = vpack.c.b16 %v4054, %v4044
    %v4875 = vpack.c.b16 %v4065, %v4055
    %v4876 = vpack.c.b16 %v4066, %v4056
    %v4877 = vpack.c.b16 %v4067, %v4057
    %v4878 = vpack.c.b16 %v4068, %v4058
    %v4879 = vpack.c.b16 %v4069, %v4059
    %v4880 = vpack.c.b16 %v4070, %v4060
    %v4881 = vpack.c.b16 %v4071, %v4061
    %v4882 = vpack.c.b16 %v4072, %v4062
    %v4883 = vpack.c.b16 %v4073, %v4063
    %v4884 = vpack.c.b16 %v4074, %v4064
    %v4885 = vpack.c.b16 %v4085, %v4075
    %v4886 = vpack.c.b16 %v4086, %v4076
    %v4887 = vpack.c.b16 %v4087, %v4077
    %v4888 = vpack.c.b16 %v4088, %v4078
    %v4889 = vpack.c.b16 %v4089, %v4079
    %v4890 = vpack.c.b16 %v4090, %v4080
    %v4891 = vpack.c.b16 %v4091, %v4081
    %v4892 = vpack.c.b16 %v4092, %v4082
    %v4893 = vpack.c.b16 %v4093, %v4083
    %v4894 = vpack.c.b16 %v4094, %v4084
    %5695 = vmatprep.subr.bf16.mxu0 %v4096
    %5696 = vmatpush1.bf16.msra.mxu0 %v4095
    %5697 = vmatprep.subr.bf16.mxu0 %v4106
    %5698 = vmatpush1.bf16.msra.mxu0 %v4105
    %5699 = vmatprep.subr.bf16.mxu0 %v4116
    %5700 = vmatpush1.bf16.msra.mxu0 %v4115
    %5701 = vmatprep.subr.bf16.mxu0 %v4126
    %5702 = vmatpush1.bf16.msra.mxu0 %v4125
    %5703 = vmatprep.subr.bf16.mxu0 %v4136
    %5704 = vmatpush1.bf16.msra.mxu0 %v4135
    %5705 = vmatprep.subr.bf16.mxu0 %v4146
    %5706 = vmatpush1.bf16.msra.mxu0 %v4145
    %5707 = vmatprep.subr.bf16.mxu0 %v4156
    %5708 = vmatpush1.bf16.msra.mxu0 %v4155
    %5709 = vmatprep.subr.bf16.mxu0 %v4166
    %5710 = vmatpush1.bf16.msra.mxu0 %v4165
    %5711 = vmatprep.subr.bf16.mxu0 %v4176
    %5712 = vmatpush1.bf16.msra.mxu0 %v4175
    %5713 = vmatprep.subr.bf16.mxu0 %v4186
    %5714 = vmatpush1.bf16.msra.mxu0 %v4185
    %5715 = vmatprep.subr.bf16.mxu0 %v4196
    %5716 = vmatpush1.bf16.msra.mxu0 %v4195
    %5717 = vmatprep.subr.bf16.mxu0 %v4206
    %5718 = vmatpush1.bf16.msra.mxu0 %v4205
    %5719 = vmatprep.subr.bf16.mxu0 %v4216
    %5720 = vmatpush1.bf16.msra.mxu0 %v4215
    %5721 = vmatprep.subr.bf16.mxu0 %v4226
    %5722 = vmatpush1.bf16.msra.mxu0 %v4225
    %5723 = vmatprep.subr.bf16.mxu0 %v4236
    %5724 = vmatpush1.bf16.msra.mxu0 %v4235
    %5725 = vmatprep.subr.bf16.mxu0 %v4246
    %5726 = vmatpush1.bf16.msra.mxu0 %v4245
    %5727 = vmatprep.mubr.bf16.mxu0 %v832
    %5728 = vmatmul.mubr.bf16.gmra.mrb[0].mxu0 %v831
    %v5729 = vpop.f32.mrb[0].mxu0
    %v5730 = vadd.f32 %v1648, %v5729
    %v5731 = vpop.f32.mrb[0].mxu0
    %v5732 = vadd.f32 %v1652, %v5731
    %v5733 = vpop.f32.mrb[0].mxu0
    %v5734 = vpop.f32.mrb[0].mxu0
    %5735 = vdwg.mxu0
    %5736 = vmatprep.subr.bf16.mxu0 %v4256
    %5737 = vmatpush1.bf16.msra.mxu0 %v4255
    %5738 = vmatprep.subr.bf16.mxu0 %v4266
    %5739 = vmatpush1.bf16.msra.mxu0 %v4265
    %5740 = vmatprep.subr.bf16.mxu0 %v4276
    %5741 = vmatpush1.bf16.msra.mxu0 %v4275
    %5742 = vmatprep.subr.bf16.mxu0 %v4286
    %5743 = vmatpush1.bf16.msra.mxu0 %v4285
    %5744 = vmatprep.subr.bf16.mxu0 %v4296
    %5745 = vmatpush1.bf16.msra.mxu0 %v4295
    %5746 = vmatprep.subr.bf16.mxu0 %v4306
    %5747 = vmatpush1.bf16.msra.mxu0 %v4305
    %5748 = vmatprep.subr.bf16.mxu0 %v4316
    %5749 = vmatpush1.bf16.msra.mxu0 %v4315
    %5750 = vmatprep.subr.bf16.mxu0 %v4326
    %5751 = vmatpush1.bf16.msra.mxu0 %v4325
    %5752 = vmatprep.subr.bf16.mxu0 %v4336
    %5753 = vmatpush1.bf16.msra.mxu0 %v4335
    %5754 = vmatprep.subr.bf16.mxu0 %v4346
    %5755 = vmatpush1.bf16.msra.mxu0 %v4345
    %5756 = vmatprep.subr.bf16.mxu0 %v4356
    %5757 = vmatpush1.bf16.msra.mxu0 %v4355
    %5758 = vmatprep.subr.bf16.mxu0 %v4366
    %5759 = vmatpush1.bf16.msra.mxu0 %v4365
    %5760 = vmatprep.subr.bf16.mxu0 %v4376
    %5761 = vmatpush1.bf16.msra.mxu0 %v4375
    %5762 = vmatprep.subr.bf16.mxu0 %v4386
    %5763 = vmatpush1.bf16.msra.mxu0 %v4385
    %5764 = vmatprep.subr.bf16.mxu0 %v4396
    %5765 = vmatpush1.bf16.msra.mxu0 %v4395
    %5766 = vmatprep.subr.bf16.mxu0 %v4406
    %5767 = vmatpush1.bf16.msra.mxu0 %v4405
    %5768 = vmatprep.mubr.bf16.mxu0 %v834
    %5769 = vmatmul.mubr.bf16.gmra.mrb[0].mxu0 %v833
    %v5770 = vpop.f32.mrb[0].mxu0
    %v5771 = vadd.f32 %v5730, %v5770
    %v5772 = vpop.f32.mrb[0].mxu0
    %v5773 = vadd.f32 %v5732, %v5772
    %v5774 = vpop.f32.mrb[0].mxu0
    %v5775 = vpop.f32.mrb[0].mxu0
    %5776 = vdwg.mxu0
    %5777 = vmatprep.subr.bf16.mxu0 %v4416
    %5778 = vmatpush1.bf16.msra.mxu0 %v4415
    %5779 = vmatprep.subr.bf16.mxu0 %v4426
    %5780 = vmatpush1.bf16.msra.mxu0 %v4425
    %5781 = vmatprep.subr.bf16.mxu0 %v4436
    %5782 = vmatpush1.bf16.msra.mxu0 %v4435
    %5783 = vmatprep.subr.bf16.mxu0 %v4446
    %5784 = vmatpush1.bf16.msra.mxu0 %v4445
    %5785 = vmatprep.subr.bf16.mxu0 %v4456
    %5786 = vmatpush1.bf16.msra.mxu0 %v4455
    %5787 = vmatprep.subr.bf16.mxu0 %v4466
    %5788 = vmatpush1.bf16.msra.mxu0 %v4465
    %5789 = vmatprep.subr.bf16.mxu0 %v4476
    %5790 = vmatpush1.bf16.msra.mxu0 %v4475
    %5791 = vmatprep.subr.bf16.mxu0 %v4486
    %5792 = vmatpush1.bf16.msra.mxu0 %v4485
    %5793 = vmatprep.subr.bf16.mxu0 %v4496
    %5794 = vmatpush1.bf16.msra.mxu0 %v4495
    %5795 = vmatprep.subr.bf16.mxu0 %v4506
    %5796 = vmatpush1.bf16.msra.mxu0 %v4505
    %5797 = vmatprep.subr.bf16.mxu0 %v4516
    %5798 = vmatpush1.bf16.msra.mxu0 %v4515
    %5799 = vmatprep.subr.bf16.mxu0 %v4526
    %5800 = vmatpush1.bf16.msra.mxu0 %v4525
    %5801 = vmatprep.subr.bf16.mxu0 %v4536
    %5802 = vmatpush1.bf16.msra.mxu0 %v4535
    %5803 = vmatprep.subr.bf16.mxu0 %v4546
    %5804 = vmatpush1.bf16.msra.mxu0 %v4545
    %5805 = vmatprep.subr.bf16.mxu0 %v4556
    %5806 = vmatpush1.bf16.msra.mxu0 %v4555
    %5807 = vmatprep.subr.bf16.mxu0 %v4566
    %5808 = vmatpush1.bf16.msra.mxu0 %v4565
    %5809 = vmatprep.mubr.bf16.mxu0 %v836
    %5810 = vmatmul.mubr.bf16.gmra.mrb[0].mxu0 %v835
    %v5811 = vpop.f32.mrb[0].mxu0
    %v5812 = vadd.f32 %v5771, %v5811
    %v5813 = vpop.f32.mrb[0].mxu0
    %v5814 = vadd.f32 %v5773, %v5813
    %v5815 = vpop.f32.mrb[0].mxu0
    %v5816 = vpop.f32.mrb[0].mxu0
    %5817 = vdwg.mxu0
    %5818 = vmatprep.subr.bf16.mxu0 %v4576
    %5819 = vmatpush1.bf16.msra.mxu0 %v4575
    %5820 = vmatprep.subr.bf16.mxu0 %v4586
    %5821 = vmatpush1.bf16.msra.mxu0 %v4585
    %5822 = vmatprep.subr.bf16.mxu0 %v4596
    %5823 = vmatpush1.bf16.msra.mxu0 %v4595
    %5824 = vmatprep.subr.bf16.mxu0 %v4606
    %5825 = vmatpush1.bf16.msra.mxu0 %v4605
    %5826 = vmatprep.subr.bf16.mxu0 %v4616
    %5827 = vmatpush1.bf16.msra.mxu0 %v4615
    %5828 = vmatprep.subr.bf16.mxu0 %v4626
    %5829 = vmatpush1.bf16.msra.mxu0 %v4625
    %5830 = vmatprep.subr.bf16.mxu0 %v4636
    %5831 = vmatpush1.bf16.msra.mxu0 %v4635
    %5832 = vmatprep.subr.bf16.mxu0 %v4646
    %5833 = vmatpush1.bf16.msra.mxu0 %v4645
    %5834 = vmatprep.subr.bf16.mxu0 %v4656
    %5835 = vmatpush1.bf16.msra.mxu0 %v4655
    %5836 = vmatprep.subr.bf16.mxu0 %v4666
    %5837 = vmatpush1.bf16.msra.mxu0 %v4665
    %5838 = vmatprep.subr.bf16.mxu0 %v4676
    %5839 = vmatpush1.bf16.msra.mxu0 %v4675
    %5840 = vmatprep.subr.bf16.mxu0 %v4686
    %5841 = vmatpush1.bf16.msra.mxu0 %v4685
    %5842 = vmatprep.subr.bf16.mxu0 %v4696
    %5843 = vmatpush1.bf16.msra.mxu0 %v4695
    %5844 = vmatprep.subr.bf16.mxu0 %v4706
    %5845 = vmatpush1.bf16.msra.mxu0 %v4705
    %5846 = vmatprep.subr.bf16.mxu0 %v4716
    %5847 = vmatpush1.bf16.msra.mxu0 %v4715
    %5848 = vmatprep.subr.bf16.mxu0 %v4726
    %5849 = vmatpush1.bf16.msra.mxu0 %v4725
    %5850 = vmatprep.mubr.bf16.mxu0 %v838
    %5851 = vmatmul.mubr.bf16.gmra.mrb[0].mxu0 %v837
    %v5852 = vpop.f32.mrb[0].mxu0
    %v5853 = vadd.f32 %v5812, %v5852
    %v5854 = vpop.f32.mrb[0].mxu0
    %v5855 = vadd.f32 %v5814, %v5854
    %v5856 = vpop.f32.mrb[0].mxu0
    %v5857 = vpop.f32.mrb[0].mxu0
    %5858 = vdwg.mxu0
    %5859 = vmatprep.subr.bf16.mxu0 %v4736
    %5860 = vmatpush1.bf16.msra.mxu0 %v4735
    %5861 = vmatprep.subr.bf16.mxu0 %v4746
    %5862 = vmatpush1.bf16.msra.mxu0 %v4745
    %5863 = vmatprep.subr.bf16.mxu0 %v4756
    %5864 = vmatpush1.bf16.msra.mxu0 %v4755
    %5865 = vmatprep.subr.bf16.mxu0 %v4766
    %5866 = vmatpush1.bf16.msra.mxu0 %v4765
    %5867 = vmatprep.subr.bf16.mxu0 %v4776
    %5868 = vmatpush1.bf16.msra.mxu0 %v4775
    %5869 = vmatprep.subr.bf16.mxu0 %v4786
    %5870 = vmatpush1.bf16.msra.mxu0 %v4785
    %5871 = vmatprep.subr.bf16.mxu0 %v4796
    %5872 = vmatpush1.bf16.msra.mxu0 %v4795
    %5873 = vmatprep.subr.bf16.mxu0 %v4806
    %5874 = vmatpush1.bf16.msra.mxu0 %v4805
    %5875 = vmatprep.subr.bf16.mxu0 %v4816
    %5876 = vmatpush1.bf16.msra.mxu0 %v4815
    %5877 = vmatprep.subr.bf16.mxu0 %v4826
    %5878 = vmatpush1.bf16.msra.mxu0 %v4825
    %5879 = vmatprep.subr.bf16.mxu0 %v4836
    %5880 = vmatpush1.bf16.msra.mxu0 %v4835
    %5881 = vmatprep.subr.bf16.mxu0 %v4846
    %5882 = vmatpush1.bf16.msra.mxu0 %v4845
    %5883 = vmatprep.subr.bf16.mxu0 %v4856
    %5884 = vmatpush1.bf16.msra.mxu0 %v4855
    %5885 = vmatprep.subr.bf16.mxu0 %v4866
    %5886 = vmatpush1.bf16.msra.mxu0 %v4865
    %5887 = vmatprep.subr.bf16.mxu0 %v4876
    %5888 = vmatpush1.bf16.msra.mxu0 %v4875
    %5889 = vmatprep.subr.bf16.mxu0 %v4886
    %5890 = vmatpush1.bf16.msra.mxu0 %v4885
    %5891 = vmatprep.mubr.bf16.mxu0 %v840
    %5892 = vmatmul.mubr.bf16.gmra.mrb[0].mxu0 %v839
    %v5893 = vpop.f32.mrb[0].mxu0
    %v5894 = vadd.f32 %v5853, %v5893
    %v5895 = vpop.f32.mrb[0].mxu0
    %v5896 = vadd.f32 %v5855, %v5895
    %v5897 = vpop.f32.mrb[0].mxu0
    %v5898 = vpop.f32.mrb[0].mxu0
    %5899 = vdwg.mxu0
    %5900 = vmatprep.subr.bf16.mxu0 %v4098
    %5901 = vmatpush1.bf16.msra.mxu0 %v4097
    %5902 = vmatprep.subr.bf16.mxu0 %v4108
    %5903 = vmatpush1.bf16.msra.mxu0 %v4107
    %5904 = vmatprep.subr.bf16.mxu0 %v4118
    %5905 = vmatpush1.bf16.msra.mxu0 %v4117
    %5906 = vmatprep.subr.bf16.mxu0 %v4128
    %5907 = vmatpush1.bf16.msra.mxu0 %v4127
    %5908 = vmatprep.subr.bf16.mxu0 %v4138
    %5909 = vmatpush1.bf16.msra.mxu0 %v4137
    %5910 = vmatprep.subr.bf16.mxu0 %v4148
    %5911 = vmatpush1.bf16.msra.mxu0 %v4147
    %5912 = vmatprep.subr.bf16.mxu0 %v4158
    %5913 = vmatpush1.bf16.msra.mxu0 %v4157
    %5914 = vmatprep.subr.bf16.mxu0 %v4168
    %5915 = vmatpush1.bf16.msra.mxu0 %v4167
    %5916 = vmatprep.subr.bf16.mxu0 %v4178
    %5917 = vmatpush1.bf16.msra.mxu0 %v4177
    %5918 = vmatprep.subr.bf16.mxu0 %v4188
    %5919 = vmatpush1.bf16.msra.mxu0 %v4187
    %5920 = vmatprep.subr.bf16.mxu0 %v4198
    %5921 = vmatpush1.bf16.msra.mxu0 %v4197
    %5922 = vmatprep.subr.bf16.mxu0 %v4208
    %5923 = vmatpush1.bf16.msra.mxu0 %v4207
    %5924 = vmatprep.subr.bf16.mxu0 %v4218
    %5925 = vmatpush1.bf16.msra.mxu0 %v4217
    %5926 = vmatprep.subr.bf16.mxu0 %v4228
    %5927 = vmatpush1.bf16.msra.mxu0 %v4227
    %5928 = vmatprep.subr.bf16.mxu0 %v4238
    %5929 = vmatpush1.bf16.msra.mxu0 %v4237
    %5930 = vmatprep.subr.bf16.mxu0 %v4248
    %5931 = vmatpush1.bf16.msra.mxu0 %v4247
    %5932 = vmatprep.mubr.bf16.mxu0 %v832
    %5933 = vmatmul.mubr.bf16.gmra.mrb[0].mxu0 %v831
    %v5934 = vpop.f32.mrb[0].mxu0
    %v5935 = vadd.f32 %v1656, %v5934
    %v5936 = vpop.f32.mrb[0].mxu0
    %v5937 = vadd.f32 %v1660, %v5936
    %v5938 = vpop.f32.mrb[0].mxu0
    %v5939 = vpop.f32.mrb[0].mxu0
    %5940 = vdwg.mxu0
    %5941 = vmatprep.subr.bf16.mxu0 %v4258
    %5942 = vmatpush1.bf16.msra.mxu0 %v4257
    %5943 = vmatprep.subr.bf16.mxu0 %v4268
    %5944 = vmatpush1.bf16.msra.mxu0 %v4267
    %5945 = vmatprep.subr.bf16.mxu0 %v4278
    %5946 = vmatpush1.bf16.msra.mxu0 %v4277
    %5947 = vmatprep.subr.bf16.mxu0 %v4288
    %5948 = vmatpush1.bf16.msra.mxu0 %v4287
    %5949 = vmatprep.subr.bf16.mxu0 %v4298
    %5950 = vmatpush1.bf16.msra.mxu0 %v4297
    %5951 = vmatprep.subr.bf16.mxu0 %v4308
    %5952 = vmatpush1.bf16.msra.mxu0 %v4307
    %5953 = vmatprep.subr.bf16.mxu0 %v4318
    %5954 = vmatpush1.bf16.msra.mxu0 %v4317
    %5955 = vmatprep.subr.bf16.mxu0 %v4328
    %5956 = vmatpush1.bf16.msra.mxu0 %v4327
    %5957 = vmatprep.subr.bf16.mxu0 %v4338
    %5958 = vmatpush1.bf16.msra.mxu0 %v4337
    %5959 = vmatprep.subr.bf16.mxu0 %v4348
    %5960 = vmatpush1.bf16.msra.mxu0 %v4347
    %5961 = vmatprep.subr.bf16.mxu0 %v4358
    %5962 = vmatpush1.bf16.msra.mxu0 %v4357
    %5963 = vmatprep.subr.bf16.mxu0 %v4368
    %5964 = vmatpush1.bf16.msra.mxu0 %v4367
    %5965 = vmatprep.subr.bf16.mxu0 %v4378
    %5966 = vmatpush1.bf16.msra.mxu0 %v4377
    %5967 = vmatprep.subr.bf16.mxu0 %v4388
    %5968 = vmatpush1.bf16.msra.mxu0 %v4387
    %5969 = vmatprep.subr.bf16.mxu0 %v4398
    %5970 = vmatpush1.bf16.msra.mxu0 %v4397
    %5971 = vmatprep.subr.bf16.mxu0 %v4408
    %5972 = vmatpush1.bf16.msra.mxu0 %v4407
    %5973 = vmatprep.mubr.bf16.mxu0 %v834
    %5974 = vmatmul.mubr.bf16.gmra.mrb[0].mxu0 %v833
    %v5975 = vpop.f32.mrb[0].mxu0
    %v5976 = vadd.f32 %v5935, %v5975
    %v5977 = vpop.f32.mrb[0].mxu0
    %v5978 = vadd.f32 %v5937, %v5977
    %v5979 = vpop.f32.mrb[0].mxu0
    %v5980 = vpop.f32.mrb[0].mxu0
    %5981 = vdwg.mxu0
    %5982 = vmatprep.subr.bf16.mxu0 %v4418
    %5983 = vmatpush1.bf16.msra.mxu0 %v4417
    %5984 = vmatprep.subr.bf16.mxu0 %v4428
    %5985 = vmatpush1.bf16.msra.mxu0 %v4427
    %5986 = vmatprep.subr.bf16.mxu0 %v4438
    %5987 = vmatpush1.bf16.msra.mxu0 %v4437
    %5988 = vmatprep.subr.bf16.mxu0 %v4448
    %5989 = vmatpush1.bf16.msra.mxu0 %v4447
    %5990 = vmatprep.subr.bf16.mxu0 %v4458
    %5991 = vmatpush1.bf16.msra.mxu0 %v4457
    %5992 = vmatprep.subr.bf16.mxu0 %v4468
    %5993 = vmatpush1.bf16.msra.mxu0 %v4467
    %5994 = vmatprep.subr.bf16.mxu0 %v4478
    %5995 = vmatpush1.bf16.msra.mxu0 %v4477
    %5996 = vmatprep.subr.bf16.mxu0 %v4488
    %5997 = vmatpush1.bf16.msra.mxu0 %v4487
    %5998 = vmatprep.subr.bf16.mxu0 %v4498
    %5999 = vmatpush1.bf16.msra.mxu0 %v4497
    %6000 = vmatprep.subr.bf16.mxu0 %v4508
    %6001 = vmatpush1.bf16.msra.mxu0 %v4507
    %6002 = vmatprep.subr.bf16.mxu0 %v4518
    %6003 = vmatpush1.bf16.msra.mxu0 %v4517
    %6004 = vmatprep.subr.bf16.mxu0 %v4528
    %6005 = vmatpush1.bf16.msra.mxu0 %v4527
    %6006 = vmatprep.subr.bf16.mxu0 %v4538
    %6007 = vmatpush1.bf16.msra.mxu0 %v4537
    %6008 = vmatprep.subr.bf16.mxu0 %v4548
    %6009 = vmatpush1.bf16.msra.mxu0 %v4547
    %6010 = vmatprep.subr.bf16.mxu0 %v4558
    %6011 = vmatpush1.bf16.msra.mxu0 %v4557
    %6012 = vmatprep.subr.bf16.mxu0 %v4568
    %6013 = vmatpush1.bf16.msra.mxu0 %v4567
    %6014 = vmatprep.mubr.bf16.mxu0 %v836
    %6015 = vmatmul.mubr.bf16.gmra.mrb[0].mxu0 %v835
    %v6016 = vpop.f32.mrb[0].mxu0
    %v6017 = vadd.f32 %v5976, %v6016
    %v6018 = vpop.f32.mrb[0].mxu0
    %v6019 = vadd.f32 %v5978, %v6018
    %v6020 = vpop.f32.mrb[0].mxu0
    %v6021 = vpop.f32.mrb[0].mxu0
    %6022 = vdwg.mxu0
    %6023 = vmatprep.subr.bf16.mxu0 %v4578
    %6024 = vmatpush1.bf16.msra.mxu0 %v4577
    %6025 = vmatprep.subr.bf16.mxu0 %v4588
    %6026 = vmatpush1.bf16.msra.mxu0 %v4587
    %6027 = vmatprep.subr.bf16.mxu0 %v4598
    %6028 = vmatpush1.bf16.msra.mxu0 %v4597
    %6029 = vmatprep.subr.bf16.mxu0 %v4608
    %6030 = vmatpush1.bf16.msra.mxu0 %v4607
    %6031 = vmatprep.subr.bf16.mxu0 %v4618
    %6032 = vmatpush1.bf16.msra.mxu0 %v4617
    %6033 = vmatprep.subr.bf16.mxu0 %v4628
    %6034 = vmatpush1.bf16.msra.mxu0 %v4627
    %6035 = vmatprep.subr.bf16.mxu0 %v4638
    %6036 = vmatpush1.bf16.msra.mxu0 %v4637
    %6037 = vmatprep.subr.bf16.mxu0 %v4648
    %6038 = vmatpush1.bf16.msra.mxu0 %v4647
    %6039 = vmatprep.subr.bf16.mxu0 %v4658
    %6040 = vmatpush1.bf16.msra.mxu0 %v4657
    %6041 = vmatprep.subr.bf16.mxu0 %v4668
    %6042 = vmatpush1.bf16.msra.mxu0 %v4667
    %6043 = vmatprep.subr.bf16.mxu0 %v4678
    %6044 = vmatpush1.bf16.msra.mxu0 %v4677
    %6045 = vmatprep.subr.bf16.mxu0 %v4688
    %6046 = vmatpush1.bf16.msra.mxu0 %v4687
    %6047 = vmatprep.subr.bf16.mxu0 %v4698
    %6048 = vmatpush1.bf16.msra.mxu0 %v4697
    %6049 = vmatprep.subr.bf16.mxu0 %v4708
    %6050 = vmatpush1.bf16.msra.mxu0 %v4707
    %6051 = vmatprep.subr.bf16.mxu0 %v4718
    %6052 = vmatpush1.bf16.msra.mxu0 %v4717
    %6053 = vmatprep.subr.bf16.mxu0 %v4728
    %6054 = vmatpush1.bf16.msra.mxu0 %v4727
    %6055 = vmatprep.mubr.bf16.mxu0 %v838
    %6056 = vmatmul.mubr.bf16.gmra.mrb[0].mxu0 %v837
    %v6057 = vpop.f32.mrb[0].mxu0
    %v6058 = vadd.f32 %v6017, %v6057
    %v6059 = vpop.f32.mrb[0].mxu0
    %v6060 = vadd.f32 %v6019, %v6059
    %v6061 = vpop.f32.mrb[0].mxu0
    %v6062 = vpop.f32.mrb[0].mxu0
    %6063 = vdwg.mxu0
    %6064 = vmatprep.subr.bf16.mxu0 %v4738
    %6065 = vmatpush1.bf16.msra.mxu0 %v4737
    %6066 = vmatprep.subr.bf16.mxu0 %v4748
    %6067 = vmatpush1.bf16.msra.mxu0 %v4747
    %6068 = vmatprep.subr.bf16.mxu0 %v4758
    %6069 = vmatpush1.bf16.msra.mxu0 %v4757
    %6070 = vmatprep.subr.bf16.mxu0 %v4768
    %6071 = vmatpush1.bf16.msra.mxu0 %v4767
    %6072 = vmatprep.subr.bf16.mxu0 %v4778
    %6073 = vmatpush1.bf16.msra.mxu0 %v4777
    %6074 = vmatprep.subr.bf16.mxu0 %v4788
    %6075 = vmatpush1.bf16.msra.mxu0 %v4787
    %6076 = vmatprep.subr.bf16.mxu0 %v4798
    %6077 = vmatpush1.bf16.msra.mxu0 %v4797
    %6078 = vmatprep.subr.bf16.mxu0 %v4808
    %6079 = vmatpush1.bf16.msra.mxu0 %v4807
    %6080 = vmatprep.subr.bf16.mxu0 %v4818
    %6081 = vmatpush1.bf16.msra.mxu0 %v4817
    %6082 = vmatprep.subr.bf16.mxu0 %v4828
    %6083 = vmatpush1.bf16.msra.mxu0 %v4827
    %6084 = vmatprep.subr.bf16.mxu0 %v4838
    %6085 = vmatpush1.bf16.msra.mxu0 %v4837
    %6086 = vmatprep.subr.bf16.mxu0 %v4848
    %6087 = vmatpush1.bf16.msra.mxu0 %v4847
    %6088 = vmatprep.subr.bf16.mxu0 %v4858
    %6089 = vmatpush1.bf16.msra.mxu0 %v4857
    %6090 = vmatprep.subr.bf16.mxu0 %v4868
    %6091 = vmatpush1.bf16.msra.mxu0 %v4867
    %6092 = vmatprep.subr.bf16.mxu0 %v4878
    %6093 = vmatpush1.bf16.msra.mxu0 %v4877
    %6094 = vmatprep.subr.bf16.mxu0 %v4888
    %6095 = vmatpush1.bf16.msra.mxu0 %v4887
    %6096 = vmatprep.mubr.bf16.mxu0 %v840
    %6097 = vmatmul.mubr.bf16.gmra.mrb[0].mxu0 %v839
    %v6098 = vpop.f32.mrb[0].mxu0
    %v6099 = vadd.f32 %v6058, %v6098
    %v6100 = vpop.f32.mrb[0].mxu0
    %v6101 = vadd.f32 %v6060, %v6100
    %v6102 = vpop.f32.mrb[0].mxu0
    %v6103 = vpop.f32.mrb[0].mxu0
    %6104 = vdwg.mxu0
    %6105 = vmatprep.subr.bf16.mxu0 %v4100
    %6106 = vmatpush1.bf16.msra.mxu0 %v4099
    %6107 = vmatprep.subr.bf16.mxu0 %v4110
    %6108 = vmatpush1.bf16.msra.mxu0 %v4109
    %6109 = vmatprep.subr.bf16.mxu0 %v4120
    %6110 = vmatpush1.bf16.msra.mxu0 %v4119
    %6111 = vmatprep.subr.bf16.mxu0 %v4130
    %6112 = vmatpush1.bf16.msra.mxu0 %v4129
    %6113 = vmatprep.subr.bf16.mxu0 %v4140
    %6114 = vmatpush1.bf16.msra.mxu0 %v4139
    %6115 = vmatprep.subr.bf16.mxu0 %v4150
    %6116 = vmatpush1.bf16.msra.mxu0 %v4149
    %6117 = vmatprep.subr.bf16.mxu0 %v4160
    %6118 = vmatpush1.bf16.msra.mxu0 %v4159
    %6119 = vmatprep.subr.bf16.mxu0 %v4170
    %6120 = vmatpush1.bf16.msra.mxu0 %v4169
    %6121 = vmatprep.subr.bf16.mxu0 %v4180
    %6122 = vmatpush1.bf16.msra.mxu0 %v4179
    %6123 = vmatprep.subr.bf16.mxu0 %v4190
    %6124 = vmatpush1.bf16.msra.mxu0 %v4189
    %6125 = vmatprep.subr.bf16.mxu0 %v4200
    %6126 = vmatpush1.bf16.msra.mxu0 %v4199
    %6127 = vmatprep.subr.bf16.mxu0 %v4210
    %6128 = vmatpush1.bf16.msra.mxu0 %v4209
    %6129 = vmatprep.subr.bf16.mxu0 %v4220
    %6130 = vmatpush1.bf16.msra.mxu0 %v4219
    %6131 = vmatprep.subr.bf16.mxu0 %v4230
    %6132 = vmatpush1.bf16.msra.mxu0 %v4229
    %6133 = vmatprep.subr.bf16.mxu0 %v4240
    %6134 = vmatpush1.bf16.msra.mxu0 %v4239
    %6135 = vmatprep.subr.bf16.mxu0 %v4250
    %6136 = vmatpush1.bf16.msra.mxu0 %v4249
    %6137 = vmatprep.mubr.bf16.mxu0 %v832
    %6138 = vmatmul.mubr.bf16.gmra.mrb[0].mxu0 %v831
    %v6139 = vpop.f32.mrb[0].mxu0
    %v6140 = vadd.f32 %v1664, %v6139
    %v6141 = vpop.f32.mrb[0].mxu0
    %v6142 = vadd.f32 %v1668, %v6141
    %v6143 = vpop.f32.mrb[0].mxu0
    %v6144 = vpop.f32.mrb[0].mxu0
    %6145 = vdwg.mxu0
    %6146 = vmatprep.subr.bf16.mxu0 %v4260
    %6147 = vmatpush1.bf16.msra.mxu0 %v4259
    %6148 = vmatprep.subr.bf16.mxu0 %v4270
    %6149 = vmatpush1.bf16.msra.mxu0 %v4269
    %6150 = vmatprep.subr.bf16.mxu0 %v4280
    %6151 = vmatpush1.bf16.msra.mxu0 %v4279
    %6152 = vmatprep.subr.bf16.mxu0 %v4290
    %6153 = vmatpush1.bf16.msra.mxu0 %v4289
    %6154 = vmatprep.subr.bf16.mxu0 %v4300
    %6155 = vmatpush1.bf16.msra.mxu0 %v4299
    %6156 = vmatprep.subr.bf16.mxu0 %v4310
    %6157 = vmatpush1.bf16.msra.mxu0 %v4309
    %6158 = vmatprep.subr.bf16.mxu0 %v4320
    %6159 = vmatpush1.bf16.msra.mxu0 %v4319
    %6160 = vmatprep.subr.bf16.mxu0 %v4330
    %6161 = vmatpush1.bf16.msra.mxu0 %v4329
    %6162 = vmatprep.subr.bf16.mxu0 %v4340
    %6163 = vmatpush1.bf16.msra.mxu0 %v4339
    %6164 = vmatprep.subr.bf16.mxu0 %v4350
    %6165 = vmatpush1.bf16.msra.mxu0 %v4349
    %6166 = vmatprep.subr.bf16.mxu0 %v4360
    %6167 = vmatpush1.bf16.msra.mxu0 %v4359
    %6168 = vmatprep.subr.bf16.mxu0 %v4370
    %6169 = vmatpush1.bf16.msra.mxu0 %v4369
    %6170 = vmatprep.subr.bf16.mxu0 %v4380
    %6171 = vmatpush1.bf16.msra.mxu0 %v4379
    %6172 = vmatprep.subr.bf16.mxu0 %v4390
    %6173 = vmatpush1.bf16.msra.mxu0 %v4389
    %6174 = vmatprep.subr.bf16.mxu0 %v4400
    %6175 = vmatpush1.bf16.msra.mxu0 %v4399
    %6176 = vmatprep.subr.bf16.mxu0 %v4410
    %6177 = vmatpush1.bf16.msra.mxu0 %v4409
    %6178 = vmatprep.mubr.bf16.mxu0 %v834
    %6179 = vmatmul.mubr.bf16.gmra.mrb[0].mxu0 %v833
    %v6180 = vpop.f32.mrb[0].mxu0
    %v6181 = vadd.f32 %v6140, %v6180
    %v6182 = vpop.f32.mrb[0].mxu0
    %v6183 = vadd.f32 %v6142, %v6182
    %v6184 = vpop.f32.mrb[0].mxu0
    %v6185 = vpop.f32.mrb[0].mxu0
    %6186 = vdwg.mxu0
    %6187 = vmatprep.subr.bf16.mxu0 %v4420
    %6188 = vmatpush1.bf16.msra.mxu0 %v4419
    %6189 = vmatprep.subr.bf16.mxu0 %v4430
    %6190 = vmatpush1.bf16.msra.mxu0 %v4429
    %6191 = vmatprep.subr.bf16.mxu0 %v4440
    %6192 = vmatpush1.bf16.msra.mxu0 %v4439
    %6193 = vmatprep.subr.bf16.mxu0 %v4450
    %6194 = vmatpush1.bf16.msra.mxu0 %v4449
    %6195 = vmatprep.subr.bf16.mxu0 %v4460
    %6196 = vmatpush1.bf16.msra.mxu0 %v4459
    %6197 = vmatprep.subr.bf16.mxu0 %v4470
    %6198 = vmatpush1.bf16.msra.mxu0 %v4469
    %6199 = vmatprep.subr.bf16.mxu0 %v4480
    %6200 = vmatpush1.bf16.msra.mxu0 %v4479
    %6201 = vmatprep.subr.bf16.mxu0 %v4490
    %6202 = vmatpush1.bf16.msra.mxu0 %v4489
    %6203 = vmatprep.subr.bf16.mxu0 %v4500
    %6204 = vmatpush1.bf16.msra.mxu0 %v4499
    %6205 = vmatprep.subr.bf16.mxu0 %v4510
    %6206 = vmatpush1.bf16.msra.mxu0 %v4509
    %6207 = vmatprep.subr.bf16.mxu0 %v4520
    %6208 = vmatpush1.bf16.msra.mxu0 %v4519
    %6209 = vmatprep.subr.bf16.mxu0 %v4530
    %6210 = vmatpush1.bf16.msra.mxu0 %v4529
    %6211 = vmatprep.subr.bf16.mxu0 %v4540
    %6212 = vmatpush1.bf16.msra.mxu0 %v4539
    %6213 = vmatprep.subr.bf16.mxu0 %v4550
    %6214 = vmatpush1.bf16.msra.mxu0 %v4549
    %6215 = vmatprep.subr.bf16.mxu0 %v4560
    %6216 = vmatpush1.bf16.msra.mxu0 %v4559
    %6217 = vmatprep.subr.bf16.mxu0 %v4570
    %6218 = vmatpush1.bf16.msra.mxu0 %v4569
    %6219 = vmatprep.mubr.bf16.mxu0 %v836
    %6220 = vmatmul.mubr.bf16.gmra.mrb[0].mxu0 %v835
    %v6221 = vpop.f32.mrb[0].mxu0
    %v6222 = vadd.f32 %v6181, %v6221
    %v6223 = vpop.f32.mrb[0].mxu0
    %v6224 = vadd.f32 %v6183, %v6223
    %v6225 = vpop.f32.mrb[0].mxu0
    %v6226 = vpop.f32.mrb[0].mxu0
    %6227 = vdwg.mxu0
    %6228 = vmatprep.subr.bf16.mxu0 %v4580
    %6229 = vmatpush1.bf16.msra.mxu0 %v4579
    %6230 = vmatprep.subr.bf16.mxu0 %v4590
    %6231 = vmatpush1.bf16.msra.mxu0 %v4589
    %6232 = vmatprep.subr.bf16.mxu0 %v4600
    %6233 = vmatpush1.bf16.msra.mxu0 %v4599
    %6234 = vmatprep.subr.bf16.mxu0 %v4610
    %6235 = vmatpush1.bf16.msra.mxu0 %v4609
    %6236 = vmatprep.subr.bf16.mxu0 %v4620
    %6237 = vmatpush1.bf16.msra.mxu0 %v4619
    %6238 = vmatprep.subr.bf16.mxu0 %v4630
    %6239 = vmatpush1.bf16.msra.mxu0 %v4629
    %6240 = vmatprep.subr.bf16.mxu0 %v4640
    %6241 = vmatpush1.bf16.msra.mxu0 %v4639
    %6242 = vmatprep.subr.bf16.mxu0 %v4650
    %6243 = vmatpush1.bf16.msra.mxu0 %v4649
    %6244 = vmatprep.subr.bf16.mxu0 %v4660
    %6245 = vmatpush1.bf16.msra.mxu0 %v4659
    %6246 = vmatprep.subr.bf16.mxu0 %v4670
    %6247 = vmatpush1.bf16.msra.mxu0 %v4669
    %6248 = vmatprep.subr.bf16.mxu0 %v4680
    %6249 = vmatpush1.bf16.msra.mxu0 %v4679
    %6250 = vmatprep.subr.bf16.mxu0 %v4690
    %6251 = vmatpush1.bf16.msra.mxu0 %v4689
    %6252 = vmatprep.subr.bf16.mxu0 %v4700
    %6253 = vmatpush1.bf16.msra.mxu0 %v4699
    %6254 = vmatprep.subr.bf16.mxu0 %v4710
    %6255 = vmatpush1.bf16.msra.mxu0 %v4709
    %6256 = vmatprep.subr.bf16.mxu0 %v4720
    %6257 = vmatpush1.bf16.msra.mxu0 %v4719
    %6258 = vmatprep.subr.bf16.mxu0 %v4730
    %6259 = vmatpush1.bf16.msra.mxu0 %v4729
    %6260 = vmatprep.mubr.bf16.mxu0 %v838
    %6261 = vmatmul.mubr.bf16.gmra.mrb[0].mxu0 %v837
    %v6262 = vpop.f32.mrb[0].mxu0
    %v6263 = vadd.f32 %v6222, %v6262
    %v6264 = vpop.f32.mrb[0].mxu0
    %v6265 = vadd.f32 %v6224, %v6264
    %v6266 = vpop.f32.mrb[0].mxu0
    %v6267 = vpop.f32.mrb[0].mxu0
    %6268 = vdwg.mxu0
    %6269 = vmatprep.subr.bf16.mxu0 %v4740
    %6270 = vmatpush1.bf16.msra.mxu0 %v4739
    %6271 = vmatprep.subr.bf16.mxu0 %v4750
    %6272 = vmatpush1.bf16.msra.mxu0 %v4749
    %6273 = vmatprep.subr.bf16.mxu0 %v4760
    %6274 = vmatpush1.bf16.msra.mxu0 %v4759
    %6275 = vmatprep.subr.bf16.mxu0 %v4770
    %6276 = vmatpush1.bf16.msra.mxu0 %v4769
    %6277 = vmatprep.subr.bf16.mxu0 %v4780
    %6278 = vmatpush1.bf16.msra.mxu0 %v4779
    %6279 = vmatprep.subr.bf16.mxu0 %v4790
    %6280 = vmatpush1.bf16.msra.mxu0 %v4789
    %6281 = vmatprep.subr.bf16.mxu0 %v4800
    %6282 = vmatpush1.bf16.msra.mxu0 %v4799
    %6283 = vmatprep.subr.bf16.mxu0 %v4810
    %6284 = vmatpush1.bf16.msra.mxu0 %v4809
    %6285 = vmatprep.subr.bf16.mxu0 %v4820
    %6286 = vmatpush1.bf16.msra.mxu0 %v4819
    %6287 = vmatprep.subr.bf16.mxu0 %v4830
    %6288 = vmatpush1.bf16.msra.mxu0 %v4829
    %6289 = vmatprep.subr.bf16.mxu0 %v4840
    %6290 = vmatpush1.bf16.msra.mxu0 %v4839
    %6291 = vmatprep.subr.bf16.mxu0 %v4850
    %6292 = vmatpush1.bf16.msra.mxu0 %v4849
    %6293 = vmatprep.subr.bf16.mxu0 %v4860
    %6294 = vmatpush1.bf16.msra.mxu0 %v4859
    %6295 = vmatprep.subr.bf16.mxu0 %v4870
    %6296 = vmatpush1.bf16.msra.mxu0 %v4869
    %6297 = vmatprep.subr.bf16.mxu0 %v4880
    %6298 = vmatpush1.bf16.msra.mxu0 %v4879
    %6299 = vmatprep.subr.bf16.mxu0 %v4890
    %6300 = vmatpush1.bf16.msra.mxu0 %v4889
    %6301 = vmatprep.mubr.bf16.mxu0 %v840
    %6302 = vmatmul.mubr.bf16.gmra.mrb[0].mxu0 %v839
    %v6303 = vpop.f32.mrb[0].mxu0
    %v6304 = vadd.f32 %v6263, %v6303
    %v6305 = vpop.f32.mrb[0].mxu0
    %v6306 = vadd.f32 %v6265, %v6305
    %v6307 = vpop.f32.mrb[0].mxu0
    %v6308 = vpop.f32.mrb[0].mxu0
    %6309 = vdwg.mxu0
    %6310 = vmatprep.subr.bf16.mxu0 %v4102
    %6311 = vmatpush1.bf16.msra.mxu0 %v4101
    %6312 = vmatprep.subr.bf16.mxu0 %v4112
    %6313 = vmatpush1.bf16.msra.mxu0 %v4111
    %6314 = vmatprep.subr.bf16.mxu0 %v4122
    %6315 = vmatpush1.bf16.msra.mxu0 %v4121
    %6316 = vmatprep.subr.bf16.mxu0 %v4132
    %6317 = vmatpush1.bf16.msra.mxu0 %v4131
    %6318 = vmatprep.subr.bf16.mxu0 %v4142
    %6319 = vmatpush1.bf16.msra.mxu0 %v4141
    %6320 = vmatprep.subr.bf16.mxu0 %v4152
    %6321 = vmatpush1.bf16.msra.mxu0 %v4151
    %6322 = vmatprep.subr.bf16.mxu0 %v4162
    %6323 = vmatpush1.bf16.msra.mxu0 %v4161
    %6324 = vmatprep.subr.bf16.mxu0 %v4172
    %6325 = vmatpush1.bf16.msra.mxu0 %v4171
    %6326 = vmatprep.subr.bf16.mxu0 %v4182
    %6327 = vmatpush1.bf16.msra.mxu0 %v4181
    %6328 = vmatprep.subr.bf16.mxu0 %v4192
    %6329 = vmatpush1.bf16.msra.mxu0 %v4191
    %6330 = vmatprep.subr.bf16.mxu0 %v4202
    %6331 = vmatpush1.bf16.msra.mxu0 %v4201
    %6332 = vmatprep.subr.bf16.mxu0 %v4212
    %6333 = vmatpush1.bf16.msra.mxu0 %v4211
    %6334 = vmatprep.subr.bf16.mxu0 %v4222
    %6335 = vmatpush1.bf16.msra.mxu0 %v4221
    %6336 = vmatprep.subr.bf16.mxu0 %v4232
    %6337 = vmatpush1.bf16.msra.mxu0 %v4231
    %6338 = vmatprep.subr.bf16.mxu0 %v4242
    %6339 = vmatpush1.bf16.msra.mxu0 %v4241
    %6340 = vmatprep.subr.bf16.mxu0 %v4252
    %6341 = vmatpush1.bf16.msra.mxu0 %v4251
    %6342 = vmatprep.mubr.bf16.mxu0 %v832
    %6343 = vmatmul.mubr.bf16.gmra.mrb[0].mxu0 %v831
    %v6344 = vpop.f32.mrb[0].mxu0
    %v6345 = vadd.f32 %v1672, %v6344
    %v6346 = vpop.f32.mrb[0].mxu0
    %v6347 = vadd.f32 %v1676, %v6346
    %v6348 = vpop.f32.mrb[0].mxu0
    %v6349 = vpop.f32.mrb[0].mxu0
    %6350 = vdwg.mxu0
    %6351 = vmatprep.subr.bf16.mxu0 %v4262
    %6352 = vmatpush1.bf16.msra.mxu0 %v4261
    %6353 = vmatprep.subr.bf16.mxu0 %v4272
    %6354 = vmatpush1.bf16.msra.mxu0 %v4271
    %6355 = vmatprep.subr.bf16.mxu0 %v4282
    %6356 = vmatpush1.bf16.msra.mxu0 %v4281
    %6357 = vmatprep.subr.bf16.mxu0 %v4292
    %6358 = vmatpush1.bf16.msra.mxu0 %v4291
    %6359 = vmatprep.subr.bf16.mxu0 %v4302
    %6360 = vmatpush1.bf16.msra.mxu0 %v4301
    %6361 = vmatprep.subr.bf16.mxu0 %v4312
    %6362 = vmatpush1.bf16.msra.mxu0 %v4311
    %6363 = vmatprep.subr.bf16.mxu0 %v4322
    %6364 = vmatpush1.bf16.msra.mxu0 %v4321
    %6365 = vmatprep.subr.bf16.mxu0 %v4332
    %6366 = vmatpush1.bf16.msra.mxu0 %v4331
    %6367 = vmatprep.subr.bf16.mxu0 %v4342
    %6368 = vmatpush1.bf16.msra.mxu0 %v4341
    %6369 = vmatprep.subr.bf16.mxu0 %v4352
    %6370 = vmatpush1.bf16.msra.mxu0 %v4351
    %6371 = vmatprep.subr.bf16.mxu0 %v4362
    %6372 = vmatpush1.bf16.msra.mxu0 %v4361
    %6373 = vmatprep.subr.bf16.mxu0 %v4372
    %6374 = vmatpush1.bf16.msra.mxu0 %v4371
    %6375 = vmatprep.subr.bf16.mxu0 %v4382
    %6376 = vmatpush1.bf16.msra.mxu0 %v4381
    %6377 = vmatprep.subr.bf16.mxu0 %v4392
    %6378 = vmatpush1.bf16.msra.mxu0 %v4391
    %6379 = vmatprep.subr.bf16.mxu0 %v4402
    %6380 = vmatpush1.bf16.msra.mxu0 %v4401
    %6381 = vmatprep.subr.bf16.mxu0 %v4412
    %6382 = vmatpush1.bf16.msra.mxu0 %v4411
    %6383 = vmatprep.mubr.bf16.mxu0 %v834
    %6384 = vmatmul.mubr.bf16.gmra.mrb[0].mxu0 %v833
    %v6385 = vpop.f32.mrb[0].mxu0
    %v6386 = vadd.f32 %v6345, %v6385
    %v6387 = vpop.f32.mrb[0].mxu0
    %v6388 = vadd.f32 %v6347, %v6387
    %v6389 = vpop.f32.mrb[0].mxu0
    %v6390 = vpop.f32.mrb[0].mxu0
    %6391 = vdwg.mxu0
    %6392 = vmatprep.subr.bf16.mxu0 %v4422
    %6393 = vmatpush1.bf16.msra.mxu0 %v4421
    %6394 = vmatprep.subr.bf16.mxu0 %v4432
    %6395 = vmatpush1.bf16.msra.mxu0 %v4431
    %6396 = vmatprep.subr.bf16.mxu0 %v4442
    %6397 = vmatpush1.bf16.msra.mxu0 %v4441
    %6398 = vmatprep.subr.bf16.mxu0 %v4452
    %6399 = vmatpush1.bf16.msra.mxu0 %v4451
    %6400 = vmatprep.subr.bf16.mxu0 %v4462
    %6401 = vmatpush1.bf16.msra.mxu0 %v4461
    %6402 = vmatprep.subr.bf16.mxu0 %v4472
    %6403 = vmatpush1.bf16.msra.mxu0 %v4471
    %6404 = vmatprep.subr.bf16.mxu0 %v4482
    %6405 = vmatpush1.bf16.msra.mxu0 %v4481
    %6406 = vmatprep.subr.bf16.mxu0 %v4492
    %6407 = vmatpush1.bf16.msra.mxu0 %v4491
    %6408 = vmatprep.subr.bf16.mxu0 %v4502
    %6409 = vmatpush1.bf16.msra.mxu0 %v4501
    %6410 = vmatprep.subr.bf16.mxu0 %v4512
    %6411 = vmatpush1.bf16.msra.mxu0 %v4511
    %6412 = vmatprep.subr.bf16.mxu0 %v4522
    %6413 = vmatpush1.bf16.msra.mxu0 %v4521
    %6414 = vmatprep.subr.bf16.mxu0 %v4532
    %6415 = vmatpush1.bf16.msra.mxu0 %v4531
    %6416 = vmatprep.subr.bf16.mxu0 %v4542
    %6417 = vmatpush1.bf16.msra.mxu0 %v4541
    %6418 = vmatprep.subr.bf16.mxu0 %v4552
    %6419 = vmatpush1.bf16.msra.mxu0 %v4551
    %6420 = vmatprep.subr.bf16.mxu0 %v4562
    %6421 = vmatpush1.bf16.msra.mxu0 %v4561
    %6422 = vmatprep.subr.bf16.mxu0 %v4572
    %6423 = vmatpush1.bf16.msra.mxu0 %v4571
    %6424 = vmatprep.mubr.bf16.mxu0 %v836
    %6425 = vmatmul.mubr.bf16.gmra.mrb[0].mxu0 %v835
    %v6426 = vpop.f32.mrb[0].mxu0
    %v6427 = vadd.f32 %v6386, %v6426
    %v6428 = vpop.f32.mrb[0].mxu0
    %v6429 = vadd.f32 %v6388, %v6428
    %v6430 = vpop.f32.mrb[0].mxu0
    %v6431 = vpop.f32.mrb[0].mxu0
    %6432 = vdwg.mxu0
    %6433 = vmatprep.subr.bf16.mxu0 %v4582
    %6434 = vmatpush1.bf16.msra.mxu0 %v4581
    %6435 = vmatprep.subr.bf16.mxu0 %v4592
    %6436 = vmatpush1.bf16.msra.mxu0 %v4591
    %6437 = vmatprep.subr.bf16.mxu0 %v4602
    %6438 = vmatpush1.bf16.msra.mxu0 %v4601
    %6439 = vmatprep.subr.bf16.mxu0 %v4612
    %6440 = vmatpush1.bf16.msra.mxu0 %v4611
    %6441 = vmatprep.subr.bf16.mxu0 %v4622
    %6442 = vmatpush1.bf16.msra.mxu0 %v4621
    %6443 = vmatprep.subr.bf16.mxu0 %v4632
    %6444 = vmatpush1.bf16.msra.mxu0 %v4631
    %6445 = vmatprep.subr.bf16.mxu0 %v4642
    %6446 = vmatpush1.bf16.msra.mxu0 %v4641
    %6447 = vmatprep.subr.bf16.mxu0 %v4652
    %6448 = vmatpush1.bf16.msra.mxu0 %v4651
    %6449 = vmatprep.subr.bf16.mxu0 %v4662
    %6450 = vmatpush1.bf16.msra.mxu0 %v4661
    %6451 = vmatprep.subr.bf16.mxu0 %v4672
    %6452 = vmatpush1.bf16.msra.mxu0 %v4671
    %6453 = vmatprep.subr.bf16.mxu0 %v4682
    %6454 = vmatpush1.bf16.msra.mxu0 %v4681
    %6455 = vmatprep.subr.bf16.mxu0 %v4692
    %6456 = vmatpush1.bf16.msra.mxu0 %v4691
    %6457 = vmatprep.subr.bf16.mxu0 %v4702
    %6458 = vmatpush1.bf16.msra.mxu0 %v4701
    %6459 = vmatprep.subr.bf16.mxu0 %v4712
    %6460 = vmatpush1.bf16.msra.mxu0 %v4711
    %6461 = vmatprep.subr.bf16.mxu0 %v4722
    %6462 = vmatpush1.bf16.msra.mxu0 %v4721
    %6463 = vmatprep.subr.bf16.mxu0 %v4732
    %6464 = vmatpush1.bf16.msra.mxu0 %v4731
    %6465 = vmatprep.mubr.bf16.mxu0 %v838
    %6466 = vmatmul.mubr.bf16.gmra.mrb[0].mxu0 %v837
    %v6467 = vpop.f32.mrb[0].mxu0
    %v6468 = vadd.f32 %v6427, %v6467
    %v6469 = vpop.f32.mrb[0].mxu0
    %v6470 = vadd.f32 %v6429, %v6469
    %v6471 = vpop.f32.mrb[0].mxu0
    %v6472 = vpop.f32.mrb[0].mxu0
    %6473 = vdwg.mxu0
    %6474 = vmatprep.subr.bf16.mxu0 %v4742
    %6475 = vmatpush1.bf16.msra.mxu0 %v4741
    %6476 = vmatprep.subr.bf16.mxu0 %v4752
    %6477 = vmatpush1.bf16.msra.mxu0 %v4751
    %6478 = vmatprep.subr.bf16.mxu0 %v4762
    %6479 = vmatpush1.bf16.msra.mxu0 %v4761
    %6480 = vmatprep.subr.bf16.mxu0 %v4772
    %6481 = vmatpush1.bf16.msra.mxu0 %v4771
    %6482 = vmatprep.subr.bf16.mxu0 %v4782
    %6483 = vmatpush1.bf16.msra.mxu0 %v4781
    %6484 = vmatprep.subr.bf16.mxu0 %v4792
    %6485 = vmatpush1.bf16.msra.mxu0 %v4791
    %6486 = vmatprep.subr.bf16.mxu0 %v4802
    %6487 = vmatpush1.bf16.msra.mxu0 %v4801
    %6488 = vmatprep.subr.bf16.mxu0 %v4812
    %6489 = vmatpush1.bf16.msra.mxu0 %v4811
    %6490 = vmatprep.subr.bf16.mxu0 %v4822
    %6491 = vmatpush1.bf16.msra.mxu0 %v4821
    %6492 = vmatprep.subr.bf16.mxu0 %v4832
    %6493 = vmatpush1.bf16.msra.mxu0 %v4831
    %6494 = vmatprep.subr.bf16.mxu0 %v4842
    %6495 = vmatpush1.bf16.msra.mxu0 %v4841
    %6496 = vmatprep.subr.bf16.mxu0 %v4852
    %6497 = vmatpush1.bf16.msra.mxu0 %v4851
    %6498 = vmatprep.subr.bf16.mxu0 %v4862
    %6499 = vmatpush1.bf16.msra.mxu0 %v4861
    %6500 = vmatprep.subr.bf16.mxu0 %v4872
    %6501 = vmatpush1.bf16.msra.mxu0 %v4871
    %6502 = vmatprep.subr.bf16.mxu0 %v4882
    %6503 = vmatpush1.bf16.msra.mxu0 %v4881
    %6504 = vmatprep.subr.bf16.mxu0 %v4892
    %6505 = vmatpush1.bf16.msra.mxu0 %v4891
    %6506 = vmatprep.mubr.bf16.mxu0 %v840
    %6507 = vmatmul.mubr.bf16.gmra.mrb[0].mxu0 %v839
    %v6508 = vpop.f32.mrb[0].mxu0
    %v6509 = vadd.f32 %v6468, %v6508
    %v6510 = vpop.f32.mrb[0].mxu0
    %v6511 = vadd.f32 %v6470, %v6510
    %v6512 = vpop.f32.mrb[0].mxu0
    %v6513 = vpop.f32.mrb[0].mxu0
    %6514 = vdwg.mxu0
    %6515 = vmatprep.subr.bf16.mxu0 %v4104
    %6516 = vmatpush1.bf16.msra.mxu0 %v4103
    %6517 = vmatprep.subr.bf16.mxu0 %v4114
    %6518 = vmatpush1.bf16.msra.mxu0 %v4113
    %6519 = vmatprep.subr.bf16.mxu0 %v4124
    %6520 = vmatpush1.bf16.msra.mxu0 %v4123
    %6521 = vmatprep.subr.bf16.mxu0 %v4134
    %6522 = vmatpush1.bf16.msra.mxu0 %v4133
    %6523 = vmatprep.subr.bf16.mxu0 %v4144
    %6524 = vmatpush1.bf16.msra.mxu0 %v4143
    %6525 = vmatprep.subr.bf16.mxu0 %v4154
    %6526 = vmatpush1.bf16.msra.mxu0 %v4153
    %6527 = vmatprep.subr.bf16.mxu0 %v4164
    %6528 = vmatpush1.bf16.msra.mxu0 %v4163
    %6529 = vmatprep.subr.bf16.mxu0 %v4174
    %6530 = vmatpush1.bf16.msra.mxu0 %v4173
    %6531 = vmatprep.subr.bf16.mxu0 %v4184
    %6532 = vmatpush1.bf16.msra.mxu0 %v4183
    %6533 = vmatprep.subr.bf16.mxu0 %v4194
    %6534 = vmatpush1.bf16.msra.mxu0 %v4193
    %6535 = vmatprep.subr.bf16.mxu0 %v4204
    %6536 = vmatpush1.bf16.msra.mxu0 %v4203
    %6537 = vmatprep.subr.bf16.mxu0 %v4214
    %6538 = vmatpush1.bf16.msra.mxu0 %v4213
    %6539 = vmatprep.subr.bf16.mxu0 %v4224
    %6540 = vmatpush1.bf16.msra.mxu0 %v4223
    %6541 = vmatprep.subr.bf16.mxu0 %v4234
    %6542 = vmatpush1.bf16.msra.mxu0 %v4233
    %6543 = vmatprep.subr.bf16.mxu0 %v4244
    %6544 = vmatpush1.bf16.msra.mxu0 %v4243
    %6545 = vmatprep.subr.bf16.mxu0 %v4254
    %6546 = vmatpush1.bf16.msra.mxu0 %v4253
    %6547 = vmatprep.mubr.bf16.mxu0 %v832
    %6548 = vmatmul.mubr.bf16.gmra.mrb[0].mxu0 %v831
    %v6549 = vpop.f32.mrb[0].mxu0
    %v6550 = vadd.f32 %v1680, %v6549
    %v6551 = vpop.f32.mrb[0].mxu0
    %v6552 = vadd.f32 %v1684, %v6551
    %v6553 = vpop.f32.mrb[0].mxu0
    %v6554 = vpop.f32.mrb[0].mxu0
    %6555 = vdwg.mxu0
    %6556 = vmatprep.subr.bf16.mxu0 %v4264
    %6557 = vmatpush1.bf16.msra.mxu0 %v4263
    %6558 = vmatprep.subr.bf16.mxu0 %v4274
    %6559 = vmatpush1.bf16.msra.mxu0 %v4273
    %6560 = vmatprep.subr.bf16.mxu0 %v4284
    %6561 = vmatpush1.bf16.msra.mxu0 %v4283
    %6562 = vmatprep.subr.bf16.mxu0 %v4294
    %6563 = vmatpush1.bf16.msra.mxu0 %v4293
    %6564 = vmatprep.subr.bf16.mxu0 %v4304
    %6565 = vmatpush1.bf16.msra.mxu0 %v4303
    %6566 = vmatprep.subr.bf16.mxu0 %v4314
    %6567 = vmatpush1.bf16.msra.mxu0 %v4313
    %6568 = vmatprep.subr.bf16.mxu0 %v4324
    %6569 = vmatpush1.bf16.msra.mxu0 %v4323
    %6570 = vmatprep.subr.bf16.mxu0 %v4334
    %6571 = vmatpush1.bf16.msra.mxu0 %v4333
    %6572 = vmatprep.subr.bf16.mxu0 %v4344
    %6573 = vmatpush1.bf16.msra.mxu0 %v4343
    %6574 = vmatprep.subr.bf16.mxu0 %v4354
    %6575 = vmatpush1.bf16.msra.mxu0 %v4353
    %6576 = vmatprep.subr.bf16.mxu0 %v4364
    %6577 = vmatpush1.bf16.msra.mxu0 %v4363
    %6578 = vmatprep.subr.bf16.mxu0 %v4374
    %6579 = vmatpush1.bf16.msra.mxu0 %v4373
    %6580 = vmatprep.subr.bf16.mxu0 %v4384
    %6581 = vmatpush1.bf16.msra.mxu0 %v4383
    %6582 = vmatprep.subr.bf16.mxu0 %v4394
    %6583 = vmatpush1.bf16.msra.mxu0 %v4393
    %6584 = vmatprep.subr.bf16.mxu0 %v4404
    %6585 = vmatpush1.bf16.msra.mxu0 %v4403
    %6586 = vmatprep.subr.bf16.mxu0 %v4414
    %6587 = vmatpush1.bf16.msra.mxu0 %v4413
    %6588 = vmatprep.mubr.bf16.mxu0 %v834
    %6589 = vmatmul.mubr.bf16.gmra.mrb[0].mxu0 %v833
    %v6590 = vpop.f32.mrb[0].mxu0
    %v6591 = vadd.f32 %v6550, %v6590
    %v6592 = vpop.f32.mrb[0].mxu0
    %v6593 = vadd.f32 %v6552, %v6592
    %v6594 = vpop.f32.mrb[0].mxu0
    %v6595 = vpop.f32.mrb[0].mxu0
    %6596 = vdwg.mxu0
    %6597 = vmatprep.subr.bf16.mxu0 %v4424
    %6598 = vmatpush1.bf16.msra.mxu0 %v4423
    %6599 = vmatprep.subr.bf16.mxu0 %v4434
    %6600 = vmatpush1.bf16.msra.mxu0 %v4433
    %6601 = vmatprep.subr.bf16.mxu0 %v4444
    %6602 = vmatpush1.bf16.msra.mxu0 %v4443
    %6603 = vmatprep.subr.bf16.mxu0 %v4454
    %6604 = vmatpush1.bf16.msra.mxu0 %v4453
    %6605 = vmatprep.subr.bf16.mxu0 %v4464
    %6606 = vmatpush1.bf16.msra.mxu0 %v4463
    %6607 = vmatprep.subr.bf16.mxu0 %v4474
    %6608 = vmatpush1.bf16.msra.mxu0 %v4473
    %6609 = vmatprep.subr.bf16.mxu0 %v4484
    %6610 = vmatpush1.bf16.msra.mxu0 %v4483
    %6611 = vmatprep.subr.bf16.mxu0 %v4494
    %6612 = vmatpush1.bf16.msra.mxu0 %v4493
    %6613 = vmatprep.subr.bf16.mxu0 %v4504
    %6614 = vmatpush1.bf16.msra.mxu0 %v4503
    %6615 = vmatprep.subr.bf16.mxu0 %v4514
    %6616 = vmatpush1.bf16.msra.mxu0 %v4513
    %6617 = vmatprep.subr.bf16.mxu0 %v4524
    %6618 = vmatpush1.bf16.msra.mxu0 %v4523
    %6619 = vmatprep.subr.bf16.mxu0 %v4534
    %6620 = vmatpush1.bf16.msra.mxu0 %v4533
    %6621 = vmatprep.subr.bf16.mxu0 %v4544
    %6622 = vmatpush1.bf16.msra.mxu0 %v4543
    %6623 = vmatprep.subr.bf16.mxu0 %v4554
    %6624 = vmatpush1.bf16.msra.mxu0 %v4553
    %6625 = vmatprep.subr.bf16.mxu0 %v4564
    %6626 = vmatpush1.bf16.msra.mxu0 %v4563
    %6627 = vmatprep.subr.bf16.mxu0 %v4574
    %6628 = vmatpush1.bf16.msra.mxu0 %v4573
    %6629 = vmatprep.mubr.bf16.mxu0 %v836
    %6630 = vmatmul.mubr.bf16.gmra.mrb[0].mxu0 %v835
    %v6631 = vpop.f32.mrb[0].mxu0
    %v6632 = vadd.f32 %v6591, %v6631
    %v6633 = vpop.f32.mrb[0].mxu0
    %v6634 = vadd.f32 %v6593, %v6633
    %v6635 = vpop.f32.mrb[0].mxu0
    %v6636 = vpop.f32.mrb[0].mxu0
    %6637 = vdwg.mxu0
    %6638 = vmatprep.subr.bf16.mxu0 %v4584
    %6639 = vmatpush1.bf16.msra.mxu0 %v4583
    %6640 = vmatprep.subr.bf16.mxu0 %v4594
    %6641 = vmatpush1.bf16.msra.mxu0 %v4593
    %6642 = vmatprep.subr.bf16.mxu0 %v4604
    %6643 = vmatpush1.bf16.msra.mxu0 %v4603
    %6644 = vmatprep.subr.bf16.mxu0 %v4614
    %6645 = vmatpush1.bf16.msra.mxu0 %v4613
    %6646 = vmatprep.subr.bf16.mxu0 %v4624
    %6647 = vmatpush1.bf16.msra.mxu0 %v4623
    %6648 = vmatprep.subr.bf16.mxu0 %v4634
    %6649 = vmatpush1.bf16.msra.mxu0 %v4633
    %6650 = vmatprep.subr.bf16.mxu0 %v4644
    %6651 = vmatpush1.bf16.msra.mxu0 %v4643
    %6652 = vmatprep.subr.bf16.mxu0 %v4654
    %6653 = vmatpush1.bf16.msra.mxu0 %v4653
    %6654 = vmatprep.subr.bf16.mxu0 %v4664
    %6655 = vmatpush1.bf16.msra.mxu0 %v4663
    %6656 = vmatprep.subr.bf16.mxu0 %v4674
    %6657 = vmatpush1.bf16.msra.mxu0 %v4673
    %6658 = vmatprep.subr.bf16.mxu0 %v4684
    %6659 = vmatpush1.bf16.msra.mxu0 %v4683
    %6660 = vmatprep.subr.bf16.mxu0 %v4694
    %6661 = vmatpush1.bf16.msra.mxu0 %v4693
    %6662 = vmatprep.subr.bf16.mxu0 %v4704
    %6663 = vmatpush1.bf16.msra.mxu0 %v4703
    %6664 = vmatprep.subr.bf16.mxu0 %v4714
    %6665 = vmatpush1.bf16.msra.mxu0 %v4713
    %6666 = vmatprep.subr.bf16.mxu0 %v4724
    %6667 = vmatpush1.bf16.msra.mxu0 %v4723
    %6668 = vmatprep.subr.bf16.mxu0 %v4734
    %6669 = vmatpush1.bf16.msra.mxu0 %v4733
    %6670 = vmatprep.mubr.bf16.mxu0 %v838
    %6671 = vmatmul.mubr.bf16.gmra.mrb[0].mxu0 %v837
    %v6672 = vpop.f32.mrb[0].mxu0
    %v6673 = vadd.f32 %v6632, %v6672
    %v6674 = vpop.f32.mrb[0].mxu0
    %v6675 = vadd.f32 %v6634, %v6674
    %v6676 = vpop.f32.mrb[0].mxu0
    %v6677 = vpop.f32.mrb[0].mxu0
    %6678 = vdwg.mxu0
    %6679 = vmatprep.subr.bf16.mxu0 %v4744
    %6680 = vmatpush1.bf16.msra.mxu0 %v4743
    %6681 = vmatprep.subr.bf16.mxu0 %v4754
    %6682 = vmatpush1.bf16.msra.mxu0 %v4753
    %6683 = vmatprep.subr.bf16.mxu0 %v4764
    %6684 = vmatpush1.bf16.msra.mxu0 %v4763
    %6685 = vmatprep.subr.bf16.mxu0 %v4774
    %6686 = vmatpush1.bf16.msra.mxu0 %v4773
    %6687 = vmatprep.subr.bf16.mxu0 %v4784
    %6688 = vmatpush1.bf16.msra.mxu0 %v4783
    %6689 = vmatprep.subr.bf16.mxu0 %v4794
    %6690 = vmatpush1.bf16.msra.mxu0 %v4793
    %6691 = vmatprep.subr.bf16.mxu0 %v4804
    %6692 = vmatpush1.bf16.msra.mxu0 %v4803
    %6693 = vmatprep.subr.bf16.mxu0 %v4814
    %6694 = vmatpush1.bf16.msra.mxu0 %v4813
    %6695 = vmatprep.subr.bf16.mxu0 %v4824
    %6696 = vmatpush1.bf16.msra.mxu0 %v4823
    %6697 = vmatprep.subr.bf16.mxu0 %v4834
    %6698 = vmatpush1.bf16.msra.mxu0 %v4833
    %6699 = vmatprep.subr.bf16.mxu0 %v4844
    %6700 = vmatpush1.bf16.msra.mxu0 %v4843
    %6701 = vmatprep.subr.bf16.mxu0 %v4854
    %6702 = vmatpush1.bf16.msra.mxu0 %v4853
    %6703 = vmatprep.subr.bf16.mxu0 %v4864
    %6704 = vmatpush1.bf16.msra.mxu0 %v4863
    %6705 = vmatprep.subr.bf16.mxu0 %v4874
    %6706 = vmatpush1.bf16.msra.mxu0 %v4873
    %6707 = vmatprep.subr.bf16.mxu0 %v4884
    %6708 = vmatpush1.bf16.msra.mxu0 %v4883
    %6709 = vmatprep.subr.bf16.mxu0 %v4894
    %6710 = vmatpush1.bf16.msra.mxu0 %v4893
    %6711 = vmatprep.mubr.bf16.mxu0 %v840
    %6712 = vmatmul.mubr.bf16.gmra.mrb[0].mxu0 %v839
    %v6713 = vpop.f32.mrb[0].mxu0
    %v6714 = vadd.f32 %v6673, %v6713
    %v6715 = vpop.f32.mrb[0].mxu0
    %v6716 = vadd.f32 %v6675, %v6715
    %v6717 = vpop.f32.mrb[0].mxu0
    %v6718 = vpop.f32.mrb[0].mxu0
    %6719 = vdwg.mxu0
    %vm6720 = vcmp.gt.f32.partialorder %v5894, 0.0
    %vm6721 = vcmp.gt.f32.partialorder %v5896, 0.0
    %vm6722 = vcmp.gt.f32.partialorder %v6099, 0.0
    %vm6723 = vcmp.gt.f32.partialorder %v6101, 0.0
    %vm6724 = vcmp.gt.f32.partialorder %v6304, 0.0
    %vm6725 = vcmp.gt.f32.partialorder %v6306, 0.0
    %vm6726 = vcmp.gt.f32.partialorder %v6509, 0.0
    %vm6727 = vcmp.gt.f32.partialorder %v6511, 0.0
    %vm6728 = vcmp.gt.f32.partialorder %v6714, 0.0
    %vm6729 = vcmp.gt.f32.partialorder %v6716, 0.0
    %v6730 = vmul.f32 %v5894, 0.2
    %v6731 = vmul.f32 %v5896, 0.2
    %v6732 = vmul.f32 %v6099, 0.2
    %v6733 = vmul.f32 %v6101, 0.2
    %v6734 = vmul.f32 %v6304, 0.2
    %v6735 = vmul.f32 %v6306, 0.2
    %v6736 = vmul.f32 %v6509, 0.2
    %v6737 = vmul.f32 %v6511, 0.2
    %v6738 = vmul.f32 %v6714, 0.2
    %v6739 = vmul.f32 %v6716, 0.2
    %v6740 = vsel %vm6720, %v5894, %v6730
    %v6741 = vsel %vm6721, %v5896, %v6731
    %v6742 = vsel %vm6722, %v6099, %v6732
    %v6743 = vsel %vm6723, %v6101, %v6733
    %v6744 = vsel %vm6724, %v6304, %v6734
    %v6745 = vsel %vm6725, %v6306, %v6735
    %v6746 = vsel %vm6726, %v6509, %v6736
    %v6747 = vsel %vm6727, %v6511, %v6737
    %v6748 = vsel %vm6728, %v6714, %v6738
    %v6749 = vsel %vm6729, %v6716, %v6739
    %v6750 = vpack.c.bf16 %v6740, %v6740
    %v6751 = vpack.c.bf16 %v6741, %v6741
    %v6752 = vpack.c.bf16 %v6742, %v6742
    %v6753 = vpack.c.bf16 %v6743, %v6743
    %v6754 = vpack.c.bf16 %v6744, %v6744
    %v6755 = vpack.c.bf16 %v6745, %v6745
    %v6756 = vpack.c.bf16 %v6746, %v6746
    %v6757 = vpack.c.bf16 %v6747, %v6747
    %v6758 = vpack.c.bf16 %v6748, %v6748
    %v6759 = vpack.c.bf16 %v6749, %v6749
    %v6760 = vld [vmem:[#allocation11] sm:$0xf]
    %v6761 = vld [vmem:[#allocation11 + $0x4] sm:$0xf]
    %v6762 = vld [vmem:[#allocation11 + $0x8] sm:$0xf]
    %v6763 = vld [vmem:[#allocation11 + $0xc] sm:$0xf]
    %v6764 = vld [vmem:[#allocation11 + $0x10] sm:$0xf]
    %v6765 = vld [vmem:[#allocation11 + $0x14] sm:$0xf]
    %v6766 = vld [vmem:[#allocation11 + $0x18] sm:$0xf]
    %v6767 = vld [vmem:[#allocation11 + $0x1c] sm:$0xf]
    %v6768 = vld [vmem:[#allocation11 + $0x20] sm:$0xf]
    %v6769 = vld [vmem:[#allocation11 + $0x24] sm:$0xf]
    %v6770 = vld [vmem:[#allocation11 + $0x28] sm:$0xf]
    %v6771 = vld [vmem:[#allocation11 + $0x2c] sm:$0xf]
    %v6772 = vld [vmem:[#allocation11 + $0x30] sm:$0xf]
    %v6773 = vld [vmem:[#allocation11 + $0x34] sm:$0xf]
    %v6774 = vld [vmem:[#allocation11 + $0x38] sm:$0xf]
    %v6775 = vld [vmem:[#allocation11 + $0x3c] sm:$0xf]
    %v6776 = vld [vmem:[#allocation11 + $0x40] sm:$0xf]
    %v6777 = vld [vmem:[#allocation11 + $0x44] sm:$0xf]
    %v6778 = vld [vmem:[#allocation11 + $0x48] sm:$0xf]
    %v6779 = vld [vmem:[#allocation11 + $0x4c] sm:$0xf]
    %v6780 = vld [vmem:[#allocation11 + $0x50] sm:$0xf]
    %v6781 = vld [vmem:[#allocation11 + $0x54] sm:$0xf]
    %v6782 = vld [vmem:[#allocation11 + $0x58] sm:$0xf]
    %v6783 = vld [vmem:[#allocation11 + $0x5c] sm:$0xf]
    %v6784 = vld [vmem:[#allocation11 + $0x60] sm:$0xf]
    %v6785 = vld [vmem:[#allocation11 + $0x64] sm:$0xf]
    %v6786 = vld [vmem:[#allocation11 + $0x68] sm:$0xf]
    %v6787 = vld [vmem:[#allocation11 + $0x6c] sm:$0xf]
    %v6788 = vld [vmem:[#allocation11 + $0x70] sm:$0xf]
    %v6789 = vld [vmem:[#allocation11 + $0x74] sm:$0xf]
    %v6790 = vld [vmem:[#allocation11 + $0x78] sm:$0xf]
    %v6791 = vld [vmem:[#allocation11 + $0x7c] sm:$0xf]
    %v6792 = vld [vmem:[#allocation11 + $0x80] sm:$0xf]
    %v6793 = vld [vmem:[#allocation11 + $0x84] sm:$0xf]
    %v6794 = vld [vmem:[#allocation11 + $0x88] sm:$0xf]
    %v6795 = vld [vmem:[#allocation11 + $0x8c] sm:$0xf]
    %v6796 = vld [vmem:[#allocation11 + $0x90] sm:$0xf]
    %v6797 = vld [vmem:[#allocation11 + $0x94] sm:$0xf]
    %v6798 = vld [vmem:[#allocation11 + $0x98] sm:$0xf]
    %v6799 = vld [vmem:[#allocation11 + $0x9c] sm:$0xf]
    %v6800 = vld [vmem:[#allocation11 + $0xa0] sm:$0xf]
    %v6801 = vld [vmem:[#allocation11 + $0xa4] sm:$0xf]
    %v6802 = vld [vmem:[#allocation11 + $0xa8] sm:$0xf]
    %v6803 = vld [vmem:[#allocation11 + $0xac] sm:$0xf]
    %v6804 = vld [vmem:[#allocation11 + $0xb0] sm:$0xf]
    %v6805 = vld [vmem:[#allocation11 + $0xb4] sm:$0xf]
    %v6806 = vld [vmem:[#allocation11 + $0xb8] sm:$0xf]
    %v6807 = vld [vmem:[#allocation11 + $0xbc] sm:$0xf]
    %v6808 = vld [vmem:[#allocation11 + $0xc0] sm:$0xf]
    %v6809 = vld [vmem:[#allocation11 + $0xc4] sm:$0xf]
    %v6810 = vld [vmem:[#allocation11 + $0xc8] sm:$0xf]
    %v6811 = vld [vmem:[#allocation11 + $0xcc] sm:$0xf]
    %v6812 = vld [vmem:[#allocation11 + $0xd0] sm:$0xf]
    %v6813 = vld [vmem:[#allocation11 + $0xd4] sm:$0xf]
    %v6814 = vld [vmem:[#allocation11 + $0xd8] sm:$0xf]
    %v6815 = vld [vmem:[#allocation11 + $0xdc] sm:$0xf]
    %v6816 = vld [vmem:[#allocation11 + $0xe0] sm:$0xf]
    %v6817 = vld [vmem:[#allocation11 + $0xe4] sm:$0xf]
    %v6818 = vld [vmem:[#allocation11 + $0xe8] sm:$0xf]
    %v6819 = vld [vmem:[#allocation11 + $0xec] sm:$0xf]
    %v6820 = vld [vmem:[#allocation11 + $0xf0] sm:$0xf]
    %v6821 = vld [vmem:[#allocation11 + $0xf4] sm:$0xf]
    %v6822 = vld [vmem:[#allocation11 + $0xf8] sm:$0xf]
    %v6823 = vld [vmem:[#allocation11 + $0xfc] sm:$0xf]
    %v6824 = vld [vmem:[#allocation11 + $0x100] sm:$0xf]
    %v6825 = vld [vmem:[#allocation11 + $0x104] sm:$0xf]
    %v6826 = vld [vmem:[#allocation11 + $0x108] sm:$0xf]
    %v6827 = vld [vmem:[#allocation11 + $0x10c] sm:$0xf]
    %v6828 = vld [vmem:[#allocation11 + $0x110] sm:$0xf]
    %v6829 = vld [vmem:[#allocation11 + $0x114] sm:$0xf]
    %v6830 = vld [vmem:[#allocation11 + $0x118] sm:$0xf]
    %v6831 = vld [vmem:[#allocation11 + $0x11c] sm:$0xf]
    %v6832 = vld [vmem:[#allocation11 + $0x120] sm:$0xf]
    %v6833 = vld [vmem:[#allocation11 + $0x124] sm:$0xf]
    %v6834 = vld [vmem:[#allocation11 + $0x128] sm:$0xf]
    %v6835 = vld [vmem:[#allocation11 + $0x12c] sm:$0xf]
    %v6836 = vld [vmem:[#allocation11 + $0x130] sm:$0xf]
    %v6837 = vld [vmem:[#allocation11 + $0x134] sm:$0xf]
    %v6838 = vld [vmem:[#allocation11 + $0x138] sm:$0xf]
    %v6839 = vld [vmem:[#allocation11 + $0x13c] sm:$0xf]
    %v6840 = vld [vmem:[#allocation11 + $0x140] sm:$0xf]
    %v6841 = vld [vmem:[#allocation11 + $0x144] sm:$0xf]
    %v6842 = vld [vmem:[#allocation11 + $0x148] sm:$0xf]
    %v6843 = vld [vmem:[#allocation11 + $0x14c] sm:$0xf]
    %v6844 = vld [vmem:[#allocation11 + $0x150] sm:$0xf]
    %v6845 = vld [vmem:[#allocation11 + $0x154] sm:$0xf]
    %v6846 = vld [vmem:[#allocation11 + $0x158] sm:$0xf]
    %v6847 = vld [vmem:[#allocation11 + $0x15c] sm:$0xf]
    %v6848 = vld [vmem:[#allocation11 + $0x160] sm:$0xf]
    %v6849 = vld [vmem:[#allocation11 + $0x164] sm:$0xf]
    %v6850 = vld [vmem:[#allocation11 + $0x168] sm:$0xf]
    %v6851 = vld [vmem:[#allocation11 + $0x16c] sm:$0xf]
    %v6852 = vld [vmem:[#allocation11 + $0x170] sm:$0xf]
    %v6853 = vld [vmem:[#allocation11 + $0x174] sm:$0xf]
    %v6854 = vld [vmem:[#allocation11 + $0x178] sm:$0xf]
    %v6855 = vld [vmem:[#allocation11 + $0x17c] sm:$0xf]
    %v6856 = vld [vmem:[#allocation11 + $0x180] sm:$0xf]
    %v6857 = vld [vmem:[#allocation11 + $0x184] sm:$0xf]
    %v6858 = vld [vmem:[#allocation11 + $0x188] sm:$0xf]
    %v6859 = vld [vmem:[#allocation11 + $0x18c] sm:$0xf]
    %v6860 = vld [vmem:[#allocation11 + $0x190] sm:$0xf]
    %v6861 = vld [vmem:[#allocation11 + $0x194] sm:$0xf]
    %v6862 = vld [vmem:[#allocation11 + $0x198] sm:$0xf]
    %v6863 = vld [vmem:[#allocation11 + $0x19c] sm:$0xf]
    %v6864 = vld [vmem:[#allocation11 + $0x1a0] sm:$0xf]
    %v6865 = vld [vmem:[#allocation11 + $0x1a4] sm:$0xf]
    %v6866 = vld [vmem:[#allocation11 + $0x1a8] sm:$0xf]
    %v6867 = vld [vmem:[#allocation11 + $0x1ac] sm:$0xf]
    %v6868 = vld [vmem:[#allocation11 + $0x1b0] sm:$0xf]
    %v6869 = vld [vmem:[#allocation11 + $0x1b4] sm:$0xf]
    %v6870 = vld [vmem:[#allocation11 + $0x1b8] sm:$0xf]
    %v6871 = vld [vmem:[#allocation11 + $0x1bc] sm:$0xf]
    %v6872 = vld [vmem:[#allocation11 + $0x1c0] sm:$0xf]
    %v6873 = vld [vmem:[#allocation11 + $0x1c4] sm:$0xf]
    %v6874 = vld [vmem:[#allocation11 + $0x1c8] sm:$0xf]
    %v6875 = vld [vmem:[#allocation11 + $0x1cc] sm:$0xf]
    %v6876 = vld [vmem:[#allocation11 + $0x1d0] sm:$0xf]
    %v6877 = vld [vmem:[#allocation11 + $0x1d4] sm:$0xf]
    %v6878 = vld [vmem:[#allocation11 + $0x1d8] sm:$0xf]
    %v6879 = vld [vmem:[#allocation11 + $0x1dc] sm:$0xf]
    %v6880 = vld [vmem:[#allocation11 + $0x1e0] sm:$0xf]
    %v6881 = vld [vmem:[#allocation11 + $0x1e4] sm:$0xf]
    %v6882 = vld [vmem:[#allocation11 + $0x1e8] sm:$0xf]
    %v6883 = vld [vmem:[#allocation11 + $0x1ec] sm:$0xf]
    %v6884 = vld [vmem:[#allocation11 + $0x1f0] sm:$0xf]
    %v6885 = vld [vmem:[#allocation11 + $0x1f4] sm:$0xf]
    %v6886 = vld [vmem:[#allocation11 + $0x1f8] sm:$0xf]
    %v6887 = vld [vmem:[#allocation11 + $0x1fc] sm:$0xf]
    %v6888 = vld [vmem:[#allocation11 + $0x200] sm:$0xf]
    %v6889 = vld [vmem:[#allocation11 + $0x204] sm:$0xf]
    %v6890 = vld [vmem:[#allocation11 + $0x208] sm:$0xf]
    %v6891 = vld [vmem:[#allocation11 + $0x20c] sm:$0xf]
    %v6892 = vld [vmem:[#allocation11 + $0x210] sm:$0xf]
    %v6893 = vld [vmem:[#allocation11 + $0x214] sm:$0xf]
    %v6894 = vld [vmem:[#allocation11 + $0x218] sm:$0xf]
    %v6895 = vld [vmem:[#allocation11 + $0x21c] sm:$0xf]
    %v6896 = vld [vmem:[#allocation11 + $0x220] sm:$0xf]
    %v6897 = vld [vmem:[#allocation11 + $0x224] sm:$0xf]
    %v6898 = vld [vmem:[#allocation11 + $0x228] sm:$0xf]
    %v6899 = vld [vmem:[#allocation11 + $0x22c] sm:$0xf]
    %v6900 = vld [vmem:[#allocation11 + $0x230] sm:$0xf]
    %v6901 = vld [vmem:[#allocation11 + $0x234] sm:$0xf]
    %v6902 = vld [vmem:[#allocation11 + $0x238] sm:$0xf]
    %v6903 = vld [vmem:[#allocation11 + $0x23c] sm:$0xf]
    %v6904 = vld [vmem:[#allocation11 + $0x240] sm:$0xf]
    %v6905 = vld [vmem:[#allocation11 + $0x244] sm:$0xf]
    %v6906 = vld [vmem:[#allocation11 + $0x248] sm:$0xf]
    %v6907 = vld [vmem:[#allocation11 + $0x24c] sm:$0xf]
    %v6908 = vld [vmem:[#allocation11 + $0x250] sm:$0xf]
    %v6909 = vld [vmem:[#allocation11 + $0x254] sm:$0xf]
    %v6910 = vld [vmem:[#allocation11 + $0x258] sm:$0xf]
    %v6911 = vld [vmem:[#allocation11 + $0x25c] sm:$0xf]
    %v6912 = vld [vmem:[#allocation11 + $0x260] sm:$0xf]
    %v6913 = vld [vmem:[#allocation11 + $0x264] sm:$0xf]
    %v6914 = vld [vmem:[#allocation11 + $0x268] sm:$0xf]
    %v6915 = vld [vmem:[#allocation11 + $0x26c] sm:$0xf]
    %v6916 = vld [vmem:[#allocation11 + $0x270] sm:$0xf]
    %v6917 = vld [vmem:[#allocation11 + $0x274] sm:$0xf]
    %v6918 = vld [vmem:[#allocation11 + $0x278] sm:$0xf]
    %v6919 = vld [vmem:[#allocation11 + $0x27c] sm:$0xf]
    %v6920 = vld [vmem:[#allocation13] sm:$0x1]
    %v6922 = vlaneseq
    %v6923 = vshrl.u32 %v6922, 7
    %v6924 = vsub.s32 0, %v6923
    %v6925 = vrot.slane %v6920, %v6924
    %v7087 = vunpack.c.l.b16 %v6760
    %v7088 = vunpack.c.l.b16 %v6761
    %v7089 = vunpack.c.l.b16 %v6762
    %v7090 = vunpack.c.l.b16 %v6763
    %v7091 = vunpack.c.l.b16 %v6764
    %v7092 = vunpack.c.l.b16 %v6765
    %v7093 = vunpack.c.l.b16 %v6766
    %v7094 = vunpack.c.l.b16 %v6767
    %v7095 = vunpack.c.l.b16 %v6768
    %v7096 = vunpack.c.l.b16 %v6769
    %v7097 = vunpack.c.l.b16 %v6770
    %v7098 = vunpack.c.l.b16 %v6771
    %v7099 = vunpack.c.l.b16 %v6772
    %v7100 = vunpack.c.l.b16 %v6773
    %v7101 = vunpack.c.l.b16 %v6774
    %v7102 = vunpack.c.l.b16 %v6775
    %v7103 = vunpack.c.l.b16 %v6776
    %v7104 = vunpack.c.l.b16 %v6777
    %v7105 = vunpack.c.l.b16 %v6778
    %v7106 = vunpack.c.l.b16 %v6779
    %v7107 = vunpack.c.l.b16 %v6780
    %v7108 = vunpack.c.l.b16 %v6781
    %v7109 = vunpack.c.l.b16 %v6782
    %v7110 = vunpack.c.l.b16 %v6783
    %v7111 = vunpack.c.l.b16 %v6784
    %v7112 = vunpack.c.l.b16 %v6785
    %v7113 = vunpack.c.l.b16 %v6786
    %v7114 = vunpack.c.l.b16 %v6787
    %v7115 = vunpack.c.l.b16 %v6788
    %v7116 = vunpack.c.l.b16 %v6789
    %v7117 = vunpack.c.l.b16 %v6790
    %v7118 = vunpack.c.l.b16 %v6791
    %v7119 = vunpack.c.l.b16 %v6792
    %v7120 = vunpack.c.l.b16 %v6793
    %v7121 = vunpack.c.l.b16 %v6794
    %v7122 = vunpack.c.l.b16 %v6795
    %v7123 = vunpack.c.l.b16 %v6796
    %v7124 = vunpack.c.l.b16 %v6797
    %v7125 = vunpack.c.l.b16 %v6798
    %v7126 = vunpack.c.l.b16 %v6799
    %v7127 = vunpack.c.l.b16 %v6800
    %v7128 = vunpack.c.l.b16 %v6801
    %v7129 = vunpack.c.l.b16 %v6802
    %v7130 = vunpack.c.l.b16 %v6803
    %v7131 = vunpack.c.l.b16 %v6804
    %v7132 = vunpack.c.l.b16 %v6805
    %v7133 = vunpack.c.l.b16 %v6806
    %v7134 = vunpack.c.l.b16 %v6807
    %v7135 = vunpack.c.l.b16 %v6808
    %v7136 = vunpack.c.l.b16 %v6809
    %v7137 = vunpack.c.l.b16 %v6810
    %v7138 = vunpack.c.l.b16 %v6811
    %v7139 = vunpack.c.l.b16 %v6812
    %v7140 = vunpack.c.l.b16 %v6813
    %v7141 = vunpack.c.l.b16 %v6814
    %v7142 = vunpack.c.l.b16 %v6815
    %v7143 = vunpack.c.l.b16 %v6816
    %v7144 = vunpack.c.l.b16 %v6817
    %v7145 = vunpack.c.l.b16 %v6818
    %v7146 = vunpack.c.l.b16 %v6819
    %v7147 = vunpack.c.l.b16 %v6820
    %v7148 = vunpack.c.l.b16 %v6821
    %v7149 = vunpack.c.l.b16 %v6822
    %v7150 = vunpack.c.l.b16 %v6823
    %v7151 = vunpack.c.l.b16 %v6824
    %v7152 = vunpack.c.l.b16 %v6825
    %v7153 = vunpack.c.l.b16 %v6826
    %v7154 = vunpack.c.l.b16 %v6827
    %v7155 = vunpack.c.l.b16 %v6828
    %v7156 = vunpack.c.l.b16 %v6829
    %v7157 = vunpack.c.l.b16 %v6830
    %v7158 = vunpack.c.l.b16 %v6831
    %v7159 = vunpack.c.l.b16 %v6832
    %v7160 = vunpack.c.l.b16 %v6833
    %v7161 = vunpack.c.l.b16 %v6834
    %v7162 = vunpack.c.l.b16 %v6835
    %v7163 = vunpack.c.l.b16 %v6836
    %v7164 = vunpack.c.l.b16 %v6837
    %v7165 = vunpack.c.l.b16 %v6838
    %v7166 = vunpack.c.l.b16 %v6839
    %v7167 = vunpack.c.l.b16 %v6840
    %v7168 = vunpack.c.l.b16 %v6841
    %v7169 = vunpack.c.l.b16 %v6842
    %v7170 = vunpack.c.l.b16 %v6843
    %v7171 = vunpack.c.l.b16 %v6844
    %v7172 = vunpack.c.l.b16 %v6845
    %v7173 = vunpack.c.l.b16 %v6846
    %v7174 = vunpack.c.l.b16 %v6847
    %v7175 = vunpack.c.l.b16 %v6848
    %v7176 = vunpack.c.l.b16 %v6849
    %v7177 = vunpack.c.l.b16 %v6850
    %v7178 = vunpack.c.l.b16 %v6851
    %v7179 = vunpack.c.l.b16 %v6852
    %v7180 = vunpack.c.l.b16 %v6853
    %v7181 = vunpack.c.l.b16 %v6854
    %v7182 = vunpack.c.l.b16 %v6855
    %v7183 = vunpack.c.l.b16 %v6856
    %v7184 = vunpack.c.l.b16 %v6857
    %v7185 = vunpack.c.l.b16 %v6858
    %v7186 = vunpack.c.l.b16 %v6859
    %v7187 = vunpack.c.l.b16 %v6860
    %v7188 = vunpack.c.l.b16 %v6861
    %v7189 = vunpack.c.l.b16 %v6862
    %v7190 = vunpack.c.l.b16 %v6863
    %v7191 = vunpack.c.l.b16 %v6864
    %v7192 = vunpack.c.l.b16 %v6865
    %v7193 = vunpack.c.l.b16 %v6866
    %v7194 = vunpack.c.l.b16 %v6867
    %v7195 = vunpack.c.l.b16 %v6868
    %v7196 = vunpack.c.l.b16 %v6869
    %v7197 = vunpack.c.l.b16 %v6870
    %v7198 = vunpack.c.l.b16 %v6871
    %v7199 = vunpack.c.l.b16 %v6872
    %v7200 = vunpack.c.l.b16 %v6873
    %v7201 = vunpack.c.l.b16 %v6874
    %v7202 = vunpack.c.l.b16 %v6875
    %v7203 = vunpack.c.l.b16 %v6876
    %v7204 = vunpack.c.l.b16 %v6877
    %v7205 = vunpack.c.l.b16 %v6878
    %v7206 = vunpack.c.l.b16 %v6879
    %v7207 = vunpack.c.l.b16 %v6880
    %v7208 = vunpack.c.l.b16 %v6881
    %v7209 = vunpack.c.l.b16 %v6882
    %v7210 = vunpack.c.l.b16 %v6883
    %v7211 = vunpack.c.l.b16 %v6884
    %v7212 = vunpack.c.l.b16 %v6885
    %v7213 = vunpack.c.l.b16 %v6886
    %v7214 = vunpack.c.l.b16 %v6887
    %v7215 = vunpack.c.l.b16 %v6888
    %v7216 = vunpack.c.l.b16 %v6889
    %v7217 = vunpack.c.l.b16 %v6890
    %v7218 = vunpack.c.l.b16 %v6891
    %v7219 = vunpack.c.l.b16 %v6892
    %v7220 = vunpack.c.l.b16 %v6893
    %v7221 = vunpack.c.l.b16 %v6894
    %v7222 = vunpack.c.l.b16 %v6895
    %v7223 = vunpack.c.l.b16 %v6896
    %v7224 = vunpack.c.l.b16 %v6897
    %v7225 = vunpack.c.l.b16 %v6898
    %v7226 = vunpack.c.l.b16 %v6899
    %v7227 = vunpack.c.l.b16 %v6900
    %v7228 = vunpack.c.l.b16 %v6901
    %v7229 = vunpack.c.l.b16 %v6902
    %v7230 = vunpack.c.l.b16 %v6903
    %v7231 = vunpack.c.l.b16 %v6904
    %v7232 = vunpack.c.l.b16 %v6905
    %v7233 = vunpack.c.l.b16 %v6906
    %v7234 = vunpack.c.l.b16 %v6907
    %v7235 = vunpack.c.l.b16 %v6908
    %v7236 = vunpack.c.l.b16 %v6909
    %v7237 = vunpack.c.l.b16 %v6910
    %v7238 = vunpack.c.l.b16 %v6911
    %v7239 = vunpack.c.l.b16 %v6912
    %v7240 = vunpack.c.l.b16 %v6913
    %v7241 = vunpack.c.l.b16 %v6914
    %v7242 = vunpack.c.l.b16 %v6915
    %v7243 = vunpack.c.l.b16 %v6916
    %v7244 = vunpack.c.l.b16 %v6917
    %v7245 = vunpack.c.l.b16 %v6918
    %v7246 = vunpack.c.l.b16 %v6919
    %v7247 = vpack.c.b16 %v7088, %v7087
    %v7248 = vpack.c.b16 %v7090, %v7089
    %v7249 = vpack.c.b16 %v7092, %v7091
    %v7250 = vpack.c.b16 %v7094, %v7093
    %v7251 = vpack.c.b16 %v7096, %v7095
    %v7252 = vpack.c.b16 %v7098, %v7097
    %v7253 = vpack.c.b16 %v7100, %v7099
    %v7254 = vpack.c.b16 %v7102, %v7101
    %v7255 = vpack.c.b16 %v7104, %v7103
    %v7256 = vpack.c.b16 %v7106, %v7105
    %v7257 = vpack.c.b16 %v7108, %v7107
    %v7258 = vpack.c.b16 %v7110, %v7109
    %v7259 = vpack.c.b16 %v7112, %v7111
    %v7260 = vpack.c.b16 %v7114, %v7113
    %v7261 = vpack.c.b16 %v7116, %v7115
    %v7262 = vpack.c.b16 %v7118, %v7117
    %v7263 = vpack.c.b16 %v7120, %v7119
    %v7264 = vpack.c.b16 %v7122, %v7121
    %v7265 = vpack.c.b16 %v7124, %v7123
    %v7266 = vpack.c.b16 %v7126, %v7125
    %v7267 = vpack.c.b16 %v7128, %v7127
    %v7268 = vpack.c.b16 %v7130, %v7129
    %v7269 = vpack.c.b16 %v7132, %v7131
    %v7270 = vpack.c.b16 %v7134, %v7133
    %v7271 = vpack.c.b16 %v7136, %v7135
    %v7272 = vpack.c.b16 %v7138, %v7137
    %v7273 = vpack.c.b16 %v7140, %v7139
    %v7274 = vpack.c.b16 %v7142, %v7141
    %v7275 = vpack.c.b16 %v7144, %v7143
    %v7276 = vpack.c.b16 %v7146, %v7145
    %v7277 = vpack.c.b16 %v7148, %v7147
    %v7278 = vpack.c.b16 %v7150, %v7149
    %v7279 = vpack.c.b16 %v7152, %v7151
    %v7280 = vpack.c.b16 %v7154, %v7153
    %v7281 = vpack.c.b16 %v7156, %v7155
    %v7282 = vpack.c.b16 %v7158, %v7157
    %v7283 = vpack.c.b16 %v7160, %v7159
    %v7284 = vpack.c.b16 %v7162, %v7161
    %v7285 = vpack.c.b16 %v7164, %v7163
    %v7286 = vpack.c.b16 %v7166, %v7165
    %v7287 = vpack.c.b16 %v7168, %v7167
    %v7288 = vpack.c.b16 %v7170, %v7169
    %v7289 = vpack.c.b16 %v7172, %v7171
    %v7290 = vpack.c.b16 %v7174, %v7173
    %v7291 = vpack.c.b16 %v7176, %v7175
    %v7292 = vpack.c.b16 %v7178, %v7177
    %v7293 = vpack.c.b16 %v7180, %v7179
    %v7294 = vpack.c.b16 %v7182, %v7181
    %v7295 = vpack.c.b16 %v7184, %v7183
    %v7296 = vpack.c.b16 %v7186, %v7185
    %v7297 = vpack.c.b16 %v7188, %v7187
    %v7298 = vpack.c.b16 %v7190, %v7189
    %v7299 = vpack.c.b16 %v7192, %v7191
    %v7300 = vpack.c.b16 %v7194, %v7193
    %v7301 = vpack.c.b16 %v7196, %v7195
    %v7302 = vpack.c.b16 %v7198, %v7197
    %v7303 = vpack.c.b16 %v7200, %v7199
    %v7304 = vpack.c.b16 %v7202, %v7201
    %v7305 = vpack.c.b16 %v7204, %v7203
    %v7306 = vpack.c.b16 %v7206, %v7205
    %v7307 = vpack.c.b16 %v7208, %v7207
    %v7308 = vpack.c.b16 %v7210, %v7209
    %v7309 = vpack.c.b16 %v7212, %v7211
    %v7310 = vpack.c.b16 %v7214, %v7213
    %v7311 = vpack.c.b16 %v7216, %v7215
    %v7312 = vpack.c.b16 %v7218, %v7217
    %v7313 = vpack.c.b16 %v7220, %v7219
    %v7314 = vpack.c.b16 %v7222, %v7221
    %v7315 = vpack.c.b16 %v7224, %v7223
    %v7316 = vpack.c.b16 %v7226, %v7225
    %v7317 = vpack.c.b16 %v7228, %v7227
    %v7318 = vpack.c.b16 %v7230, %v7229
    %v7319 = vpack.c.b16 %v7232, %v7231
    %v7320 = vpack.c.b16 %v7234, %v7233
    %v7321 = vpack.c.b16 %v7236, %v7235
    %v7322 = vpack.c.b16 %v7238, %v7237
    %v7323 = vpack.c.b16 %v7240, %v7239
    %v7324 = vpack.c.b16 %v7242, %v7241
    %v7325 = vpack.c.b16 %v7244, %v7243
    %v7326 = vpack.c.b16 %v7246, %v7245
    %7407 = vmatprep.subr.bf16.mxu0 0
    %7408 = vmatpush1.bf16.msra.mxu0 %v7247
    %7409 = vmatprep.subr.bf16.mxu0 0
    %7410 = vmatpush1.bf16.msra.mxu0 %v7248
    %7411 = vmatprep.subr.bf16.mxu0 0
    %7412 = vmatpush1.bf16.msra.mxu0 %v7249
    %7413 = vmatprep.subr.bf16.mxu0 0
    %7414 = vmatpush1.bf16.msra.mxu0 %v7250
    %7415 = vmatprep.subr.bf16.mxu0 0
    %7416 = vmatpush1.bf16.msra.mxu0 %v7251
    %7417 = vmatprep.subr.bf16.mxu0 0
    %7418 = vmatpush1.bf16.msra.mxu0 %v7252
    %7419 = vmatprep.subr.bf16.mxu0 0
    %7420 = vmatpush1.bf16.msra.mxu0 %v7253
    %7421 = vmatprep.subr.bf16.mxu0 0
    %7422 = vmatpush1.bf16.msra.mxu0 %v7254
    %7423 = vmatprep.subr.bf16.mxu0 0
    %7424 = vmatpush1.bf16.msra.mxu0 %v7255
    %7425 = vmatprep.subr.bf16.mxu0 0
    %7426 = vmatpush1.bf16.msra.mxu0 %v7256
    %7427 = vmatprep.subr.bf16.mxu0 0
    %7428 = vmatpush1.bf16.msra.mxu0 %v7257
    %7429 = vmatprep.subr.bf16.mxu0 0
    %7430 = vmatpush1.bf16.msra.mxu0 %v7258
    %7431 = vmatprep.subr.bf16.mxu0 0
    %7432 = vmatpush1.bf16.msra.mxu0 %v7259
    %7433 = vmatprep.subr.bf16.mxu0 0
    %7434 = vmatpush1.bf16.msra.mxu0 %v7260
    %7435 = vmatprep.subr.bf16.mxu0 0
    %7436 = vmatpush1.bf16.msra.mxu0 %v7261
    %7437 = vmatprep.subr.bf16.mxu0 0
    %7438 = vmatpush1.bf16.msra.mxu0 %v7262
    %7439 = vmatprep.mubr.bf16.mxu0 %v6751
    %7440 = vmatmul.mubr.bf16.gmra.mrb[0].mxu0 %v6750
    %v7441 = vpop.f32.mrb[0].mxu0
    %v7442 = vadd.f32 %v6925, %v7441
    %v7443 = vpop.f32.mrb[0].mxu0
    %v7444 = vpop.f32.mrb[0].mxu0
    %v7445 = vpop.f32.mrb[0].mxu0
    %7446 = vdwg.mxu0
    %7447 = vmatprep.subr.bf16.mxu0 0
    %7448 = vmatpush1.bf16.msra.mxu0 %v7263
    %7449 = vmatprep.subr.bf16.mxu0 0
    %7450 = vmatpush1.bf16.msra.mxu0 %v7264
    %7451 = vmatprep.subr.bf16.mxu0 0
    %7452 = vmatpush1.bf16.msra.mxu0 %v7265
    %7453 = vmatprep.subr.bf16.mxu0 0
    %7454 = vmatpush1.bf16.msra.mxu0 %v7266
    %7455 = vmatprep.subr.bf16.mxu0 0
    %7456 = vmatpush1.bf16.msra.mxu0 %v7267
    %7457 = vmatprep.subr.bf16.mxu0 0
    %7458 = vmatpush1.bf16.msra.mxu0 %v7268
    %7459 = vmatprep.subr.bf16.mxu0 0
    %7460 = vmatpush1.bf16.msra.mxu0 %v7269
    %7461 = vmatprep.subr.bf16.mxu0 0
    %7462 = vmatpush1.bf16.msra.mxu0 %v7270
    %7463 = vmatprep.subr.bf16.mxu0 0
    %7464 = vmatpush1.bf16.msra.mxu0 %v7271
    %7465 = vmatprep.subr.bf16.mxu0 0
    %7466 = vmatpush1.bf16.msra.mxu0 %v7272
    %7467 = vmatprep.subr.bf16.mxu0 0
    %7468 = vmatpush1.bf16.msra.mxu0 %v7273
    %7469 = vmatprep.subr.bf16.mxu0 0
    %7470 = vmatpush1.bf16.msra.mxu0 %v7274
    %7471 = vmatprep.subr.bf16.mxu0 0
    %7472 = vmatpush1.bf16.msra.mxu0 %v7275
    %7473 = vmatprep.subr.bf16.mxu0 0
    %7474 = vmatpush1.bf16.msra.mxu0 %v7276
    %7475 = vmatprep.subr.bf16.mxu0 0
    %7476 = vmatpush1.bf16.msra.mxu0 %v7277
    %7477 = vmatprep.subr.bf16.mxu0 0
    %7478 = vmatpush1.bf16.msra.mxu0 %v7278
    %7479 = vmatprep.mubr.bf16.mxu0 %v6753
    %7480 = vmatmul.mubr.bf16.gmra.mrb[0].mxu0 %v6752
    %v7481 = vpop.f32.mrb[0].mxu0
    %v7482 = vadd.f32 %v7442, %v7481
    %v7483 = vpop.f32.mrb[0].mxu0
    %v7484 = vpop.f32.mrb[0].mxu0
    %v7485 = vpop.f32.mrb[0].mxu0
    %7486 = vdwg.mxu0
    %7487 = vmatprep.subr.bf16.mxu0 0
    %7488 = vmatpush1.bf16.msra.mxu0 %v7279
    %7489 = vmatprep.subr.bf16.mxu0 0
    %7490 = vmatpush1.bf16.msra.mxu0 %v7280
    %7491 = vmatprep.subr.bf16.mxu0 0
    %7492 = vmatpush1.bf16.msra.mxu0 %v7281
    %7493 = vmatprep.subr.bf16.mxu0 0
    %7494 = vmatpush1.bf16.msra.mxu0 %v7282
    %7495 = vmatprep.subr.bf16.mxu0 0
    %7496 = vmatpush1.bf16.msra.mxu0 %v7283
    %7497 = vmatprep.subr.bf16.mxu0 0
    %7498 = vmatpush1.bf16.msra.mxu0 %v7284
    %7499 = vmatprep.subr.bf16.mxu0 0
    %7500 = vmatpush1.bf16.msra.mxu0 %v7285
    %7501 = vmatprep.subr.bf16.mxu0 0
    %7502 = vmatpush1.bf16.msra.mxu0 %v7286
    %7503 = vmatprep.subr.bf16.mxu0 0
    %7504 = vmatpush1.bf16.msra.mxu0 %v7287
    %7505 = vmatprep.subr.bf16.mxu0 0
    %7506 = vmatpush1.bf16.msra.mxu0 %v7288
    %7507 = vmatprep.subr.bf16.mxu0 0
    %7508 = vmatpush1.bf16.msra.mxu0 %v7289
    %7509 = vmatprep.subr.bf16.mxu0 0
    %7510 = vmatpush1.bf16.msra.mxu0 %v7290
    %7511 = vmatprep.subr.bf16.mxu0 0
    %7512 = vmatpush1.bf16.msra.mxu0 %v7291
    %7513 = vmatprep.subr.bf16.mxu0 0
    %7514 = vmatpush1.bf16.msra.mxu0 %v7292
    %7515 = vmatprep.subr.bf16.mxu0 0
    %7516 = vmatpush1.bf16.msra.mxu0 %v7293
    %7517 = vmatprep.subr.bf16.mxu0 0
    %7518 = vmatpush1.bf16.msra.mxu0 %v7294
    %7519 = vmatprep.mubr.bf16.mxu0 %v6755
    %7520 = vmatmul.mubr.bf16.gmra.mrb[0].mxu0 %v6754
    %v7521 = vpop.f32.mrb[0].mxu0
    %v7522 = vadd.f32 %v7482, %v7521
    %v7523 = vpop.f32.mrb[0].mxu0
    %v7524 = vpop.f32.mrb[0].mxu0
    %v7525 = vpop.f32.mrb[0].mxu0
    %7526 = vdwg.mxu0
    %7527 = vmatprep.subr.bf16.mxu0 0
    %7528 = vmatpush1.bf16.msra.mxu0 %v7295
    %7529 = vmatprep.subr.bf16.mxu0 0
    %7530 = vmatpush1.bf16.msra.mxu0 %v7296
    %7531 = vmatprep.subr.bf16.mxu0 0
    %7532 = vmatpush1.bf16.msra.mxu0 %v7297
    %7533 = vmatprep.subr.bf16.mxu0 0
    %7534 = vmatpush1.bf16.msra.mxu0 %v7298
    %7535 = vmatprep.subr.bf16.mxu0 0
    %7536 = vmatpush1.bf16.msra.mxu0 %v7299
    %7537 = vmatprep.subr.bf16.mxu0 0
    %7538 = vmatpush1.bf16.msra.mxu0 %v7300
    %7539 = vmatprep.subr.bf16.mxu0 0
    %7540 = vmatpush1.bf16.msra.mxu0 %v7301
    %7541 = vmatprep.subr.bf16.mxu0 0
    %7542 = vmatpush1.bf16.msra.mxu0 %v7302
    %7543 = vmatprep.subr.bf16.mxu0 0
    %7544 = vmatpush1.bf16.msra.mxu0 %v7303
    %7545 = vmatprep.subr.bf16.mxu0 0
    %7546 = vmatpush1.bf16.msra.mxu0 %v7304
    %7547 = vmatprep.subr.bf16.mxu0 0
    %7548 = vmatpush1.bf16.msra.mxu0 %v7305
    %7549 = vmatprep.subr.bf16.mxu0 0
    %7550 = vmatpush1.bf16.msra.mxu0 %v7306
    %7551 = vmatprep.subr.bf16.mxu0 0
    %7552 = vmatpush1.bf16.msra.mxu0 %v7307
    %7553 = vmatprep.subr.bf16.mxu0 0
    %7554 = vmatpush1.bf16.msra.mxu0 %v7308
    %7555 = vmatprep.subr.bf16.mxu0 0
    %7556 = vmatpush1.bf16.msra.mxu0 %v7309
    %7557 = vmatprep.subr.bf16.mxu0 0
    %7558 = vmatpush1.bf16.msra.mxu0 %v7310
    %7559 = vmatprep.mubr.bf16.mxu0 %v6757
    %7560 = vmatmul.mubr.bf16.gmra.mrb[0].mxu0 %v6756
    %v7561 = vpop.f32.mrb[0].mxu0
    %v7562 = vadd.f32 %v7522, %v7561
    %v7563 = vpop.f32.mrb[0].mxu0
    %v7564 = vpop.f32.mrb[0].mxu0
    %v7565 = vpop.f32.mrb[0].mxu0
    %7566 = vdwg.mxu0
    %7567 = vmatprep.subr.bf16.mxu0 0
    %7568 = vmatpush1.bf16.msra.mxu0 %v7311
    %7569 = vmatprep.subr.bf16.mxu0 0
    %7570 = vmatpush1.bf16.msra.mxu0 %v7312
    %7571 = vmatprep.subr.bf16.mxu0 0
    %7572 = vmatpush1.bf16.msra.mxu0 %v7313
    %7573 = vmatprep.subr.bf16.mxu0 0
    %7574 = vmatpush1.bf16.msra.mxu0 %v7314
    %7575 = vmatprep.subr.bf16.mxu0 0
    %7576 = vmatpush1.bf16.msra.mxu0 %v7315
    %7577 = vmatprep.subr.bf16.mxu0 0
    %7578 = vmatpush1.bf16.msra.mxu0 %v7316
    %7579 = vmatprep.subr.bf16.mxu0 0
    %7580 = vmatpush1.bf16.msra.mxu0 %v7317
    %7581 = vmatprep.subr.bf16.mxu0 0
    %7582 = vmatpush1.bf16.msra.mxu0 %v7318
    %7583 = vmatprep.subr.bf16.mxu0 0
    %7584 = vmatpush1.bf16.msra.mxu0 %v7319
    %7585 = vmatprep.subr.bf16.mxu0 0
    %7586 = vmatpush1.bf16.msra.mxu0 %v7320
    %7587 = vmatprep.subr.bf16.mxu0 0
    %7588 = vmatpush1.bf16.msra.mxu0 %v7321
    %7589 = vmatprep.subr.bf16.mxu0 0
    %7590 = vmatpush1.bf16.msra.mxu0 %v7322
    %7591 = vmatprep.subr.bf16.mxu0 0
    %7592 = vmatpush1.bf16.msra.mxu0 %v7323
    %7593 = vmatprep.subr.bf16.mxu0 0
    %7594 = vmatpush1.bf16.msra.mxu0 %v7324
    %7595 = vmatprep.subr.bf16.mxu0 0
    %7596 = vmatpush1.bf16.msra.mxu0 %v7325
    %7597 = vmatprep.subr.bf16.mxu0 0
    %7598 = vmatpush1.bf16.msra.mxu0 %v7326
    %7599 = vmatprep.mubr.bf16.mxu0 %v6759
    %7600 = vmatmul.mubr.bf16.gmra.mrb[0].mxu0 %v6758
    %v7601 = vpop.f32.mrb[0].mxu0
    %v7602 = vadd.f32 %v7562, %v7601
    %v7603 = vpop.f32.mrb[0].mxu0
    %v7604 = vpop.f32.mrb[0].mxu0
    %v7605 = vpop.f32.mrb[0].mxu0
    %7606 = vdwg.mxu0
    %v7607 = vtanh.pop %v7602
    %7608 = vst [vmem:[#allocation14] sm:$0xff] %v7607
    // Predicated region
    $region58: #{tpu_custom_call.1} parent=1 // pred_check
      _
    $region59: #{tpu_custom_call.1} parent=1 // pred_check_branch
      %7610 = sbr.rel (0) target = $region61
    $region60: #{tpu_custom_call.1} parent=1 // pred_region
      %s7612 = ssub.s32 128, 128
      %7613 = vsyncadd [#allocation4], %s7612
      %s7615 = sshll.u32 [#allocation14], 4
      %s7616 = int_to_ptr.vmem [resolvable:$true] %s7615
      %7618 = dma.vmem_to_hbm [thread:$0]  %s7616, 128, %s7, [#allocation4]
    $region61: #{tpu_custom_call.1} parent=1 // pred_fallthru
      _
    // Predicated region
    $region62: #{tpu_custom_call.1} parent=1 // pred_check
      _
    $region63: #{tpu_custom_call.1} parent=1 // pred_check_branch
      %7620 = sbr.rel (0) target = $region65
    $region64: #{tpu_custom_call.1} parent=1 // pred_region
      %7621 = dma.done [#allocation4], 128
    $region65: #{tpu_custom_call.1} parent=1 // pred_fallthru
      _
    %7622 = vsyncpa [#allocation3], 1
    %7623 = vsyncpa [#allocation6], 1
    %7624 = vsyncpa [#allocation9], 1
    %7625 = vsyncpa [#allocation12], 1
    %7626 = vsyncpa [#allocation4], 1

</llo_original>
